<compile_context>
chip_gen: v7x
topology: tpu7x:2x2x1
jax: 0.10.0
libtpu: 0.0.40
codegen_flags: <defaults>
</compile_context>

<pallas_src>
import functools

import jax
import jax.numpy as jnp
from jax.experimental import pallas as pl
from jax.experimental.pallas import tpu as pltpu


def bottleneck_kernel(top_ref, bot_ref, xc_ref, xt_ref, xb_ref,
                      w1_ref, b1_ref, w2p_ref, w2c_ref, b2_ref, w3_ref, b3_ref,
                      out_ref, h1pad_ref, *, width, rows, pad, compute_dtype):
    """One row block of one image per grid step.  xc_ref: (1, rows*W, Cin) in cd."""
    del top_ref, bot_ref                    # consumed only by the index_maps
    W, PAD, cd = width, pad, compute_dtype
    RBw = rows * W
    Wd = w1_ref.shape[1]
    ri = pl.program_id(1)

    # Zero the halo regions of the padded scratch.  Re-done every grid step so the
    # kernel stays correct when the "parallel" axes are sharded across TensorCores
    # (each core has its own scratch instance); interior is fully overwritten.
    zeros_pad = jnp.zeros((PAD, Wd), cd)
    h1pad_ref[0:PAD, :] = zeros_pad
    h1pad_ref[PAD + RBw:PAD + RBw + PAD, :] = zeros_pad

    # Column-edge masks killing the row wrap-around of the flattened 3x3 taps
    # (built in-kernel; no mask input streams).
    col = jax.lax.broadcasted_iota(jnp.int32, (RBw, 1), 0) % W
    ml = (col != 0).astype(cd)              # col == 0   -> kill dx=0 taps
    mr = (col != W - 1).astype(cd)          # col == W-1 -> kill dx=2 taps

    x_c = xc_ref[0]                         # (RBw, Cin) compute dtype (residual too)

    # ---- conv1 (1x1) + folded bn1 + relu on the core rows ----
    h1 = jnp.dot(x_c, w1_ref[...], preferred_element_type=jnp.float32)
    h1 = jnp.maximum(h1 + b1_ref[...], 0.0)
    h1_cd = h1.astype(cd)
    h1pad_ref[PAD:PAD + RBw, :] = h1_cd

    # ---- conv1 on the one-image-row halos (recomputed; zero at image edges) ----
    @pl.when(ri > 0)
    def _():
        ht = jnp.dot(xt_ref[0], w1_ref[...], preferred_element_type=jnp.float32)
        h1pad_ref[PAD - W:PAD, :] = jnp.maximum(ht + b1_ref[...], 0.0).astype(cd)

    @pl.when(ri < pl.num_programs(1) - 1)
    def _():
        hb = jnp.dot(xb_ref[0], w1_ref[...], preferred_element_type=jnp.float32)
        h1pad_ref[PAD + RBw:PAD + RBw + W, :] = (
            jnp.maximum(hb + b1_ref[...], 0.0).astype(cd))

    # ---- conv2 (3x3, stride 1, pad 1): accumulated tap matmuls ----
    # Tap (dy, dx) of output flat position q reads scratch index
    # PAD + q + (dy-1)*W + (dx-1).  dx wrap-around is killed by ml/mr; dy wrap
    # lands in the zero / halo rows.  Taps are paired so each matmul has K=2*Wd.
    def tap(idx):
        dy, dx = idx // 3, idx % 3
        start = PAD + (dy - 1) * W + (dx - 1)
        t = h1pad_ref[start:start + RBw, :]
        if dx == 0:
            return t * ml
        if dx == 2:
            return t * mr
        return t

    acc = jnp.dot(h1_cd, w2c_ref[...], preferred_element_type=jnp.float32)
    for p, (a, b) in enumerate(((0, 6), (1, 7), (2, 8), (3, 5))):
        pair = jnp.concatenate([tap(a), tap(b)], axis=-1)        # (RBw, 2*Wd)
        acc = acc + jnp.dot(pair, w2p_ref[p], preferred_element_type=jnp.float32)
    h2 = jnp.maximum(acc + b2_ref[...], 0.0)                     # (RBw, Wd) f32

    # ---- conv3 (1x1) + folded bn3 + residual + relu (fused epilogue) ----
    v = jnp.dot(h2.astype(cd), w3_ref[...], preferred_element_type=jnp.float32)
    v = jnp.maximum(v + b3_ref[...] + x_c.astype(jnp.float32), 0.0)
    out_ref[0] = v.astype(out_ref.dtype)


def bottleneck_forward(x_nhwc, params, compute_dtype=jnp.float32, row_block=None):
    """Eval-mode Bottleneck forward.  x_nhwc: (N, H, W, Cin) float32."""
    N, H, W, Cin = x_nhwc.shape
    w1, s1, b1, w2, s2, b2, w3, s3, b3 = params
    Wd = w1.shape[1]
    Cout = w3.shape[1]
    assert Cout == Cin, "identity residual requires conv3 output == inplanes"
    assert W % 8 == 0, "row-block halos require sublane-aligned W"
    cd = compute_dtype

    # Row-block size: biggest block <= ~1024 flat rows that divides H (keeps VMEM
    # bounded on v7x and gives the pipeline several steps per image).
    if row_block is None:
        row_block = max(1, min(H, 1024 // W))
        while H % row_block:
            row_block -= 1
    assert H % row_block == 0
    RBw = row_block * W
    n_rb = H // row_block
    PAD = -(-(W + 1) // 16) * 16            # >= W+1 halo rows, 16-sublane aligned

    # Fold BN scales into conv weights; kernel only adds a per-channel f32 bias.
    w1f = (w1 * s1).astype(cd)                                       # (Cin, Wd)
    w2f = (w2 * s2).astype(cd)                                       # (9, Wd, Wd)
    pairs = ((0, 6), (1, 7), (2, 8), (3, 5))                         # K=2*Wd pairs
    w2p = jnp.stack([jnp.concatenate([w2f[a], w2f[b]], axis=0) for a, b in pairs])
    w2c = w2f[4]                                                     # centre tap
    w3f = (w3 * s3).astype(cd)                                       # (Wd, Cout)

    # Feed x already in compute dtype (halves the dominant HBM stream for bf16).
    x_flat = x_nhwc.reshape(N, H * W, Cin).astype(cd)

    # Clamped image-row indices of the 1-row conv1 halos (scalar-prefetched; the
    # out-of-range first/last values are loaded but zeroed in-kernel).
    rb_ids = jnp.arange(n_rb, dtype=jnp.int32)
    top_idx = jnp.maximum(rb_ids * row_block - 1, 0).astype(jnp.int32)
    bot_idx = jnp.minimum((rb_ids + 1) * row_block, H - 1).astype(jnp.int32)

    kernel = functools.partial(bottleneck_kernel, width=W, rows=row_block,
                               pad=PAD, compute_dtype=cd)

    def full(a):
        z = (0,) * a.ndim
        return pl.BlockSpec(a.shape, lambda n, i, t, b, _z=z: _z)

    grid_spec = pltpu.PrefetchScalarGridSpec(
        num_scalar_prefetch=2,
        grid=(N, n_rb),
        in_specs=[
            pl.BlockSpec((1, RBw, Cin), lambda n, i, t, b: (n, i, 0)),   # core rows
            pl.BlockSpec((1, W, Cin), lambda n, i, t, b: (n, t[i], 0)),  # top halo
            pl.BlockSpec((1, W, Cin), lambda n, i, t, b: (n, b[i], 0)),  # bottom halo
            full(w1f), full(b1), full(w2p), full(w2c), full(b2),
            full(w3f), full(b3),
        ],
        out_specs=pl.BlockSpec((1, RBw, Cout), lambda n, i, t, b: (n, i, 0)),
        scratch_shapes=[pltpu.VMEM((RBw + 2 * PAD, Wd), cd)],
    )

    out = pl.pallas_call(
        kernel,
        out_shape=jax.ShapeDtypeStruct((N, H * W, Cout), x_nhwc.dtype),
        grid_spec=grid_spec,
        compiler_params=pltpu.CompilerParams(
            dimension_semantics=("parallel", "parallel"),
            vmem_limit_bytes=32 * 1024 * 1024),      # fits v7x's 64 MiB with headroom
    )(top_idx, bot_idx, x_flat, x_flat, x_flat,
      w1f, b1, w2p, w2c, b2, w3f, b3)

    return out.reshape(N, H, W, Cout)


def reference_forward(x, params, compute_dtype=jnp.float32):
    """Pure-JAX (XLA) reference of the same eval-mode bottleneck, mirroring the
    kernel's compute-dtype cast points (cd matmul inputs, f32 accumulation,
    f32 bias/relu epilogue, cd-sourced residual)."""
    w1, s1, b1, w2, s2, b2, w3, s3, b3 = params
    cd = compute_dtype
    Wd = w1.shape[1]
    w1f = (w1 * s1).astype(cd)
    w2f = (w2 * s2).reshape(3, 3, Wd, Wd).astype(cd)
    w3f = (w3 * s3).astype(cd)

    xc = x.astype(cd)
    h = jnp.einsum('nhwc,cd->nhwd', xc, w1f, preferred_element_type=jnp.float32)
    h = jax.nn.relu(h + b1)
    h = jax.lax.conv_general_dilated(
        h.astype(cd), w2f, window_strides=(1, 1), padding=((1, 1), (1, 1)),
        dimension_numbers=('NHWC', 'HWIO', 'NHWC'),
        preferred_element_type=jnp.float32)
    h = jax.nn.relu(h + b2)
    h = jnp.einsum('nhwc,cd->nhwd', h.astype(cd), w3f,
                   preferred_element_type=jnp.float32)
    return jax.nn.relu(h + b3 + xc.astype(jnp.float32))


def make_params(key, inplanes, planes, base_width=64, groups=1, expansion=4):
    width = int(planes * (base_width / 64.0)) * groups
    cout = planes * expansion
    ks = jax.random.split(key, 15)

    w1 = 0.1 * jax.random.normal(ks[0], (inplanes, width), jnp.float32)
    w2 = 0.1 * jax.random.normal(ks[1], (9, width, width), jnp.float32)
    w3 = 0.1 * jax.random.normal(ks[2], (width, cout), jnp.float32)

    def bn_fold(kg, kb, km, kv, c):
        gamma = 1.0 + 0.1 * jax.random.normal(kg, (c,), jnp.float32)
        beta = 0.1 * jax.random.normal(kb, (c,), jnp.float32)
        mean = 0.1 * jax.random.normal(km, (c,), jnp.float32)
        var = jnp.abs(jax.random.normal(kv, (c,), jnp.float32)) + 0.5
        scale = gamma / jnp.sqrt(var + 1e-5)
        bias = beta - mean * scale
        return scale.reshape(1, c), bias.reshape(1, c)

    s1, b1 = bn_fold(ks[3], ks[4], ks[5], ks[6], width)
    s2, b2 = bn_fold(ks[7], ks[8], ks[9], ks[10], width)
    s3, b3 = bn_fold(ks[11], ks[12], ks[13], ks[14], cout)
    return (w1, s1, b1, w2, s2, b2, w3, s3, b3)


if __name__ == "__main__":
    key = jax.random.PRNGKey(0)
    k_x, k_p = jax.random.split(key)

    # Bottleneck(inplanes=512, planes=128): width=128, conv3 out = 4*128 = 512 =
    # inplanes, so the identity residual is well defined (stride=1, no downsample).
    # Channels are lane/MXU aligned (multiples of 128); H*W = 256.
    N, H, W, Cin = 2, 16, 16, 512
    planes = 128
    x = jax.random.normal(k_x, (N, H, W, Cin), jnp.float32)
    params = make_params(k_p, inplanes=Cin, planes=planes)

    # f32 path (exact semantics) and bf16 matmul path (MXU-friendly, f32 accum +
    # f32 epilogue).  row_block=None -> single block per image; row_block=4 ->
    # 4 row blocks per image, exercising the conv1 halo recompute path.
    for cd in (jnp.float32, jnp.bfloat16):
        ref = reference_forward(x, params, cd)
        tol = 5e-2 * (float(jnp.max(jnp.abs(ref))) + 1.0)
        for rb in (None, 4):
            out = jax.block_until_ready(bottleneck_forward(x, params, cd, row_block=rb))
            err = float(jnp.max(jnp.abs(out - ref)))
            if not err <= tol:
                raise AssertionError(
                    f"compute_dtype={jnp.dtype(cd).name} row_block={rb}: "
                    f"max abs err {err} > tol {tol}")

    print("KERNEL_OK")
</pallas_src>

<mosaic_0001>
module attributes {stable_mosaic.version = 11 : i64} {
  func.func @bottleneck_kernel(%arg0: i32, %arg1: i32, %arg2: memref<1xi32, #tpu.memory_space<smem>>, %arg3: memref<1xi32, #tpu.memory_space<smem>>, %arg4: memref<1x256x512xf32, #tpu.memory_space<vmem>>, %arg5: memref<1x16x512xf32, #tpu.memory_space<vmem>>, %arg6: memref<1x16x512xf32, #tpu.memory_space<vmem>>, %arg7: memref<512x128xf32, #tpu.memory_space<vmem>>, %arg8: memref<1x128xf32, #tpu.memory_space<vmem>>, %arg9: memref<4x256x128xf32, #tpu.memory_space<vmem>>, %arg10: memref<128x128xf32, #tpu.memory_space<vmem>>, %arg11: memref<1x128xf32, #tpu.memory_space<vmem>>, %arg12: memref<128x512xf32, #tpu.memory_space<vmem>>, %arg13: memref<1x512xf32, #tpu.memory_space<vmem>>, %arg14: memref<1x256x512xf32, #tpu.memory_space<vmem>>, %arg15: memref<320x128xf32, #tpu.memory_space<vmem>>) attributes {dimension_semantics = [#tpu.dimension_semantics<parallel>, #tpu.dimension_semantics<parallel>], iteration_bounds = array<i64: 2, 1>, scalar_prefetch = 2 : i64, scratch_operands = 1 : i64, tpu.core_type = #tpu.core_type<tc>, window_params = [{transform_indices = @transform_0, window_bounds = array<i64: 1, 256, 512>}, {transform_indices = @transform_1, window_bounds = array<i64: 1, 16, 512>}, {transform_indices = @transform_2, window_bounds = array<i64: 1, 16, 512>}, {pipeline_mode = #tpu.pipeline_mode<synchronous>, transform_indices = @transform_3, window_bounds = array<i64: 512, 128>}, {pipeline_mode = #tpu.pipeline_mode<synchronous>, transform_indices = @transform_4, window_bounds = array<i64: 1, 128>}, {pipeline_mode = #tpu.pipeline_mode<synchronous>, transform_indices = @transform_5, window_bounds = array<i64: 4, 256, 128>}, {pipeline_mode = #tpu.pipeline_mode<synchronous>, transform_indices = @transform_6, window_bounds = array<i64: 128, 128>}, {pipeline_mode = #tpu.pipeline_mode<synchronous>, transform_indices = @transform_7, window_bounds = array<i64: 1, 128>}, {pipeline_mode = #tpu.pipeline_mode<synchronous>, transform_indices = @transform_8, window_bounds = array<i64: 128, 512>}, {pipeline_mode = #tpu.pipeline_mode<synchronous>, transform_indices = @transform_9, window_bounds = array<i64: 1, 512>}, {transform_indices = @transform_10, window_bounds = array<i64: 1, 256, 512>}]} {
    %cst = arith.constant 0.000000e+00 : f32
    %0 = vector.broadcast %cst : f32 to vector<32x128xf32>
    %c0 = arith.constant 0 : index
    %c0_0 = arith.constant 0 : index
    %1 = vector.load %arg15[%c0, %c0_0] : memref<320x128xf32, #tpu.memory_space<vmem>>, vector<32x128xf32>
    tpu.vector_store %arg15[%c0, %c0_0], %0 {strides = array<i32>} : memref<320x128xf32, #tpu.memory_space<vmem>>, vector<32x128xf32>,
    %c288 = arith.constant 288 : index
    %c0_1 = arith.constant 0 : index
    %2 = vector.load %arg15[%c288, %c0_1] : memref<320x128xf32, #tpu.memory_space<vmem>>, vector<32x128xf32>
    tpu.vector_store %arg15[%c288, %c0_1], %0 {strides = array<i32>} : memref<320x128xf32, #tpu.memory_space<vmem>>, vector<32x128xf32>,
    %3 = tpu.iota {dimensions = array<i32: 0>} : vector<256x1xi32>
    %c16_i32 = arith.constant 16 : i32
    %c0_i32 = arith.constant 0 : i32
    %4 = arith.cmpi eq, %c16_i32, %c0_i32 : i32
    %c1_i32 = arith.constant 1 : i32
    %5 = arith.select %4, %c1_i32, %c16_i32 : i32
    %6 = vector.broadcast %5 : i32 to vector<256x1xi32>
    %7 = arith.remsi %3, %6 : vector<256x1xi32>
    %c0_i32_2 = arith.constant 0 : i32
    %8 = vector.broadcast %c0_i32_2 : i32 to vector<256x1xi32>
    %9 = arith.cmpi ne, %7, %8 : vector<256x1xi32>
    %c0_i32_3 = arith.constant 0 : i32
    %10 = vector.broadcast %c0_i32_3 : i32 to vector<256x1xi32>
    %11 = arith.cmpi slt, %7, %10 : vector<256x1xi32>
    %c0_i32_4 = arith.constant 0 : i32
    %12 = arith.cmpi slt, %5, %c0_i32_4 : i32
    %13 = vector.broadcast %12 : i1 to vector<256x1xi1>
    %14 = vector.broadcast %13 : vector<256x1xi1> to vector<256x1xi1>
    %15 = arith.xori %11, %14 : vector<256x1xi1>
    %16 = arith.andi %15, %9 : vector<256x1xi1>
    %17 = vector.broadcast %5 : i32 to vector<256x1xi32>
    %18 = arith.addi %7, %17 : vector<256x1xi32>
    %19 = arith.select %16, %18, %7 : vector<256x1xi1>, vector<256x1xi32>
    %c0_i32_5 = arith.constant 0 : i32
    %20 = vector.broadcast %c0_i32_5 : i32 to vector<256x1xi32>
    %21 = arith.cmpi ne, %19, %20 : vector<256x1xi32>
    %22 = arith.extui %21 : vector<256x1xi1> to vector<256x1xi32>
    %23 = arith.sitofp %22 : vector<256x1xi32> to vector<256x1xf32>
    %c15_i32 = arith.constant 15 : i32
    %24 = vector.broadcast %c15_i32 : i32 to vector<256x1xi32>
    %25 = arith.cmpi ne, %19, %24 : vector<256x1xi32>
    %26 = arith.extui %25 : vector<256x1xi1> to vector<256x1xi32>
    %27 = arith.sitofp %26 : vector<256x1xi32> to vector<256x1xf32>
    %c0_6 = arith.constant 0 : index
    %c0_7 = arith.constant 0 : index
    %c0_8 = arith.constant 0 : index
    %28 = vector.load %arg4[%c0_6, %c0_7, %c0_8] : memref<1x256x512xf32, #tpu.memory_space<vmem>>, vector<1x256x512xf32>
    %29 = vector.shape_cast %28 : vector<1x256x512xf32> to vector<256x512xf32>
    %c0_9 = arith.constant 0 : index
    %c0_10 = arith.constant 0 : index
    %30 = vector.load %arg7[%c0_9, %c0_10] : memref<512x128xf32, #tpu.memory_space<vmem>>, vector<512x128xf32>
    %cst_11 = arith.constant dense<0.000000e+00> : vector<256x128xf32>
    %31 = tpu.matmul %29, %30, %cst_11 {dimension_numbers = #tpu.dot_dimension_numbers<[1], [0], [0], [1], [0, 0, 1, 1], [], []>} : vector<256x512xf32>, vector<512x128xf32>, vector<256x128xf32> -> vector<256x128xf32>
    %c0_12 = arith.constant 0 : index
    %c0_13 = arith.constant 0 : index
    %32 = vector.load %arg8[%c0_12, %c0_13] : memref<1x128xf32, #tpu.memory_space<vmem>>, vector<1x128xf32>
    %33 = vector.broadcast %32 : vector<1x128xf32> to vector<256x128xf32>
    %34 = arith.addf %31, %33 : vector<256x128xf32>
    %cst_14 = arith.constant 0.000000e+00 : f32
    %35 = vector.broadcast %cst_14 : f32 to vector<256x128xf32>
    %36 = arith.maximumf %34, %35 : vector<256x128xf32>
    %c32 = arith.constant 32 : index
    %c0_15 = arith.constant 0 : index
    %37 = vector.load %arg15[%c32, %c0_15] : memref<320x128xf32, #tpu.memory_space<vmem>>, vector<256x128xf32>
    tpu.vector_store %arg15[%c32, %c0_15], %36 {strides = array<i32>} : memref<320x128xf32, #tpu.memory_space<vmem>>, vector<256x128xf32>,
    %c0_i32_16 = arith.constant 0 : i32
    %38 = arith.cmpi sgt, %arg1, %c0_i32_16 : i32
    %39 = arith.extui %38 : i1 to i32
    %c0_i32_17 = arith.constant 0 : i32
    %40 = arith.cmpi ne, %39, %c0_i32_17 : i32
    scf.if %40 {
      %c0_56 = arith.constant 0 : index
      %c0_57 = arith.constant 0 : index
      %c0_58 = arith.constant 0 : index
      %102 = vector.load %arg5[%c0_56, %c0_57, %c0_58] : memref<1x16x512xf32, #tpu.memory_space<vmem>>, vector<1x16x512xf32>
      %103 = vector.shape_cast %102 : vector<1x16x512xf32> to vector<16x512xf32>
      %c0_59 = arith.constant 0 : index
      %c0_60 = arith.constant 0 : index
      %104 = vector.load %arg7[%c0_59, %c0_60] : memref<512x128xf32, #tpu.memory_space<vmem>>, vector<512x128xf32>
      %cst_61 = arith.constant dense<0.000000e+00> : vector<16x128xf32>
      %105 = tpu.matmul %103, %104, %cst_61 {dimension_numbers = #tpu.dot_dimension_numbers<[1], [0], [0], [1], [0, 0, 1, 1], [], []>} : vector<16x512xf32>, vector<512x128xf32>, vector<16x128xf32> -> vector<16x128xf32>
      %c0_62 = arith.constant 0 : index
      %c0_63 = arith.constant 0 : index
      %106 = vector.load %arg8[%c0_62, %c0_63] : memref<1x128xf32, #tpu.memory_space<vmem>>, vector<1x128xf32>
      %107 = vector.broadcast %106 : vector<1x128xf32> to vector<16x128xf32>
      %108 = arith.addf %105, %107 : vector<16x128xf32>
      %cst_64 = arith.constant 0.000000e+00 : f32
      %109 = vector.broadcast %cst_64 : f32 to vector<16x128xf32>
      %110 = arith.maximumf %108, %109 : vector<16x128xf32>
      %c16_65 = arith.constant 16 : index
      %c0_66 = arith.constant 0 : index
      %111 = vector.load %arg15[%c16_65, %c0_66] : memref<320x128xf32, #tpu.memory_space<vmem>>, vector<16x128xf32>
      tpu.vector_store %arg15[%c16_65, %c0_66], %110 {strides = array<i32>} : memref<320x128xf32, #tpu.memory_space<vmem>>, vector<16x128xf32>,
    } else {
    }
    %c0_i32_18 = arith.constant 0 : i32
    %41 = arith.cmpi slt, %arg1, %c0_i32_18 : i32
    %42 = arith.extui %41 : i1 to i32
    %c0_i32_19 = arith.constant 0 : i32
    %43 = arith.cmpi ne, %42, %c0_i32_19 : i32
    scf.if %43 {
      %c0_56 = arith.constant 0 : index
      %c0_57 = arith.constant 0 : index
      %c0_58 = arith.constant 0 : index
      %102 = vector.load %arg6[%c0_56, %c0_57, %c0_58] : memref<1x16x512xf32, #tpu.memory_space<vmem>>, vector<1x16x512xf32>
      %103 = vector.shape_cast %102 : vector<1x16x512xf32> to vector<16x512xf32>
      %c0_59 = arith.constant 0 : index
      %c0_60 = arith.constant 0 : index
      %104 = vector.load %arg7[%c0_59, %c0_60] : memref<512x128xf32, #tpu.memory_space<vmem>>, vector<512x128xf32>
      %cst_61 = arith.constant dense<0.000000e+00> : vector<16x128xf32>
      %105 = tpu.matmul %103, %104, %cst_61 {dimension_numbers = #tpu.dot_dimension_numbers<[1], [0], [0], [1], [0, 0, 1, 1], [], []>} : vector<16x512xf32>, vector<512x128xf32>, vector<16x128xf32> -> vector<16x128xf32>
      %c0_62 = arith.constant 0 : index
      %c0_63 = arith.constant 0 : index
      %106 = vector.load %arg8[%c0_62, %c0_63] : memref<1x128xf32, #tpu.memory_space<vmem>>, vector<1x128xf32>
      %107 = vector.broadcast %106 : vector<1x128xf32> to vector<16x128xf32>
      %108 = arith.addf %105, %107 : vector<16x128xf32>
      %cst_64 = arith.constant 0.000000e+00 : f32
      %109 = vector.broadcast %cst_64 : f32 to vector<16x128xf32>
      %110 = arith.maximumf %108, %109 : vector<16x128xf32>
      %c288_65 = arith.constant 288 : index
      %c0_66 = arith.constant 0 : index
      %111 = vector.load %arg15[%c288_65, %c0_66] : memref<320x128xf32, #tpu.memory_space<vmem>>, vector<16x128xf32>
      tpu.vector_store %arg15[%c288_65, %c0_66], %110 {strides = array<i32>} : memref<320x128xf32, #tpu.memory_space<vmem>>, vector<16x128xf32>,
    } else {
    }
    %c0_20 = arith.constant 0 : index
    %c0_21 = arith.constant 0 : index
    %44 = vector.load %arg10[%c0_20, %c0_21] : memref<128x128xf32, #tpu.memory_space<vmem>>, vector<128x128xf32>
    %cst_22 = arith.constant dense<0.000000e+00> : vector<256x128xf32>
    %45 = tpu.matmul %36, %44, %cst_22 {dimension_numbers = #tpu.dot_dimension_numbers<[1], [0], [0], [1], [0, 0, 1, 1], [], []>} : vector<256x128xf32>, vector<128x128xf32>, vector<256x128xf32> -> vector<256x128xf32>
    %c15 = arith.constant 15 : index
    %c0_23 = arith.constant 0 : index
    %46 = vector.load %arg15[%c15, %c0_23] : memref<320x128xf32, #tpu.memory_space<vmem>>, vector<256x128xf32>
    %47 = vector.broadcast %23 : vector<256x1xf32> to vector<256x128xf32>
    %48 = arith.mulf %46, %47 : vector<256x128xf32>
    %c47 = arith.constant 47 : index
    %c0_24 = arith.constant 0 : index
    %49 = vector.load %arg15[%c47, %c0_24] : memref<320x128xf32, #tpu.memory_space<vmem>>, vector<256x128xf32>
    %50 = vector.broadcast %23 : vector<256x1xf32> to vector<256x128xf32>
    %51 = arith.mulf %49, %50 : vector<256x128xf32>
    %52 = tpu.concatenate %48, %51 in 1 : vector<256x128xf32>, vector<256x128xf32> -> vector<256x256xf32>
    %c0_25 = arith.constant 0 : index
    %c0_26 = arith.constant 0 : index
    %c0_27 = arith.constant 0 : index
    %53 = vector.load %arg9[%c0_25, %c0_26, %c0_27] : memref<4x256x128xf32, #tpu.memory_space<vmem>>, vector<1x256x128xf32>
    %54 = vector.shape_cast %53 : vector<1x256x128xf32> to vector<256x128xf32>
    %cst_28 = arith.constant dense<0.000000e+00> : vector<256x128xf32>
    %55 = tpu.matmul %52, %54, %cst_28 {dimension_numbers = #tpu.dot_dimension_numbers<[1], [0], [0], [1], [0, 0, 1, 1], [], []>} : vector<256x256xf32>, vector<256x128xf32>, vector<256x128xf32> -> vector<256x128xf32>
    %56 = arith.addf %45, %55 : vector<256x128xf32>
    %c16 = arith.constant 16 : index
    %c0_29 = arith.constant 0 : index
    %57 = vector.load %arg15[%c16, %c0_29] : memref<320x128xf32, #tpu.memory_space<vmem>>, vector<256x128xf32>
    %c48 = arith.constant 48 : index
    %c0_30 = arith.constant 0 : index
    %58 = vector.load %arg15[%c48, %c0_30] : memref<320x128xf32, #tpu.memory_space<vmem>>, vector<256x128xf32>
    %59 = tpu.concatenate %57, %58 in 1 : vector<256x128xf32>, vector<256x128xf32> -> vector<256x256xf32>
    %c1 = arith.constant 1 : index
    %c0_31 = arith.constant 0 : index
    %c0_32 = arith.constant 0 : index
    %60 = vector.load %arg9[%c1, %c0_31, %c0_32] : memref<4x256x128xf32, #tpu.memory_space<vmem>>, vector<1x256x128xf32>
    %61 = vector.shape_cast %60 : vector<1x256x128xf32> to vector<256x128xf32>
    %cst_33 = arith.constant dense<0.000000e+00> : vector<256x128xf32>
    %62 = tpu.matmul %59, %61, %cst_33 {dimension_numbers = #tpu.dot_dimension_numbers<[1], [0], [0], [1], [0, 0, 1, 1], [], []>} : vector<256x256xf32>, vector<256x128xf32>, vector<256x128xf32> -> vector<256x128xf32>
    %63 = arith.addf %56, %62 : vector<256x128xf32>
    %c17 = arith.constant 17 : index
    %c0_34 = arith.constant 0 : index
    %64 = vector.load %arg15[%c17, %c0_34] : memref<320x128xf32, #tpu.memory_space<vmem>>, vector<256x128xf32>
    %65 = vector.broadcast %27 : vector<256x1xf32> to vector<256x128xf32>
    %66 = arith.mulf %64, %65 : vector<256x128xf32>
    %c49 = arith.constant 49 : index
    %c0_35 = arith.constant 0 : index
    %67 = vector.load %arg15[%c49, %c0_35] : memref<320x128xf32, #tpu.memory_space<vmem>>, vector<256x128xf32>
    %68 = vector.broadcast %27 : vector<256x1xf32> to vector<256x128xf32>
    %69 = arith.mulf %67, %68 : vector<256x128xf32>
    %70 = tpu.concatenate %66, %69 in 1 : vector<256x128xf32>, vector<256x128xf32> -> vector<256x256xf32>
    %c2 = arith.constant 2 : index
    %c0_36 = arith.constant 0 : index
    %c0_37 = arith.constant 0 : index
    %71 = vector.load %arg9[%c2, %c0_36, %c0_37] : memref<4x256x128xf32, #tpu.memory_space<vmem>>, vector<1x256x128xf32>
    %72 = vector.shape_cast %71 : vector<1x256x128xf32> to vector<256x128xf32>
    %cst_38 = arith.constant dense<0.000000e+00> : vector<256x128xf32>
    %73 = tpu.matmul %70, %72, %cst_38 {dimension_numbers = #tpu.dot_dimension_numbers<[1], [0], [0], [1], [0, 0, 1, 1], [], []>} : vector<256x256xf32>, vector<256x128xf32>, vector<256x128xf32> -> vector<256x128xf32>
    %74 = arith.addf %63, %73 : vector<256x128xf32>
    %c31 = arith.constant 31 : index
    %c0_39 = arith.constant 0 : index
    %75 = vector.load %arg15[%c31, %c0_39] : memref<320x128xf32, #tpu.memory_space<vmem>>, vector<256x128xf32>
    %76 = vector.broadcast %23 : vector<256x1xf32> to vector<256x128xf32>
    %77 = arith.mulf %75, %76 : vector<256x128xf32>
    %c33 = arith.constant 33 : index
    %c0_40 = arith.constant 0 : index
    %78 = vector.load %arg15[%c33, %c0_40] : memref<320x128xf32, #tpu.memory_space<vmem>>, vector<256x128xf32>
    %79 = vector.broadcast %27 : vector<256x1xf32> to vector<256x128xf32>
    %80 = arith.mulf %78, %79 : vector<256x128xf32>
    %81 = tpu.concatenate %77, %80 in 1 : vector<256x128xf32>, vector<256x128xf32> -> vector<256x256xf32>
    %c3 = arith.constant 3 : index
    %c0_41 = arith.constant 0 : index
    %c0_42 = arith.constant 0 : index
    %82 = vector.load %arg9[%c3, %c0_41, %c0_42] : memref<4x256x128xf32, #tpu.memory_space<vmem>>, vector<1x256x128xf32>
    %83 = vector.shape_cast %82 : vector<1x256x128xf32> to vector<256x128xf32>
    %cst_43 = arith.constant dense<0.000000e+00> : vector<256x128xf32>
    %84 = tpu.matmul %81, %83, %cst_43 {dimension_numbers = #tpu.dot_dimension_numbers<[1], [0], [0], [1], [0, 0, 1, 1], [], []>} : vector<256x256xf32>, vector<256x128xf32>, vector<256x128xf32> -> vector<256x128xf32>
    %85 = arith.addf %74, %84 : vector<256x128xf32>
    %c0_44 = arith.constant 0 : index
    %c0_45 = arith.constant 0 : index
    %86 = vector.load %arg11[%c0_44, %c0_45] : memref<1x128xf32, #tpu.memory_space<vmem>>, vector<1x128xf32>
    %87 = vector.broadcast %86 : vector<1x128xf32> to vector<256x128xf32>
    %88 = arith.addf %85, %87 : vector<256x128xf32>
    %cst_46 = arith.constant 0.000000e+00 : f32
    %89 = vector.broadcast %cst_46 : f32 to vector<256x128xf32>
    %90 = arith.maximumf %88, %89 : vector<256x128xf32>
    %c0_47 = arith.constant 0 : index
    %c0_48 = arith.constant 0 : index
    %91 = vector.load %arg12[%c0_47, %c0_48] : memref<128x512xf32, #tpu.memory_space<vmem>>, vector<128x512xf32>
    %cst_49 = arith.constant dense<0.000000e+00> : vector<256x512xf32>
    %92 = tpu.matmul %90, %91, %cst_49 {dimension_numbers = #tpu.dot_dimension_numbers<[1], [0], [0], [1], [0, 0, 1, 1], [], []>} : vector<256x128xf32>, vector<128x512xf32>, vector<256x512xf32> -> vector<256x512xf32>
    %c0_50 = arith.constant 0 : index
    %c0_51 = arith.constant 0 : index
    %93 = vector.load %arg13[%c0_50, %c0_51] : memref<1x512xf32, #tpu.memory_space<vmem>>, vector<1x512xf32>
    %94 = vector.broadcast %93 : vector<1x512xf32> to vector<256x512xf32>
    %95 = arith.addf %92, %94 : vector<256x512xf32>
    %96 = arith.addf %95, %29 : vector<256x512xf32>
    %cst_52 = arith.constant 0.000000e+00 : f32
    %97 = vector.broadcast %cst_52 : f32 to vector<256x512xf32>
    %98 = arith.maximumf %96, %97 : vector<256x512xf32>
    %c0_53 = arith.constant 0 : index
    %c0_54 = arith.constant 0 : index
    %c0_55 = arith.constant 0 : index
    %99 = vector.load %arg14[%c0_53, %c0_54, %c0_55] : memref<1x256x512xf32, #tpu.memory_space<vmem>>, vector<1x256x512xf32>
    %100 = vector.shape_cast %99 : vector<1x256x512xf32> to vector<256x512xf32>
    %101 = vector.shape_cast %98 : vector<256x512xf32> to vector<1x256x512xf32>
    tpu.vector_store %arg14[%c0_53, %c0_54, %c0_55], %101 {strides = array<i32>} : memref<1x256x512xf32, #tpu.memory_space<vmem>>, vector<1x256x512xf32>,
    return
  }
  func.func @transform_0(%arg0: i32, %arg1: i32, %arg2: memref<1xi32, #tpu.memory_space<smem>>, %arg3: memref<1xi32, #tpu.memory_space<smem>>) -> (i32, i32, i32) {
    %c0_i32 = arith.constant 0 : i32
    %c0_i32_0 = arith.constant 0 : i32
    return %arg0, %arg1, %c0_i32 : i32, i32, i32
  }
  func.func @transform_1(%arg0: i32, %arg1: i32, %arg2: memref<1xi32, #tpu.memory_space<smem>>, %arg3: memref<1xi32, #tpu.memory_space<smem>>) -> (i32, i32, i32) {
    %0 = arith.index_cast %arg1 : i32 to index
    %1 = memref.load %arg2[%0] : memref<1xi32, #tpu.memory_space<smem>>
    %c0_i32 = arith.constant 0 : i32
    %c0_i32_0 = arith.constant 0 : i32
    return %arg0, %1, %c0_i32 : i32, i32, i32
  }
  func.func @transform_2(%arg0: i32, %arg1: i32, %arg2: memref<1xi32, #tpu.memory_space<smem>>, %arg3: memref<1xi32, #tpu.memory_space<smem>>) -> (i32, i32, i32) {
    %0 = arith.index_cast %arg1 : i32 to index
    %1 = memref.load %arg3[%0] : memref<1xi32, #tpu.memory_space<smem>>
    %c0_i32 = arith.constant 0 : i32
    %c0_i32_0 = arith.constant 0 : i32
    return %arg0, %1, %c0_i32 : i32, i32, i32
  }
  func.func @transform_3(%arg0: i32, %arg1: i32, %arg2: memref<1xi32, #tpu.memory_space<smem>>, %arg3: memref<1xi32, #tpu.memory_space<smem>>) -> (i32, i32) {
    %c0_i32 = arith.constant 0 : i32
    %c0_i32_0 = arith.constant 0 : i32
    %c0_i32_1 = arith.constant 0 : i32
    return %c0_i32, %c0_i32_0 : i32, i32
  }
  func.func @transform_4(%arg0: i32, %arg1: i32, %arg2: memref<1xi32, #tpu.memory_space<smem>>, %arg3: memref<1xi32, #tpu.memory_space<smem>>) -> (i32, i32) {
    %c0_i32 = arith.constant 0 : i32
    %c0_i32_0 = arith.constant 0 : i32
    %c0_i32_1 = arith.constant 0 : i32
    return %c0_i32, %c0_i32_0 : i32, i32
  }
  func.func @transform_5(%arg0: i32, %arg1: i32, %arg2: memref<1xi32, #tpu.memory_space<smem>>, %arg3: memref<1xi32, #tpu.memory_space<smem>>) -> (i32, i32, i32) {
    %c0_i32 = arith.constant 0 : i32
    %c0_i32_0 = arith.constant 0 : i32
    %c0_i32_1 = arith.constant 0 : i32
    %c0_i32_2 = arith.constant 0 : i32
    return %c0_i32, %c0_i32_0, %c0_i32_1 : i32, i32, i32
  }
  func.func @transform_6(%arg0: i32, %arg1: i32, %arg2: memref<1xi32, #tpu.memory_space<smem>>, %arg3: memref<1xi32, #tpu.memory_space<smem>>) -> (i32, i32) {
    %c0_i32 = arith.constant 0 : i32
    %c0_i32_0 = arith.constant 0 : i32
    %c0_i32_1 = arith.constant 0 : i32
    return %c0_i32, %c0_i32_0 : i32, i32
  }
  func.func @transform_7(%arg0: i32, %arg1: i32, %arg2: memref<1xi32, #tpu.memory_space<smem>>, %arg3: memref<1xi32, #tpu.memory_space<smem>>) -> (i32, i32) {
    %c0_i32 = arith.constant 0 : i32
    %c0_i32_0 = arith.constant 0 : i32
    %c0_i32_1 = arith.constant 0 : i32
    return %c0_i32, %c0_i32_0 : i32, i32
  }
  func.func @transform_8(%arg0: i32, %arg1: i32, %arg2: memref<1xi32, #tpu.memory_space<smem>>, %arg3: memref<1xi32, #tpu.memory_space<smem>>) -> (i32, i32) {
    %c0_i32 = arith.constant 0 : i32
    %c0_i32_0 = arith.constant 0 : i32
    %c0_i32_1 = arith.constant 0 : i32
    return %c0_i32, %c0_i32_0 : i32, i32
  }
  func.func @transform_9(%arg0: i32, %arg1: i32, %arg2: memref<1xi32, #tpu.memory_space<smem>>, %arg3: memref<1xi32, #tpu.memory_space<smem>>) -> (i32, i32) {
    %c0_i32 = arith.constant 0 : i32
    %c0_i32_0 = arith.constant 0 : i32
    %c0_i32_1 = arith.constant 0 : i32
    return %c0_i32, %c0_i32_0 : i32, i32
  }
  func.func @transform_10(%arg0: i32, %arg1: i32, %arg2: memref<1xi32, #tpu.memory_space<smem>>, %arg3: memref<1xi32, #tpu.memory_space<smem>>) -> (i32, i32, i32) {
    %c0_i32 = arith.constant 0 : i32
    %c0_i32_0 = arith.constant 0 : i32
    return %arg0, %arg1, %c0_i32 : i32, i32, i32
  }
}

</mosaic_0001>

<llo_original>
// kernel: tpu_custom_call.1
$region0: #{tpu_custom_call.1}
  #allocation0 [shape = 'u32[]', space=smem, size = 0x4, offset = 0x4, fixed_abs, tag = 'smem constant byte address 0x4 - core index']
  #allocation1 [shape = 'u32[144,128]{1,0:T(1,128)}', space=vmem, size = 0x12000, scoped, tag = 'internal scratch']
  #allocation2 [shape = 'f32[320,128]{1,0:T(8,128)}', space=vmem, size = 0x28000, scoped, tag = 'scratch operand']
  #allocation3 [shape = 's32[1]{0}', space=sflag, size = 0x4, scoped, tag = 'scoped memory for tpu_custom_call.1']
  #allocation4 [shape = 's32[1]{0:T(128)S(6)}', space=smem, size = 0x200, scoped, tag = 'prefetched SMEM operand 0']
  #allocation5 [shape = 's32[1]{0:T(128)S(6)}', space=smem, size = 0x200, scoped, tag = 'prefetched SMEM operand 1']
  %s0 = inlined_call_operand.<no memory space> [shape: s32[1], index: 0, kind: input, shape index: {}]
  %s1 = inlined_call_operand.<no memory space> [shape: s32[1], index: 1, kind: input, shape index: {}]
  %s2 = inlined_call_operand.hbm [shape: f32[2,256,512], index: 2, kind: input, shape index: {}]
  %s3 = inlined_call_operand.hbm [shape: f32[2,256,512], index: 3, kind: input, shape index: {}]
  %s4 = inlined_call_operand.hbm [shape: f32[2,256,512], index: 4, kind: input, shape index: {}]
  %s5 = inlined_call_operand.hbm [shape: f32[512,128], index: 5, kind: input, shape index: {}]
  %s6 = inlined_call_operand.vmem [shape: f32[1,128], index: 6, kind: input, shape index: {}]
  %s7 = inlined_call_operand.hbm [shape: f32[4,256,128], index: 7, kind: input, shape index: {}]
  %s8 = inlined_call_operand.hbm [shape: f32[128,128], index: 8, kind: input, shape index: {}]
  %s9 = inlined_call_operand.vmem [shape: f32[1,128], index: 9, kind: input, shape index: {}]
  %s10 = inlined_call_operand.hbm [shape: f32[128,512], index: 10, kind: input, shape index: {}]
  %s11 = inlined_call_operand.vmem [shape: f32[1,512], index: 11, kind: input, shape index: {}]
  %s12 = inlined_call_operand.hbm [shape: f32[2,256,512], index: 12, kind: output, shape index: {}]
  %s13 = sld [smem:[#allocation0]]
  $region109: #{tpu_custom_call.1} parent=0
    _
  %s15 = ssub.s32 1, %s13
  %s16 = scalar_select 0, %s15, %s13
  %17 = sst [smem:[#allocation4]] %s0
  %18 = sst [smem:[#allocation5]] %s1
  $region1: #{tpu_custom_call.1} parent=0
    #allocation6 [shape = 'u8[1048576]{0}', space=vmem, size = 0x100000, scoped, tag = 'input window, operand 2']
    #allocation7 [shape = 's32[2]{0}', space=sflag, size = 0x8, scoped, tag = 'scoped memory for tpu_custom_call.1']
    #allocation8 [shape = 's32[2]{0}', space=sflag, size = 0x8, scoped, tag = 'scoped memory for tpu_custom_call.1']
    #allocation9 [shape = 'u8[65536]{0}', space=vmem, size = 0x10000, scoped, tag = 'input window, operand 3']
    #allocation10 [shape = 's32[2]{0}', space=sflag, size = 0x8, scoped, tag = 'scoped memory for tpu_custom_call.1']
    #allocation11 [shape = 'u8[65536]{0}', space=vmem, size = 0x10000, scoped, tag = 'input window, operand 4']
    #allocation12 [shape = 'u8[262144]{0}', space=vmem, size = 0x40000, scoped, tag = 'input window, operand 5, single buffered']
    #allocation13 [shape = 's32[1]{0}', space=sflag, size = 0x4, scoped, tag = 'scoped memory for tpu_custom_call.1']
    #allocation14 [shape = 'u8[524288]{0}', space=vmem, size = 0x80000, scoped, tag = 'input window, operand 7, single buffered']
    #allocation15 [shape = 'u8[65536]{0}', space=vmem, size = 0x10000, scoped, tag = 'input window, operand 8, single buffered']
    #allocation16 [shape = 's32[1]{0}', space=sflag, size = 0x4, scoped, tag = 'scoped memory for tpu_custom_call.1']
    #allocation17 [shape = 'u8[262144]{0}', space=vmem, size = 0x40000, scoped, tag = 'input window, operand 10, single buffered']
    #allocation18 [shape = 'u8[1048576]{0}', space=vmem, size = 0x100000, scoped, tag = 'output window, operand 0']
    %19 = vsyncpa [#allocation7], 0
    %s20 = scalar_lea.sflag [#allocation7], 1
    %21 = vsyncpa %s20, 0
    %22 = vsyncpa [#allocation10], 0
    %s23 = scalar_lea.sflag [#allocation10], 1
    %24 = vsyncpa %s23, 0
    %25 = vsyncpa [#allocation13], 0
    %26 = vsyncpa [#allocation16], 0
    %27 = vsyncpa [#allocation8], 0
    %s28 = scalar_lea.sflag [#allocation8], 1
    %29 = vsyncpa %s28, 0
    loop: start=0, step=1, limit=4
    $region2: #{tpu_custom_call.1} parent=1 // loop_pre_header
      _
    $region3: #{tpu_custom_call.1} parent=1 // loop_header
      %s31 = sphi 0, %s35
      %p32 = scmp.ge.s32.totalorder %s31, 4
      %s38 = sphi 0, %s50
      %s39 = sphi 0, %s46
      %s40 = sphi 0, %s38
      %s41 = sphi 0, %s39
      %s42 = sphi 0, %s40
      %s43 = sphi 0, %s41
      %s55 = sphi 0, %s57
      %s58 = sphi 0, %s55
      %s59 = sphi 0, %s58
      %s75 = sphi 0, %s59
      %s85 = sphi 0, %s87
      %s88 = sphi 0, %s85
      %s89 = sphi 0, %s88
      %s105 = sphi 0, %s89
      %s115 = sphi 0, %s117
      %s118 = sphi 0, %s115
      %s119 = sphi 0, %s118
      %s135 = sphi 0, %s119
      %s139 = sphi 0, %s139
      %s141 = sphi 0, %s139
      %s142 = sphi 0, %s141
      %s156 = sphi 0, %s142
      %s160 = sphi 0, %s160
      %s162 = sphi 0, %s160
      %s163 = sphi 0, %s162
      %s177 = sphi 0, %s163
      %s181 = sphi 0, %s181
      %s183 = sphi 0, %s181
      %s184 = sphi 0, %s183
      %s198 = sphi 0, %s184
      %s202 = sphi 0, %s202
      %s204 = sphi 0, %s202
      %s205 = sphi 0, %s204
      %s219 = sphi 0, %s205
      %s223 = sphi 0, %s223
      %s225 = sphi 0, %s223
      %s226 = sphi 0, %s225
      %s240 = sphi 0, %s226
      %s244 = sphi 0, %s244
      %s246 = sphi 0, %s244
      %s247 = sphi 0, %s246
      %s261 = sphi 0, %s247
      %s265 = sphi 0, %s265
      %s267 = sphi 0, %s265
      %s268 = sphi 0, %s267
      %s282 = sphi 0, %s268
      %s290 = sphi 0, %s292
      %s293 = sphi 0, %s290
      %s294 = sphi 0, %s293
      %s310 = sphi 0, %s294
    $region4: #{tpu_custom_call.1} parent=1 // loop_header_branch
      %34 = sbr.rel (%p32) target = $region8
    $region5: #{tpu_custom_call.1} parent=1 // loop_body
      %s36 = ssub.s32 %s31, 1
      %s37 = ssub.s32 %s31, 2
      %s44 = sadd.s32 1, %s39
      %p45 = scmp.ge.s32.totalorder %s44, 1
      %s46 = scalar_select %p45, 0, %s44
      %s47 = sadd.s32 1, %s38
      %s48 = scalar_select %p45, %s47, %s38
      %p49 = scmp.ge.s32.totalorder %s48, 2
      %s50 = scalar_select %p49, 0, %s48
      %s51 = ssub.s32 %s38, %s50
      %s52 = ssub.s32 %s39, %s46
      %s53 = sor.u32 %s51, %s52
      %p54 = scmp.eq.s32.totalorder %s53, 0
      %s56 = sadd.s32 %s55, 1
      %s57 = scalar_select %p54, %s55, %s56
      %p60 = pneg %p54
      %p61 = scmp.eq.s32.totalorder %s31, 1
      %p62 = por %p60, %p61
      %p63 = scmp.ne.s32.totalorder %s55, %s58
      %p64 = scmp.eq.s32.totalorder %s31, 0
      %p65 = por %p63, %p64
      %p66 = scmp.ne.s32.totalorder %s55, %s58
      %p67 = scmp.eq.s32.totalorder %s36, 1
      %p68 = por %p66, %p67
      %p69 = scmp.ne.s32.totalorder %s58, %s59
      %p70 = scmp.eq.s32.totalorder %s36, 0
      %p71 = por %p69, %p70
      %p72 = scmp.ne.s32.totalorder %s58, %s59
      %p73 = scmp.eq.s32.totalorder %s37, 1
      %p74 = por %p72, %p73
      %p76 = scmp.ne.s32.totalorder %s59, %s75
      %p77 = scmp.eq.s32.totalorder %s37, 0
      %p78 = por %p76, %p77
      %s79 = sld [smem:[#allocation4 + %s39]]
      %s80 = sld [smem:[#allocation4 + %s46]]
      %s81 = ssub.s32 %s38, %s50
      %s82 = ssub.s32 %s79, %s80
      %s83 = sor.u32 %s81, %s82
      %p84 = scmp.eq.s32.totalorder %s83, 0
      %s86 = sadd.s32 %s85, 1
      %s87 = scalar_select %p84, %s85, %s86
      %p90 = pneg %p84
      %p91 = scmp.eq.s32.totalorder %s31, 1
      %p92 = por %p90, %p91
      %p93 = scmp.ne.s32.totalorder %s85, %s88
      %p94 = scmp.eq.s32.totalorder %s31, 0
      %p95 = por %p93, %p94
      %p96 = scmp.ne.s32.totalorder %s85, %s88
      %p97 = scmp.eq.s32.totalorder %s36, 1
      %p98 = por %p96, %p97
      %p99 = scmp.ne.s32.totalorder %s88, %s89
      %p100 = scmp.eq.s32.totalorder %s36, 0
      %p101 = por %p99, %p100
      %p102 = scmp.ne.s32.totalorder %s88, %s89
      %p103 = scmp.eq.s32.totalorder %s37, 1
      %p104 = por %p102, %p103
      %p106 = scmp.ne.s32.totalorder %s89, %s105
      %p107 = scmp.eq.s32.totalorder %s37, 0
      %p108 = por %p106, %p107
      %s109 = sld [smem:[#allocation5 + %s39]]
      %s110 = sld [smem:[#allocation5 + %s46]]
      %s111 = ssub.s32 %s38, %s50
      %s112 = ssub.s32 %s109, %s110
      %s113 = sor.u32 %s111, %s112
      %p114 = scmp.eq.s32.totalorder %s113, 0
      %s116 = sadd.s32 %s115, 1
      %s117 = scalar_select %p114, %s115, %s116
      %p120 = pneg %p114
      %p121 = scmp.eq.s32.totalorder %s31, 1
      %p122 = por %p120, %p121
      %p123 = scmp.ne.s32.totalorder %s115, %s118
      %p124 = scmp.eq.s32.totalorder %s31, 0
      %p125 = por %p123, %p124
      %p126 = scmp.ne.s32.totalorder %s115, %s118
      %p127 = scmp.eq.s32.totalorder %s36, 1
      %p128 = por %p126, %p127
      %p129 = scmp.ne.s32.totalorder %s118, %s119
      %p130 = scmp.eq.s32.totalorder %s36, 0
      %p131 = por %p129, %p130
      %p132 = scmp.ne.s32.totalorder %s118, %s119
      %p133 = scmp.eq.s32.totalorder %s37, 1
      %p134 = por %p132, %p133
      %p136 = scmp.ne.s32.totalorder %s119, %s135
      %p137 = scmp.eq.s32.totalorder %s37, 0
      %p138 = por %p136, %p137
      %s140 = sadd.s32 %s139, 1
      %p143 = scmp.eq.s32.totalorder %s31, 1
      %p144 = scmp.ne.s32.totalorder %s139, %s141
      %p145 = scmp.eq.s32.totalorder %s31, 0
      %p146 = por %p144, %p145
      %p147 = scmp.ne.s32.totalorder %s139, %s141
      %p148 = scmp.eq.s32.totalorder %s36, 1
      %p149 = por %p147, %p148
      %p150 = scmp.ne.s32.totalorder %s141, %s142
      %p151 = scmp.eq.s32.totalorder %s36, 0
      %p152 = por %p150, %p151
      %p153 = scmp.ne.s32.totalorder %s141, %s142
      %p154 = scmp.eq.s32.totalorder %s37, 1
      %p155 = por %p153, %p154
      %p157 = scmp.ne.s32.totalorder %s142, %s156
      %p158 = scmp.eq.s32.totalorder %s37, 0
      %p159 = por %p157, %p158
      %s161 = sadd.s32 %s160, 1
      %p164 = scmp.eq.s32.totalorder %s31, 1
      %p165 = scmp.ne.s32.totalorder %s160, %s162
      %p166 = scmp.eq.s32.totalorder %s31, 0
      %p167 = por %p165, %p166
      %p168 = scmp.ne.s32.totalorder %s160, %s162
      %p169 = scmp.eq.s32.totalorder %s36, 1
      %p170 = por %p168, %p169
      %p171 = scmp.ne.s32.totalorder %s162, %s163
      %p172 = scmp.eq.s32.totalorder %s36, 0
      %p173 = por %p171, %p172
      %p174 = scmp.ne.s32.totalorder %s162, %s163
      %p175 = scmp.eq.s32.totalorder %s37, 1
      %p176 = por %p174, %p175
      %p178 = scmp.ne.s32.totalorder %s163, %s177
      %p179 = scmp.eq.s32.totalorder %s37, 0
      %p180 = por %p178, %p179
      %s182 = sadd.s32 %s181, 1
      %p185 = scmp.eq.s32.totalorder %s31, 1
      %p186 = scmp.ne.s32.totalorder %s181, %s183
      %p187 = scmp.eq.s32.totalorder %s31, 0
      %p188 = por %p186, %p187
      %p189 = scmp.ne.s32.totalorder %s181, %s183
      %p190 = scmp.eq.s32.totalorder %s36, 1
      %p191 = por %p189, %p190
      %p192 = scmp.ne.s32.totalorder %s183, %s184
      %p193 = scmp.eq.s32.totalorder %s36, 0
      %p194 = por %p192, %p193
      %p195 = scmp.ne.s32.totalorder %s183, %s184
      %p196 = scmp.eq.s32.totalorder %s37, 1
      %p197 = por %p195, %p196
      %p199 = scmp.ne.s32.totalorder %s184, %s198
      %p200 = scmp.eq.s32.totalorder %s37, 0
      %p201 = por %p199, %p200
      %s203 = sadd.s32 %s202, 1
      %p206 = scmp.eq.s32.totalorder %s31, 1
      %p207 = scmp.ne.s32.totalorder %s202, %s204
      %p208 = scmp.eq.s32.totalorder %s31, 0
      %p209 = por %p207, %p208
      %p210 = scmp.ne.s32.totalorder %s202, %s204
      %p211 = scmp.eq.s32.totalorder %s36, 1
      %p212 = por %p210, %p211
      %p213 = scmp.ne.s32.totalorder %s204, %s205
      %p214 = scmp.eq.s32.totalorder %s36, 0
      %p215 = por %p213, %p214
      %p216 = scmp.ne.s32.totalorder %s204, %s205
      %p217 = scmp.eq.s32.totalorder %s37, 1
      %p218 = por %p216, %p217
      %p220 = scmp.ne.s32.totalorder %s205, %s219
      %p221 = scmp.eq.s32.totalorder %s37, 0
      %p222 = por %p220, %p221
      %s224 = sadd.s32 %s223, 1
      %p227 = scmp.eq.s32.totalorder %s31, 1
      %p228 = scmp.ne.s32.totalorder %s223, %s225
      %p229 = scmp.eq.s32.totalorder %s31, 0
      %p230 = por %p228, %p229
      %p231 = scmp.ne.s32.totalorder %s223, %s225
      %p232 = scmp.eq.s32.totalorder %s36, 1
      %p233 = por %p231, %p232
      %p234 = scmp.ne.s32.totalorder %s225, %s226
      %p235 = scmp.eq.s32.totalorder %s36, 0
      %p236 = por %p234, %p235
      %p237 = scmp.ne.s32.totalorder %s225, %s226
      %p238 = scmp.eq.s32.totalorder %s37, 1
      %p239 = por %p237, %p238
      %p241 = scmp.ne.s32.totalorder %s226, %s240
      %p242 = scmp.eq.s32.totalorder %s37, 0
      %p243 = por %p241, %p242
      %s245 = sadd.s32 %s244, 1
      %p248 = scmp.eq.s32.totalorder %s31, 1
      %p249 = scmp.ne.s32.totalorder %s244, %s246
      %p250 = scmp.eq.s32.totalorder %s31, 0
      %p251 = por %p249, %p250
      %p252 = scmp.ne.s32.totalorder %s244, %s246
      %p253 = scmp.eq.s32.totalorder %s36, 1
      %p254 = por %p252, %p253
      %p255 = scmp.ne.s32.totalorder %s246, %s247
      %p256 = scmp.eq.s32.totalorder %s36, 0
      %p257 = por %p255, %p256
      %p258 = scmp.ne.s32.totalorder %s246, %s247
      %p259 = scmp.eq.s32.totalorder %s37, 1
      %p260 = por %p258, %p259
      %p262 = scmp.ne.s32.totalorder %s247, %s261
      %p263 = scmp.eq.s32.totalorder %s37, 0
      %p264 = por %p262, %p263
      %s266 = sadd.s32 %s265, 1
      %p269 = scmp.eq.s32.totalorder %s31, 1
      %p270 = scmp.ne.s32.totalorder %s265, %s267
      %p271 = scmp.eq.s32.totalorder %s31, 0
      %p272 = por %p270, %p271
      %p273 = scmp.ne.s32.totalorder %s265, %s267
      %p274 = scmp.eq.s32.totalorder %s36, 1
      %p275 = por %p273, %p274
      %p276 = scmp.ne.s32.totalorder %s267, %s268
      %p277 = scmp.eq.s32.totalorder %s36, 0
      %p278 = por %p276, %p277
      %p279 = scmp.ne.s32.totalorder %s267, %s268
      %p280 = scmp.eq.s32.totalorder %s37, 1
      %p281 = por %p279, %p280
      %p283 = scmp.ne.s32.totalorder %s268, %s282
      %p284 = scmp.eq.s32.totalorder %s37, 0
      %p285 = por %p283, %p284
      %s286 = ssub.s32 %s38, %s50
      %s287 = ssub.s32 %s39, %s46
      %s288 = sor.u32 %s286, %s287
      %p289 = scmp.eq.s32.totalorder %s288, 0
      %s291 = sadd.s32 %s290, 1
      %s292 = scalar_select %p289, %s290, %s291
      %p295 = pneg %p289
      %p296 = scmp.eq.s32.totalorder %s31, 1
      %p297 = por %p295, %p296
      %p298 = scmp.ne.s32.totalorder %s290, %s293
      %p299 = scmp.eq.s32.totalorder %s31, 0
      %p300 = por %p298, %p299
      %p301 = scmp.ne.s32.totalorder %s290, %s293
      %p302 = scmp.eq.s32.totalorder %s36, 1
      %p303 = por %p301, %p302
      %p304 = scmp.ne.s32.totalorder %s293, %s294
      %p305 = scmp.eq.s32.totalorder %s36, 0
      %p306 = por %p304, %p305
      %p307 = scmp.ne.s32.totalorder %s293, %s294
      %p308 = scmp.eq.s32.totalorder %s37, 1
      %p309 = por %p307, %p308
      %p311 = scmp.ne.s32.totalorder %s294, %s310
      %p312 = scmp.eq.s32.totalorder %s37, 0
      %p313 = por %p311, %p312
      %p314 = scmp.le.s32.totalorder 1, %s31
      %p315 = scmp.lt.s32.totalorder %s31, 3
      %p316 = pnand %p314, %p315
      %p317 = pneg %p316
      // Predicated region
      $region9: #{tpu_custom_call.1} parent=5 // pred_check
        _
      $region10: #{tpu_custom_call.1} parent=5 // pred_check_branch
        %319 = sbr.rel (%p316) target = $region12
      $region11: #{tpu_custom_call.1} parent=5 // pred_region
        %s320 = ssub.s32 %s31, 1
        // Predicated region
        $region13: #{tpu_custom_call.1} parent=11 // pred_check
          %p321 = pneg %p152
        $region14: #{tpu_custom_call.1} parent=11 // pred_check_branch
          %323 = sbr.rel (%p321) target = $region16
        $region15: #{tpu_custom_call.1} parent=11 // pred_region
          %s325 = ssub.s32 8192, 8192
          %326 = vsyncadd [#allocation13], %s325
          %s327 = sshll.u32 [#allocation12], 4
          %s328 = int_to_ptr.vmem [resolvable:$true] %s327
          %333 = dma.hbm_to_vmem [thread:$0]  %s5, 8192, %s328, [#allocation13], 128, 128, 8
        $region16: #{tpu_custom_call.1} parent=11 // pred_fallthru
          _
        // Predicated region
        $region17: #{tpu_custom_call.1} parent=11 // pred_check
          %p334 = pneg %p173
        $region18: #{tpu_custom_call.1} parent=11 // pred_check_branch
          %336 = sbr.rel (%p334) target = $region20
        $region19: #{tpu_custom_call.1} parent=11 // pred_region
          _
        $region20: #{tpu_custom_call.1} parent=11 // pred_fallthru
          _
        // Predicated region
        $region21: #{tpu_custom_call.1} parent=11 // pred_check
          %p337 = pneg %p194
        $region22: #{tpu_custom_call.1} parent=11 // pred_check_branch
          %339 = sbr.rel (%p337) target = $region24
        $region23: #{tpu_custom_call.1} parent=11 // pred_region
          %s341 = ssub.s32 16384, 16384
          %342 = vsyncadd [#allocation13], %s341
          %s343 = sshll.u32 [#allocation14], 4
          %s344 = int_to_ptr.vmem [resolvable:$true] %s343
          %349 = dma.hbm_to_vmem [thread:$0]  %s7, 16384, %s344, [#allocation13], 128, 128, 8
        $region24: #{tpu_custom_call.1} parent=11 // pred_fallthru
          _
        // Predicated region
        $region25: #{tpu_custom_call.1} parent=11 // pred_check
          %p350 = pneg %p215
        $region26: #{tpu_custom_call.1} parent=11 // pred_check_branch
          %352 = sbr.rel (%p350) target = $region28
        $region27: #{tpu_custom_call.1} parent=11 // pred_region
          %s354 = ssub.s32 2048, 2048
          %355 = vsyncadd [#allocation16], %s354
          %s356 = sshll.u32 [#allocation15], 4
          %s357 = int_to_ptr.vmem [resolvable:$true] %s356
          %362 = dma.hbm_to_vmem [thread:$0]  %s8, 2048, %s357, [#allocation16], 128, 128, 8
        $region28: #{tpu_custom_call.1} parent=11 // pred_fallthru
          _
        // Predicated region
        $region29: #{tpu_custom_call.1} parent=11 // pred_check
          %p363 = pneg %p236
        $region30: #{tpu_custom_call.1} parent=11 // pred_check_branch
          %365 = sbr.rel (%p363) target = $region32
        $region31: #{tpu_custom_call.1} parent=11 // pred_region
          _
        $region32: #{tpu_custom_call.1} parent=11 // pred_fallthru
          _
        // Predicated region
        $region33: #{tpu_custom_call.1} parent=11 // pred_check
          %p366 = pneg %p257
        $region34: #{tpu_custom_call.1} parent=11 // pred_check_branch
          %368 = sbr.rel (%p366) target = $region36
        $region35: #{tpu_custom_call.1} parent=11 // pred_region
          %s370 = ssub.s32 8192, 8192
          %371 = vsyncadd [#allocation16], %s370
          %s372 = sshll.u32 [#allocation17], 4
          %s373 = int_to_ptr.vmem [resolvable:$true] %s372
          %378 = dma.hbm_to_vmem [thread:$0]  %s10, 8192, %s373, [#allocation16], 512, 512, 32
        $region36: #{tpu_custom_call.1} parent=11 // pred_fallthru
          _
        // Predicated region
        $region37: #{tpu_custom_call.1} parent=11 // pred_check
          %p379 = pneg %p278
        $region38: #{tpu_custom_call.1} parent=11 // pred_check_branch
          %381 = sbr.rel (%p379) target = $region40
        $region39: #{tpu_custom_call.1} parent=11 // pred_region
          _
        $region40: #{tpu_custom_call.1} parent=11 // pred_fallthru
          _
      $region12: #{tpu_custom_call.1} parent=5 // pred_fallthru
        _
      %p382 = scmp.lt.s32.totalorder %s31, 2
      // Predicated region
      $region41: #{tpu_custom_call.1} parent=5 // pred_check
        %p383 = pneg %p382
      $region42: #{tpu_custom_call.1} parent=5 // pred_check_branch
        %385 = sbr.rel (%p383) target = $region44
      $region43: #{tpu_custom_call.1} parent=5 // pred_region
        // Predicated region
        $region45: #{tpu_custom_call.1} parent=43 // pred_check
          %p386 = pneg %p65
        $region46: #{tpu_custom_call.1} parent=43 // pred_check_branch
          %388 = sbr.rel (%p386) target = $region48
        $region47: #{tpu_custom_call.1} parent=43 // pred_region
          %s389 = sand.u32 %s55, 1
          %s390 = scalar_lea.sflag [#allocation7], %s389
          %s391 = sand.u32 %s55, 1
          %s392 = smul.addr %s391, 1024
          %s393 = scalar_lea.vmem [#allocation6], %s392
          %s394 = smul.u32 32, %s39
          %s396 = ssub.s32 16384, 16384
          %397 = vsyncadd %s390, %s396
          %s398 = smul.addr %s394, 4
          %s399 = smul.addr %s38, 128
          %s400 = sadd.s32 %s398, %s399
          %s401 = smul.addr %s400, 128
          %s402 = scalar_lea.hbm %s2, %s401
          %s403 = sshll.u32 %s393, 4
          %s404 = int_to_ptr.vmem [resolvable:$true] %s403
          %409 = dma.hbm_to_vmem [thread:$0]  %s402, 16384, %s404, %s390, 512, 512, 32
        $region48: #{tpu_custom_call.1} parent=43 // pred_fallthru
          _
        // Predicated region
        $region49: #{tpu_custom_call.1} parent=43 // pred_check
          %p410 = pneg %p95
        $region50: #{tpu_custom_call.1} parent=43 // pred_check_branch
          %412 = sbr.rel (%p410) target = $region52
        $region51: #{tpu_custom_call.1} parent=43 // pred_region
          %s413 = sand.u32 %s31, 1
          %s414 = scalar_lea.sflag [#allocation10], %s413
          %s415 = sand.u32 %s85, 1
          %s416 = smul.addr %s415, 64
          %s417 = scalar_lea.vmem [#allocation9], %s416
          %s418 = sld [smem:[#allocation4 + %s39]]
          %s419 = smul.u32 2, %s418
          %s421 = ssub.s32 1024, 1024
          %422 = vsyncadd %s414, %s421
          %s423 = smul.addr %s419, 4
          %s424 = smul.addr %s38, 128
          %s425 = sadd.s32 %s423, %s424
          %s426 = smul.addr %s425, 128
          %s427 = scalar_lea.hbm %s3, %s426
          %s428 = sshll.u32 %s417, 4
          %s429 = int_to_ptr.vmem [resolvable:$true] %s428
          %434 = dma.hbm_to_vmem [thread:$0]  %s427, 1024, %s429, %s414, 512, 512, 32
        $region52: #{tpu_custom_call.1} parent=43 // pred_fallthru
          _
        // Predicated region
        $region53: #{tpu_custom_call.1} parent=43 // pred_check
          %p435 = pneg %p125
        $region54: #{tpu_custom_call.1} parent=43 // pred_check_branch
          %437 = sbr.rel (%p435) target = $region56
        $region55: #{tpu_custom_call.1} parent=43 // pred_region
          %s438 = sand.u32 %s31, 1
          %s439 = scalar_lea.sflag [#allocation10], %s438
          %s440 = sand.u32 %s115, 1
          %s441 = smul.addr %s440, 64
          %s442 = scalar_lea.vmem [#allocation11], %s441
          %s443 = sld [smem:[#allocation5 + %s39]]
          %s444 = smul.u32 2, %s443
          %s446 = ssub.s32 1024, 1024
          %447 = vsyncadd %s439, %s446
          %s448 = smul.addr %s444, 4
          %s449 = smul.addr %s38, 128
          %s450 = sadd.s32 %s448, %s449
          %s451 = smul.addr %s450, 128
          %s452 = scalar_lea.hbm %s4, %s451
          %s453 = sshll.u32 %s442, 4
          %s454 = int_to_ptr.vmem [resolvable:$true] %s453
          %459 = dma.hbm_to_vmem [thread:$0]  %s452, 1024, %s454, %s439, 512, 512, 32
        $region56: #{tpu_custom_call.1} parent=43 // pred_fallthru
          _
      $region44: #{tpu_custom_call.1} parent=5 // pred_fallthru
        _
      %p460 = scmp.le.s32.totalorder 1, %s31
      %p461 = scmp.lt.s32.totalorder %s31, 3
      %p462 = pnand %p460, %p461
      %p463 = pneg %p462
      // Predicated region
      $region57: #{tpu_custom_call.1} parent=5 // pred_check
        _
      $region58: #{tpu_custom_call.1} parent=5 // pred_check_branch
        %465 = sbr.rel (%p462) target = $region60
      $region59: #{tpu_custom_call.1} parent=5 // pred_region
        %s466 = ssub.s32 %s31, 1
        %s467 = sand.u32 %s58, 1
        %s468 = scalar_lea.sflag [#allocation7], %s467
        %s469 = sand.u32 %s58, 1
        %s470 = smul.addr %s469, 1024
        %s471 = scalar_lea.vmem [#allocation6], %s470
        // Predicated region
        $region61: #{tpu_custom_call.1} parent=59 // pred_check
          %p472 = pneg %p71
        $region62: #{tpu_custom_call.1} parent=59 // pred_check_branch
          %474 = sbr.rel (%p472) target = $region64
        $region63: #{tpu_custom_call.1} parent=59 // pred_region
          %475 = dma.done %s468, 16384
        $region64: #{tpu_custom_call.1} parent=59 // pred_fallthru
          _
        %s476 = sand.u32 %s36, 1
        %s477 = scalar_lea.sflag [#allocation10], %s476
        %s478 = sand.u32 %s88, 1
        %s479 = smul.addr %s478, 64
        %s480 = scalar_lea.vmem [#allocation9], %s479
        // Predicated region
        $region65: #{tpu_custom_call.1} parent=59 // pred_check
          %p481 = pneg %p101
        $region66: #{tpu_custom_call.1} parent=59 // pred_check_branch
          %483 = sbr.rel (%p481) target = $region68
        $region67: #{tpu_custom_call.1} parent=59 // pred_region
          %484 = dma.done %s477, 1024
        $region68: #{tpu_custom_call.1} parent=59 // pred_fallthru
          _
        %s485 = sand.u32 %s36, 1
        %s486 = scalar_lea.sflag [#allocation10], %s485
        %s487 = sand.u32 %s118, 1
        %s488 = smul.addr %s487, 64
        %s489 = scalar_lea.vmem [#allocation11], %s488
        // Predicated region
        $region69: #{tpu_custom_call.1} parent=59 // pred_check
          %p490 = pneg %p131
        $region70: #{tpu_custom_call.1} parent=59 // pred_check_branch
          %492 = sbr.rel (%p490) target = $region72
        $region71: #{tpu_custom_call.1} parent=59 // pred_region
          %493 = dma.done %s486, 1024
        $region72: #{tpu_custom_call.1} parent=59 // pred_fallthru
          _
        // Predicated region
        $region73: #{tpu_custom_call.1} parent=59 // pred_check
          %p494 = pneg %p152
        $region74: #{tpu_custom_call.1} parent=59 // pred_check_branch
          %496 = sbr.rel (%p494) target = $region76
        $region75: #{tpu_custom_call.1} parent=59 // pred_region
          %497 = dma.done [#allocation13], 8192
        $region76: #{tpu_custom_call.1} parent=59 // pred_fallthru
          _
        // Predicated region
        $region77: #{tpu_custom_call.1} parent=59 // pred_check
          %p498 = pneg %p194
        $region78: #{tpu_custom_call.1} parent=59 // pred_check_branch
          %500 = sbr.rel (%p498) target = $region80
        $region79: #{tpu_custom_call.1} parent=59 // pred_region
          %501 = dma.done [#allocation13], 16384
        $region80: #{tpu_custom_call.1} parent=59 // pred_fallthru
          _
        // Predicated region
        $region81: #{tpu_custom_call.1} parent=59 // pred_check
          %p502 = pneg %p215
        $region82: #{tpu_custom_call.1} parent=59 // pred_check_branch
          %504 = sbr.rel (%p502) target = $region84
        $region83: #{tpu_custom_call.1} parent=59 // pred_region
          %505 = dma.done [#allocation16], 2048
        $region84: #{tpu_custom_call.1} parent=59 // pred_fallthru
          _
        // Predicated region
        $region85: #{tpu_custom_call.1} parent=59 // pred_check
          %p506 = pneg %p257
        $region86: #{tpu_custom_call.1} parent=59 // pred_check_branch
          %508 = sbr.rel (%p506) target = $region88
        $region87: #{tpu_custom_call.1} parent=59 // pred_region
          %509 = dma.done [#allocation16], 8192
        $region88: #{tpu_custom_call.1} parent=59 // pred_fallthru
          _
        %s510 = sand.u32 %s58, 1
        %s511 = scalar_lea.sflag [#allocation7], %s510
        %s512 = sand.u32 %s58, 1
        %s513 = smul.addr %s512, 1024
        %s514 = scalar_lea.vmem [#allocation6], %s513
        %p515 = pneg %p71
        %p516 = pneg %p68
        %s517 = sand.u32 %s36, 1
        %s518 = scalar_lea.sflag [#allocation10], %s517
        %s519 = sand.u32 %s88, 1
        %s520 = smul.addr %s519, 64
        %s521 = scalar_lea.vmem [#allocation9], %s520
        %p522 = pneg %p101
        %p523 = pneg %p98
        %s524 = sand.u32 %s36, 1
        %s525 = scalar_lea.sflag [#allocation10], %s524
        %s526 = sand.u32 %s118, 1
        %s527 = smul.addr %s526, 64
        %s528 = scalar_lea.vmem [#allocation11], %s527
        %p529 = pneg %p131
        %p530 = pneg %p128
        %p531 = pneg %p152
        %p532 = pneg %p149
        %p533 = pneg %p173
        %p534 = pneg %p170
        %p535 = pneg %p194
        %p536 = pneg %p191
        %p537 = pneg %p215
        %p538 = pneg %p212
        %p539 = pneg %p236
        %p540 = pneg %p233
        %p541 = pneg %p257
        %p542 = pneg %p254
        %p543 = pneg %p278
        %p544 = pneg %p275
        %p545 = pneg %p306
        %p546 = pneg %p303
        %s547 = sand.u32 %s293, 1
        %s548 = scalar_lea.sflag [#allocation8], %s547
        %s549 = sand.u32 %s293, 1
        %s550 = smul.addr %s549, 1024
        %s551 = scalar_lea.vmem [#allocation18], %s550
        %s552 = smul.u32 32, %s41
        %s553 = sld [smem:[#allocation4 + %s41]]
        %s554 = smul.u32 2, %s553
        %s555 = sld [smem:[#allocation5 + %s41]]
        %s556 = smul.u32 2, %s555
        %s557 = smul.u32 32, %s41
        %558 = vst [vmem:[#allocation2] sm:$0xff] 0.0
        %559 = vst [vmem:[#allocation2 + $0x8] sm:$0xff] 0.0
        %560 = vst [vmem:[#allocation2 + $0x10] sm:$0xff] 0.0
        %561 = vst [vmem:[#allocation2 + $0x18] sm:$0xff] 0.0
        %562 = vst [vmem:[#allocation2 + $0x120] sm:$0xff] 0.0
        %563 = vst [vmem:[#allocation2 + $0x128] sm:$0xff] 0.0
        %564 = vst [vmem:[#allocation2 + $0x130] sm:$0xff] 0.0
        %565 = vst [vmem:[#allocation2 + $0x138] sm:$0xff] 0.0
        %v566 = vlaneseq
        %v567 = vshrl.u32 %v566, 7
        %v568 = vadd.s32 %v567, 8
        %v569 = vadd.s32 %v567, 16
        %v570 = vadd.s32 %v567, 24
        %v571 = vadd.s32 %v567, 32
        %v572 = vadd.s32 %v567, 40
        %v573 = vadd.s32 %v567, 48
        %v574 = vadd.s32 %v567, 56
        %v575 = vadd.s32 %v567, 64
        %v576 = vadd.s32 %v567, 72
        %v577 = vadd.s32 %v567, 80
        %v578 = vadd.s32 %v567, 88
        %v579 = vadd.s32 %v567, 96
        %v580 = vadd.s32 %v567, 104
        %v581 = vadd.s32 %v567, 112
        %v582 = vadd.s32 %v567, 120
        %v583 = vadd.s32 %v567, 128
        %v584 = vadd.s32 %v567, 136
        %v585 = vadd.s32 %v567, 144
        %v586 = vadd.s32 %v567, 152
        %v587 = vadd.s32 %v567, 160
        %v588 = vadd.s32 %v567, 168
        %v589 = vadd.s32 %v567, 176
        %v590 = vadd.s32 %v567, 184
        %v591 = vadd.s32 %v567, 192
        %v592 = vadd.s32 %v567, 200
        %v593 = vadd.s32 %v567, 208
        %v594 = vadd.s32 %v567, 216
        %v595 = vadd.s32 %v567, 224
        %v596 = vadd.s32 %v567, 232
        %v597 = vadd.s32 %v567, 240
        %v598 = vadd.s32 %v567, 248
        %vm599 = vcmp.lt.s32.totalorder %v567, 0
        %v600 = vsub.s32 0, %v567
        %v601 = vsel %vm599, %v600, %v567
        %v602 = vshrl.u32 %v601, 4
        %v603 = vand.u32 %v601, 15
        %v604 = vsub.s32 0, %v603
        %v605 = vsel %vm599, %v604, %v603
        %vm606 = vcmp.lt.s32.totalorder %v568, 0
        %v607 = vsub.s32 0, %v568
        %v608 = vsel %vm606, %v607, %v568
        %v609 = vshrl.u32 %v608, 4
        %v610 = vand.u32 %v608, 15
        %v611 = vsub.s32 0, %v610
        %v612 = vsel %vm606, %v611, %v610
        %vm613 = vcmp.lt.s32.totalorder %v569, 0
        %v614 = vsub.s32 0, %v569
        %v615 = vsel %vm613, %v614, %v569
        %v616 = vshrl.u32 %v615, 4
        %v617 = vand.u32 %v615, 15
        %v618 = vsub.s32 0, %v617
        %v619 = vsel %vm613, %v618, %v617
        %vm620 = vcmp.lt.s32.totalorder %v570, 0
        %v621 = vsub.s32 0, %v570
        %v622 = vsel %vm620, %v621, %v570
        %v623 = vshrl.u32 %v622, 4
        %v624 = vand.u32 %v622, 15
        %v625 = vsub.s32 0, %v624
        %v626 = vsel %vm620, %v625, %v624
        %vm627 = vcmp.lt.s32.totalorder %v571, 0
        %v628 = vsub.s32 0, %v571
        %v629 = vsel %vm627, %v628, %v571
        %v630 = vshrl.u32 %v629, 4
        %v631 = vand.u32 %v629, 15
        %v632 = vsub.s32 0, %v631
        %v633 = vsel %vm627, %v632, %v631
        %vm634 = vcmp.lt.s32.totalorder %v572, 0
        %v635 = vsub.s32 0, %v572
        %v636 = vsel %vm634, %v635, %v572
        %v637 = vshrl.u32 %v636, 4
        %v638 = vand.u32 %v636, 15
        %v639 = vsub.s32 0, %v638
        %v640 = vsel %vm634, %v639, %v638
        %vm641 = vcmp.lt.s32.totalorder %v573, 0
        %v642 = vsub.s32 0, %v573
        %v643 = vsel %vm641, %v642, %v573
        %v644 = vshrl.u32 %v643, 4
        %v645 = vand.u32 %v643, 15
        %v646 = vsub.s32 0, %v645
        %v647 = vsel %vm641, %v646, %v645
        %vm648 = vcmp.lt.s32.totalorder %v574, 0
        %v649 = vsub.s32 0, %v574
        %v650 = vsel %vm648, %v649, %v574
        %v651 = vshrl.u32 %v650, 4
        %v652 = vand.u32 %v650, 15
        %v653 = vsub.s32 0, %v652
        %v654 = vsel %vm648, %v653, %v652
        %vm655 = vcmp.lt.s32.totalorder %v575, 0
        %v656 = vsub.s32 0, %v575
        %v657 = vsel %vm655, %v656, %v575
        %v658 = vshrl.u32 %v657, 4
        %v659 = vand.u32 %v657, 15
        %v660 = vsub.s32 0, %v659
        %v661 = vsel %vm655, %v660, %v659
        %vm662 = vcmp.lt.s32.totalorder %v576, 0
        %v663 = vsub.s32 0, %v576
        %v664 = vsel %vm662, %v663, %v576
        %v665 = vshrl.u32 %v664, 4
        %v666 = vand.u32 %v664, 15
        %v667 = vsub.s32 0, %v666
        %v668 = vsel %vm662, %v667, %v666
        %vm669 = vcmp.lt.s32.totalorder %v577, 0
        %v670 = vsub.s32 0, %v577
        %v671 = vsel %vm669, %v670, %v577
        %v672 = vshrl.u32 %v671, 4
        %v673 = vand.u32 %v671, 15
        %v674 = vsub.s32 0, %v673
        %v675 = vsel %vm669, %v674, %v673
        %vm676 = vcmp.lt.s32.totalorder %v578, 0
        %v677 = vsub.s32 0, %v578
        %v678 = vsel %vm676, %v677, %v578
        %v679 = vshrl.u32 %v678, 4
        %v680 = vand.u32 %v678, 15
        %v681 = vsub.s32 0, %v680
        %v682 = vsel %vm676, %v681, %v680
        %vm683 = vcmp.lt.s32.totalorder %v579, 0
        %v684 = vsub.s32 0, %v579
        %v685 = vsel %vm683, %v684, %v579
        %v686 = vshrl.u32 %v685, 4
        %v687 = vand.u32 %v685, 15
        %v688 = vsub.s32 0, %v687
        %v689 = vsel %vm683, %v688, %v687
        %vm690 = vcmp.lt.s32.totalorder %v580, 0
        %v691 = vsub.s32 0, %v580
        %v692 = vsel %vm690, %v691, %v580
        %v693 = vshrl.u32 %v692, 4
        %v694 = vand.u32 %v692, 15
        %v695 = vsub.s32 0, %v694
        %v696 = vsel %vm690, %v695, %v694
        %vm697 = vcmp.lt.s32.totalorder %v581, 0
        %v698 = vsub.s32 0, %v581
        %v699 = vsel %vm697, %v698, %v581
        %v700 = vshrl.u32 %v699, 4
        %v701 = vand.u32 %v699, 15
        %v702 = vsub.s32 0, %v701
        %v703 = vsel %vm697, %v702, %v701
        %vm704 = vcmp.lt.s32.totalorder %v582, 0
        %v705 = vsub.s32 0, %v582
        %v706 = vsel %vm704, %v705, %v582
        %v707 = vshrl.u32 %v706, 4
        %v708 = vand.u32 %v706, 15
        %v709 = vsub.s32 0, %v708
        %v710 = vsel %vm704, %v709, %v708
        %vm711 = vcmp.lt.s32.totalorder %v583, 0
        %v712 = vsub.s32 0, %v583
        %v713 = vsel %vm711, %v712, %v583
        %v714 = vshrl.u32 %v713, 4
        %v715 = vand.u32 %v713, 15
        %v716 = vsub.s32 0, %v715
        %v717 = vsel %vm711, %v716, %v715
        %vm718 = vcmp.lt.s32.totalorder %v584, 0
        %v719 = vsub.s32 0, %v584
        %v720 = vsel %vm718, %v719, %v584
        %v721 = vshrl.u32 %v720, 4
        %v722 = vand.u32 %v720, 15
        %v723 = vsub.s32 0, %v722
        %v724 = vsel %vm718, %v723, %v722
        %vm725 = vcmp.lt.s32.totalorder %v585, 0
        %v726 = vsub.s32 0, %v585
        %v727 = vsel %vm725, %v726, %v585
        %v728 = vshrl.u32 %v727, 4
        %v729 = vand.u32 %v727, 15
        %v730 = vsub.s32 0, %v729
        %v731 = vsel %vm725, %v730, %v729
        %vm732 = vcmp.lt.s32.totalorder %v586, 0
        %v733 = vsub.s32 0, %v586
        %v734 = vsel %vm732, %v733, %v586
        %v735 = vshrl.u32 %v734, 4
        %v736 = vand.u32 %v734, 15
        %v737 = vsub.s32 0, %v736
        %v738 = vsel %vm732, %v737, %v736
        %vm739 = vcmp.lt.s32.totalorder %v587, 0
        %v740 = vsub.s32 0, %v587
        %v741 = vsel %vm739, %v740, %v587
        %v742 = vshrl.u32 %v741, 4
        %v743 = vand.u32 %v741, 15
        %v744 = vsub.s32 0, %v743
        %v745 = vsel %vm739, %v744, %v743
        %vm746 = vcmp.lt.s32.totalorder %v588, 0
        %v747 = vsub.s32 0, %v588
        %v748 = vsel %vm746, %v747, %v588
        %v749 = vshrl.u32 %v748, 4
        %v750 = vand.u32 %v748, 15
        %v751 = vsub.s32 0, %v750
        %v752 = vsel %vm746, %v751, %v750
        %vm753 = vcmp.lt.s32.totalorder %v589, 0
        %v754 = vsub.s32 0, %v589
        %v755 = vsel %vm753, %v754, %v589
        %v756 = vshrl.u32 %v755, 4
        %v757 = vand.u32 %v755, 15
        %v758 = vsub.s32 0, %v757
        %v759 = vsel %vm753, %v758, %v757
        %vm760 = vcmp.lt.s32.totalorder %v590, 0
        %v761 = vsub.s32 0, %v590
        %v762 = vsel %vm760, %v761, %v590
        %v763 = vshrl.u32 %v762, 4
        %v764 = vand.u32 %v762, 15
        %v765 = vsub.s32 0, %v764
        %v766 = vsel %vm760, %v765, %v764
        %vm767 = vcmp.lt.s32.totalorder %v591, 0
        %v768 = vsub.s32 0, %v591
        %v769 = vsel %vm767, %v768, %v591
        %v770 = vshrl.u32 %v769, 4
        %v771 = vand.u32 %v769, 15
        %v772 = vsub.s32 0, %v771
        %v773 = vsel %vm767, %v772, %v771
        %vm774 = vcmp.lt.s32.totalorder %v592, 0
        %v775 = vsub.s32 0, %v592
        %v776 = vsel %vm774, %v775, %v592
        %v777 = vshrl.u32 %v776, 4
        %v778 = vand.u32 %v776, 15
        %v779 = vsub.s32 0, %v778
        %v780 = vsel %vm774, %v779, %v778
        %vm781 = vcmp.lt.s32.totalorder %v593, 0
        %v782 = vsub.s32 0, %v593
        %v783 = vsel %vm781, %v782, %v593
        %v784 = vshrl.u32 %v783, 4
        %v785 = vand.u32 %v783, 15
        %v786 = vsub.s32 0, %v785
        %v787 = vsel %vm781, %v786, %v785
        %vm788 = vcmp.lt.s32.totalorder %v594, 0
        %v789 = vsub.s32 0, %v594
        %v790 = vsel %vm788, %v789, %v594
        %v791 = vshrl.u32 %v790, 4
        %v792 = vand.u32 %v790, 15
        %v793 = vsub.s32 0, %v792
        %v794 = vsel %vm788, %v793, %v792
        %vm795 = vcmp.lt.s32.totalorder %v595, 0
        %v796 = vsub.s32 0, %v595
        %v797 = vsel %vm795, %v796, %v595
        %v798 = vshrl.u32 %v797, 4
        %v799 = vand.u32 %v797, 15
        %v800 = vsub.s32 0, %v799
        %v801 = vsel %vm795, %v800, %v799
        %vm802 = vcmp.lt.s32.totalorder %v596, 0
        %v803 = vsub.s32 0, %v596
        %v804 = vsel %vm802, %v803, %v596
        %v805 = vshrl.u32 %v804, 4
        %v806 = vand.u32 %v804, 15
        %v807 = vsub.s32 0, %v806
        %v808 = vsel %vm802, %v807, %v806
        %vm809 = vcmp.lt.s32.totalorder %v597, 0
        %v810 = vsub.s32 0, %v597
        %v811 = vsel %vm809, %v810, %v597
        %v812 = vshrl.u32 %v811, 4
        %v813 = vand.u32 %v811, 15
        %v814 = vsub.s32 0, %v813
        %v815 = vsel %vm809, %v814, %v813
        %vm816 = vcmp.lt.s32.totalorder %v598, 0
        %v817 = vsub.s32 0, %v598
        %v818 = vsel %vm816, %v817, %v598
        %v819 = vshrl.u32 %v818, 4
        %v820 = vand.u32 %v818, 15
        %v821 = vsub.s32 0, %v820
        %v822 = vsel %vm816, %v821, %v820
        %vm823 = vcmp.ne.s32.totalorder %v605, 0
        %vm824 = vcmp.ne.s32.totalorder %v612, 0
        %vm825 = vcmp.ne.s32.totalorder %v619, 0
        %vm826 = vcmp.ne.s32.totalorder %v626, 0
        %vm827 = vcmp.ne.s32.totalorder %v633, 0
        %vm828 = vcmp.ne.s32.totalorder %v640, 0
        %vm829 = vcmp.ne.s32.totalorder %v647, 0
        %vm830 = vcmp.ne.s32.totalorder %v654, 0
        %vm831 = vcmp.ne.s32.totalorder %v661, 0
        %vm832 = vcmp.ne.s32.totalorder %v668, 0
        %vm833 = vcmp.ne.s32.totalorder %v675, 0
        %vm834 = vcmp.ne.s32.totalorder %v682, 0
        %vm835 = vcmp.ne.s32.totalorder %v689, 0
        %vm836 = vcmp.ne.s32.totalorder %v696, 0
        %vm837 = vcmp.ne.s32.totalorder %v703, 0
        %vm838 = vcmp.ne.s32.totalorder %v710, 0
        %vm839 = vcmp.ne.s32.totalorder %v717, 0
        %vm840 = vcmp.ne.s32.totalorder %v724, 0
        %vm841 = vcmp.ne.s32.totalorder %v731, 0
        %vm842 = vcmp.ne.s32.totalorder %v738, 0
        %vm843 = vcmp.ne.s32.totalorder %v745, 0
        %vm844 = vcmp.ne.s32.totalorder %v752, 0
        %vm845 = vcmp.ne.s32.totalorder %v759, 0
        %vm846 = vcmp.ne.s32.totalorder %v766, 0
        %vm847 = vcmp.ne.s32.totalorder %v773, 0
        %vm848 = vcmp.ne.s32.totalorder %v780, 0
        %vm849 = vcmp.ne.s32.totalorder %v787, 0
        %vm850 = vcmp.ne.s32.totalorder %v794, 0
        %vm851 = vcmp.ne.s32.totalorder %v801, 0
        %vm852 = vcmp.ne.s32.totalorder %v808, 0
        %vm853 = vcmp.ne.s32.totalorder %v815, 0
        %vm854 = vcmp.ne.s32.totalorder %v822, 0
        %vm855 = vcmp.lt.s32.totalorder %v605, 0
        %vm856 = vcmp.lt.s32.totalorder %v612, 0
        %vm857 = vcmp.lt.s32.totalorder %v619, 0
        %vm858 = vcmp.lt.s32.totalorder %v626, 0
        %vm859 = vcmp.lt.s32.totalorder %v633, 0
        %vm860 = vcmp.lt.s32.totalorder %v640, 0
        %vm861 = vcmp.lt.s32.totalorder %v647, 0
        %vm862 = vcmp.lt.s32.totalorder %v654, 0
        %vm863 = vcmp.lt.s32.totalorder %v661, 0
        %vm864 = vcmp.lt.s32.totalorder %v668, 0
        %vm865 = vcmp.lt.s32.totalorder %v675, 0
        %vm866 = vcmp.lt.s32.totalorder %v682, 0
        %vm867 = vcmp.lt.s32.totalorder %v689, 0
        %vm868 = vcmp.lt.s32.totalorder %v696, 0
        %vm869 = vcmp.lt.s32.totalorder %v703, 0
        %vm870 = vcmp.lt.s32.totalorder %v710, 0
        %vm871 = vcmp.lt.s32.totalorder %v717, 0
        %vm872 = vcmp.lt.s32.totalorder %v724, 0
        %vm873 = vcmp.lt.s32.totalorder %v731, 0
        %vm874 = vcmp.lt.s32.totalorder %v738, 0
        %vm875 = vcmp.lt.s32.totalorder %v745, 0
        %vm876 = vcmp.lt.s32.totalorder %v752, 0
        %vm877 = vcmp.lt.s32.totalorder %v759, 0
        %vm878 = vcmp.lt.s32.totalorder %v766, 0
        %vm879 = vcmp.lt.s32.totalorder %v773, 0
        %vm880 = vcmp.lt.s32.totalorder %v780, 0
        %vm881 = vcmp.lt.s32.totalorder %v787, 0
        %vm882 = vcmp.lt.s32.totalorder %v794, 0
        %vm883 = vcmp.lt.s32.totalorder %v801, 0
        %vm884 = vcmp.lt.s32.totalorder %v808, 0
        %vm885 = vcmp.lt.s32.totalorder %v815, 0
        %vm886 = vcmp.lt.s32.totalorder %v822, 0
        %vm887 = vmand %vm855, %vm823
        %vm888 = vmand %vm856, %vm824
        %vm889 = vmand %vm857, %vm825
        %vm890 = vmand %vm858, %vm826
        %vm891 = vmand %vm859, %vm827
        %vm892 = vmand %vm860, %vm828
        %vm893 = vmand %vm861, %vm829
        %vm894 = vmand %vm862, %vm830
        %vm895 = vmand %vm863, %vm831
        %vm896 = vmand %vm864, %vm832
        %vm897 = vmand %vm865, %vm833
        %vm898 = vmand %vm866, %vm834
        %vm899 = vmand %vm867, %vm835
        %vm900 = vmand %vm868, %vm836
        %vm901 = vmand %vm869, %vm837
        %vm902 = vmand %vm870, %vm838
        %vm903 = vmand %vm871, %vm839
        %vm904 = vmand %vm872, %vm840
        %vm905 = vmand %vm873, %vm841
        %vm906 = vmand %vm874, %vm842
        %vm907 = vmand %vm875, %vm843
        %vm908 = vmand %vm876, %vm844
        %vm909 = vmand %vm877, %vm845
        %vm910 = vmand %vm878, %vm846
        %vm911 = vmand %vm879, %vm847
        %vm912 = vmand %vm880, %vm848
        %vm913 = vmand %vm881, %vm849
        %vm914 = vmand %vm882, %vm850
        %vm915 = vmand %vm883, %vm851
        %vm916 = vmand %vm884, %vm852
        %vm917 = vmand %vm885, %vm853
        %vm918 = vmand %vm886, %vm854
        %v919 = vadd.s32 %v605, 16
        %v920 = vadd.s32 %v612, 16
        %v921 = vadd.s32 %v619, 16
        %v922 = vadd.s32 %v626, 16
        %v923 = vadd.s32 %v633, 16
        %v924 = vadd.s32 %v640, 16
        %v925 = vadd.s32 %v647, 16
        %v926 = vadd.s32 %v654, 16
        %v927 = vadd.s32 %v661, 16
        %v928 = vadd.s32 %v668, 16
        %v929 = vadd.s32 %v675, 16
        %v930 = vadd.s32 %v682, 16
        %v931 = vadd.s32 %v689, 16
        %v932 = vadd.s32 %v696, 16
        %v933 = vadd.s32 %v703, 16
        %v934 = vadd.s32 %v710, 16
        %v935 = vadd.s32 %v717, 16
        %v936 = vadd.s32 %v724, 16
        %v937 = vadd.s32 %v731, 16
        %v938 = vadd.s32 %v738, 16
        %v939 = vadd.s32 %v745, 16
        %v940 = vadd.s32 %v752, 16
        %v941 = vadd.s32 %v759, 16
        %v942 = vadd.s32 %v766, 16
        %v943 = vadd.s32 %v773, 16
        %v944 = vadd.s32 %v780, 16
        %v945 = vadd.s32 %v787, 16
        %v946 = vadd.s32 %v794, 16
        %v947 = vadd.s32 %v801, 16
        %v948 = vadd.s32 %v808, 16
        %v949 = vadd.s32 %v815, 16
        %v950 = vadd.s32 %v822, 16
        %v951 = vsel %vm887, %v919, %v605
        %v952 = vsel %vm888, %v920, %v612
        %v953 = vsel %vm889, %v921, %v619
        %v954 = vsel %vm890, %v922, %v626
        %v955 = vsel %vm891, %v923, %v633
        %v956 = vsel %vm892, %v924, %v640
        %v957 = vsel %vm893, %v925, %v647
        %v958 = vsel %vm894, %v926, %v654
        %v959 = vsel %vm895, %v927, %v661
        %v960 = vsel %vm896, %v928, %v668
        %v961 = vsel %vm897, %v929, %v675
        %v962 = vsel %vm898, %v930, %v682
        %v963 = vsel %vm899, %v931, %v689
        %v964 = vsel %vm900, %v932, %v696
        %v965 = vsel %vm901, %v933, %v703
        %v966 = vsel %vm902, %v934, %v710
        %v967 = vsel %vm903, %v935, %v717
        %v968 = vsel %vm904, %v936, %v724
        %v969 = vsel %vm905, %v937, %v731
        %v970 = vsel %vm906, %v938, %v738
        %v971 = vsel %vm907, %v939, %v745
        %v972 = vsel %vm908, %v940, %v752
        %v973 = vsel %vm909, %v941, %v759
        %v974 = vsel %vm910, %v942, %v766
        %v975 = vsel %vm911, %v943, %v773
        %v976 = vsel %vm912, %v944, %v780
        %v977 = vsel %vm913, %v945, %v787
        %v978 = vsel %vm914, %v946, %v794
        %v979 = vsel %vm915, %v947, %v801
        %v980 = vsel %vm916, %v948, %v808
        %v981 = vsel %vm917, %v949, %v815
        %v982 = vsel %vm918, %v950, %v822
        %vm983 = vcmp.ne.s32.totalorder %v951, 0
        %vm984 = vcmp.ne.s32.totalorder %v952, 0
        %vm985 = vcmp.ne.s32.totalorder %v953, 0
        %vm986 = vcmp.ne.s32.totalorder %v954, 0
        %vm987 = vcmp.ne.s32.totalorder %v955, 0
        %vm988 = vcmp.ne.s32.totalorder %v956, 0
        %vm989 = vcmp.ne.s32.totalorder %v957, 0
        %vm990 = vcmp.ne.s32.totalorder %v958, 0
        %vm991 = vcmp.ne.s32.totalorder %v959, 0
        %vm992 = vcmp.ne.s32.totalorder %v960, 0
        %vm993 = vcmp.ne.s32.totalorder %v961, 0
        %vm994 = vcmp.ne.s32.totalorder %v962, 0
        %vm995 = vcmp.ne.s32.totalorder %v963, 0
        %vm996 = vcmp.ne.s32.totalorder %v964, 0
        %vm997 = vcmp.ne.s32.totalorder %v965, 0
        %vm998 = vcmp.ne.s32.totalorder %v966, 0
        %vm999 = vcmp.ne.s32.totalorder %v967, 0
        %vm1000 = vcmp.ne.s32.totalorder %v968, 0
        %vm1001 = vcmp.ne.s32.totalorder %v969, 0
        %vm1002 = vcmp.ne.s32.totalorder %v970, 0
        %vm1003 = vcmp.ne.s32.totalorder %v971, 0
        %vm1004 = vcmp.ne.s32.totalorder %v972, 0
        %vm1005 = vcmp.ne.s32.totalorder %v973, 0
        %vm1006 = vcmp.ne.s32.totalorder %v974, 0
        %vm1007 = vcmp.ne.s32.totalorder %v975, 0
        %vm1008 = vcmp.ne.s32.totalorder %v976, 0
        %vm1009 = vcmp.ne.s32.totalorder %v977, 0
        %vm1010 = vcmp.ne.s32.totalorder %v978, 0
        %vm1011 = vcmp.ne.s32.totalorder %v979, 0
        %vm1012 = vcmp.ne.s32.totalorder %v980, 0
        %vm1013 = vcmp.ne.s32.totalorder %v981, 0
        %vm1014 = vcmp.ne.s32.totalorder %v982, 0
        %v1015 = vsel %vm983, 1, 0
        %v1016 = vsel %vm984, 1, 0
        %v1017 = vsel %vm985, 1, 0
        %v1018 = vsel %vm986, 1, 0
        %v1019 = vsel %vm987, 1, 0
        %v1020 = vsel %vm988, 1, 0
        %v1021 = vsel %vm989, 1, 0
        %v1022 = vsel %vm990, 1, 0
        %v1023 = vsel %vm991, 1, 0
        %v1024 = vsel %vm992, 1, 0
        %v1025 = vsel %vm993, 1, 0
        %v1026 = vsel %vm994, 1, 0
        %v1027 = vsel %vm995, 1, 0
        %v1028 = vsel %vm996, 1, 0
        %v1029 = vsel %vm997, 1, 0
        %v1030 = vsel %vm998, 1, 0
        %v1031 = vsel %vm999, 1, 0
        %v1032 = vsel %vm1000, 1, 0
        %v1033 = vsel %vm1001, 1, 0
        %v1034 = vsel %vm1002, 1, 0
        %v1035 = vsel %vm1003, 1, 0
        %v1036 = vsel %vm1004, 1, 0
        %v1037 = vsel %vm1005, 1, 0
        %v1038 = vsel %vm1006, 1, 0
        %v1039 = vsel %vm1007, 1, 0
        %v1040 = vsel %vm1008, 1, 0
        %v1041 = vsel %vm1009, 1, 0
        %v1042 = vsel %vm1010, 1, 0
        %v1043 = vsel %vm1011, 1, 0
        %v1044 = vsel %vm1012, 1, 0
        %v1045 = vsel %vm1013, 1, 0
        %v1046 = vsel %vm1014, 1, 0
        %v1047 = vcvt.s32.f32 %v1015
        %v1048 = vcvt.s32.f32 %v1016
        %v1049 = vcvt.s32.f32 %v1017
        %v1050 = vcvt.s32.f32 %v1018
        %v1051 = vcvt.s32.f32 %v1019
        %v1052 = vcvt.s32.f32 %v1020
        %v1053 = vcvt.s32.f32 %v1021
        %v1054 = vcvt.s32.f32 %v1022
        %v1055 = vcvt.s32.f32 %v1023
        %v1056 = vcvt.s32.f32 %v1024
        %v1057 = vcvt.s32.f32 %v1025
        %v1058 = vcvt.s32.f32 %v1026
        %v1059 = vcvt.s32.f32 %v1027
        %v1060 = vcvt.s32.f32 %v1028
        %v1061 = vcvt.s32.f32 %v1029
        %v1062 = vcvt.s32.f32 %v1030
        %v1063 = vcvt.s32.f32 %v1031
        %v1064 = vcvt.s32.f32 %v1032
        %v1065 = vcvt.s32.f32 %v1033
        %v1066 = vcvt.s32.f32 %v1034
        %v1067 = vcvt.s32.f32 %v1035
        %v1068 = vcvt.s32.f32 %v1036
        %v1069 = vcvt.s32.f32 %v1037
        %v1070 = vcvt.s32.f32 %v1038
        %v1071 = vcvt.s32.f32 %v1039
        %v1072 = vcvt.s32.f32 %v1040
        %v1073 = vcvt.s32.f32 %v1041
        %v1074 = vcvt.s32.f32 %v1042
        %v1075 = vcvt.s32.f32 %v1043
        %v1076 = vcvt.s32.f32 %v1044
        %v1077 = vcvt.s32.f32 %v1045
        %v1078 = vcvt.s32.f32 %v1046
        %vm1079 = vcmp.ne.s32.totalorder %v951, 15
        %vm1080 = vcmp.ne.s32.totalorder %v952, 15
        %vm1081 = vcmp.ne.s32.totalorder %v953, 15
        %vm1082 = vcmp.ne.s32.totalorder %v954, 15
        %vm1083 = vcmp.ne.s32.totalorder %v955, 15
        %vm1084 = vcmp.ne.s32.totalorder %v956, 15
        %vm1085 = vcmp.ne.s32.totalorder %v957, 15
        %vm1086 = vcmp.ne.s32.totalorder %v958, 15
        %vm1087 = vcmp.ne.s32.totalorder %v959, 15
        %vm1088 = vcmp.ne.s32.totalorder %v960, 15
        %vm1089 = vcmp.ne.s32.totalorder %v961, 15
        %vm1090 = vcmp.ne.s32.totalorder %v962, 15
        %vm1091 = vcmp.ne.s32.totalorder %v963, 15
        %vm1092 = vcmp.ne.s32.totalorder %v964, 15
        %vm1093 = vcmp.ne.s32.totalorder %v965, 15
        %vm1094 = vcmp.ne.s32.totalorder %v966, 15
        %vm1095 = vcmp.ne.s32.totalorder %v967, 15
        %vm1096 = vcmp.ne.s32.totalorder %v968, 15
        %vm1097 = vcmp.ne.s32.totalorder %v969, 15
        %vm1098 = vcmp.ne.s32.totalorder %v970, 15
        %vm1099 = vcmp.ne.s32.totalorder %v971, 15
        %vm1100 = vcmp.ne.s32.totalorder %v972, 15
        %vm1101 = vcmp.ne.s32.totalorder %v973, 15
        %vm1102 = vcmp.ne.s32.totalorder %v974, 15
        %vm1103 = vcmp.ne.s32.totalorder %v975, 15
        %vm1104 = vcmp.ne.s32.totalorder %v976, 15
        %vm1105 = vcmp.ne.s32.totalorder %v977, 15
        %vm1106 = vcmp.ne.s32.totalorder %v978, 15
        %vm1107 = vcmp.ne.s32.totalorder %v979, 15
        %vm1108 = vcmp.ne.s32.totalorder %v980, 15
        %vm1109 = vcmp.ne.s32.totalorder %v981, 15
        %vm1110 = vcmp.ne.s32.totalorder %v982, 15
        %v1111 = vsel %vm1079, 1, 0
        %v1112 = vsel %vm1080, 1, 0
        %v1113 = vsel %vm1081, 1, 0
        %v1114 = vsel %vm1082, 1, 0
        %v1115 = vsel %vm1083, 1, 0
        %v1116 = vsel %vm1084, 1, 0
        %v1117 = vsel %vm1085, 1, 0
        %v1118 = vsel %vm1086, 1, 0
        %v1119 = vsel %vm1087, 1, 0
        %v1120 = vsel %vm1088, 1, 0
        %v1121 = vsel %vm1089, 1, 0
        %v1122 = vsel %vm1090, 1, 0
        %v1123 = vsel %vm1091, 1, 0
        %v1124 = vsel %vm1092, 1, 0
        %v1125 = vsel %vm1093, 1, 0
        %v1126 = vsel %vm1094, 1, 0
        %v1127 = vsel %vm1095, 1, 0
        %v1128 = vsel %vm1096, 1, 0
        %v1129 = vsel %vm1097, 1, 0
        %v1130 = vsel %vm1098, 1, 0
        %v1131 = vsel %vm1099, 1, 0
        %v1132 = vsel %vm1100, 1, 0
        %v1133 = vsel %vm1101, 1, 0
        %v1134 = vsel %vm1102, 1, 0
        %v1135 = vsel %vm1103, 1, 0
        %v1136 = vsel %vm1104, 1, 0
        %v1137 = vsel %vm1105, 1, 0
        %v1138 = vsel %vm1106, 1, 0
        %v1139 = vsel %vm1107, 1, 0
        %v1140 = vsel %vm1108, 1, 0
        %v1141 = vsel %vm1109, 1, 0
        %v1142 = vsel %vm1110, 1, 0
        %v1143 = vcvt.s32.f32 %v1111
        %v1144 = vcvt.s32.f32 %v1112
        %v1145 = vcvt.s32.f32 %v1113
        %v1146 = vcvt.s32.f32 %v1114
        %v1147 = vcvt.s32.f32 %v1115
        %v1148 = vcvt.s32.f32 %v1116
        %v1149 = vcvt.s32.f32 %v1117
        %v1150 = vcvt.s32.f32 %v1118
        %v1151 = vcvt.s32.f32 %v1119
        %v1152 = vcvt.s32.f32 %v1120
        %v1153 = vcvt.s32.f32 %v1121
        %v1154 = vcvt.s32.f32 %v1122
        %v1155 = vcvt.s32.f32 %v1123
        %v1156 = vcvt.s32.f32 %v1124
        %v1157 = vcvt.s32.f32 %v1125
        %v1158 = vcvt.s32.f32 %v1126
        %v1159 = vcvt.s32.f32 %v1127
        %v1160 = vcvt.s32.f32 %v1128
        %v1161 = vcvt.s32.f32 %v1129
        %v1162 = vcvt.s32.f32 %v1130
        %v1163 = vcvt.s32.f32 %v1131
        %v1164 = vcvt.s32.f32 %v1132
        %v1165 = vcvt.s32.f32 %v1133
        %v1166 = vcvt.s32.f32 %v1134
        %v1167 = vcvt.s32.f32 %v1135
        %v1168 = vcvt.s32.f32 %v1136
        %v1169 = vcvt.s32.f32 %v1137
        %v1170 = vcvt.s32.f32 %v1138
        %v1171 = vcvt.s32.f32 %v1139
        %v1172 = vcvt.s32.f32 %v1140
        %v1173 = vcvt.s32.f32 %v1141
        %v1174 = vcvt.s32.f32 %v1142
        %v1175 = vld [vmem:[%s471] sm:$0xff]
        %v1176 = vld [vmem:[%s471 + $0x8] sm:$0xff]
        %v1177 = vld [vmem:[%s471 + $0x10] sm:$0xff]
        %v1178 = vld [vmem:[%s471 + $0x18] sm:$0xff]
        %v1179 = vld [vmem:[%s471 + $0x20] sm:$0xff]
        %v1180 = vld [vmem:[%s471 + $0x28] sm:$0xff]
        %v1181 = vld [vmem:[%s471 + $0x30] sm:$0xff]
        %v1182 = vld [vmem:[%s471 + $0x38] sm:$0xff]
        %v1183 = vld [vmem:[%s471 + $0x40] sm:$0xff]
        %v1184 = vld [vmem:[%s471 + $0x48] sm:$0xff]
        %v1185 = vld [vmem:[%s471 + $0x50] sm:$0xff]
        %v1186 = vld [vmem:[%s471 + $0x58] sm:$0xff]
        %v1187 = vld [vmem:[%s471 + $0x60] sm:$0xff]
        %v1188 = vld [vmem:[%s471 + $0x68] sm:$0xff]
        %v1189 = vld [vmem:[%s471 + $0x70] sm:$0xff]
        %v1190 = vld [vmem:[%s471 + $0x78] sm:$0xff]
        %v1191 = vld [vmem:[%s471 + $0x80] sm:$0xff]
        %v1192 = vld [vmem:[%s471 + $0x88] sm:$0xff]
        %v1193 = vld [vmem:[%s471 + $0x90] sm:$0xff]
        %v1194 = vld [vmem:[%s471 + $0x98] sm:$0xff]
        %v1195 = vld [vmem:[%s471 + $0xa0] sm:$0xff]
        %v1196 = vld [vmem:[%s471 + $0xa8] sm:$0xff]
        %v1197 = vld [vmem:[%s471 + $0xb0] sm:$0xff]
        %v1198 = vld [vmem:[%s471 + $0xb8] sm:$0xff]
        %v1199 = vld [vmem:[%s471 + $0xc0] sm:$0xff]
        %v1200 = vld [vmem:[%s471 + $0xc8] sm:$0xff]
        %v1201 = vld [vmem:[%s471 + $0xd0] sm:$0xff]
        %v1202 = vld [vmem:[%s471 + $0xd8] sm:$0xff]
        %v1203 = vld [vmem:[%s471 + $0xe0] sm:$0xff]
        %v1204 = vld [vmem:[%s471 + $0xe8] sm:$0xff]
        %v1205 = vld [vmem:[%s471 + $0xf0] sm:$0xff]
        %v1206 = vld [vmem:[%s471 + $0xf8] sm:$0xff]
        %v1207 = vld [vmem:[%s471 + $0x100] sm:$0xff]
        %v1208 = vld [vmem:[%s471 + $0x108] sm:$0xff]
        %v1209 = vld [vmem:[%s471 + $0x110] sm:$0xff]
        %v1210 = vld [vmem:[%s471 + $0x118] sm:$0xff]
        %v1211 = vld [vmem:[%s471 + $0x120] sm:$0xff]
        %v1212 = vld [vmem:[%s471 + $0x128] sm:$0xff]
        %v1213 = vld [vmem:[%s471 + $0x130] sm:$0xff]
        %v1214 = vld [vmem:[%s471 + $0x138] sm:$0xff]
        %v1215 = vld [vmem:[%s471 + $0x140] sm:$0xff]
        %v1216 = vld [vmem:[%s471 + $0x148] sm:$0xff]
        %v1217 = vld [vmem:[%s471 + $0x150] sm:$0xff]
        %v1218 = vld [vmem:[%s471 + $0x158] sm:$0xff]
        %v1219 = vld [vmem:[%s471 + $0x160] sm:$0xff]
        %v1220 = vld [vmem:[%s471 + $0x168] sm:$0xff]
        %v1221 = vld [vmem:[%s471 + $0x170] sm:$0xff]
        %v1222 = vld [vmem:[%s471 + $0x178] sm:$0xff]
        %v1223 = vld [vmem:[%s471 + $0x180] sm:$0xff]
        %v1224 = vld [vmem:[%s471 + $0x188] sm:$0xff]
        %v1225 = vld [vmem:[%s471 + $0x190] sm:$0xff]
        %v1226 = vld [vmem:[%s471 + $0x198] sm:$0xff]
        %v1227 = vld [vmem:[%s471 + $0x1a0] sm:$0xff]
        %v1228 = vld [vmem:[%s471 + $0x1a8] sm:$0xff]
        %v1229 = vld [vmem:[%s471 + $0x1b0] sm:$0xff]
        %v1230 = vld [vmem:[%s471 + $0x1b8] sm:$0xff]
        %v1231 = vld [vmem:[%s471 + $0x1c0] sm:$0xff]
        %v1232 = vld [vmem:[%s471 + $0x1c8] sm:$0xff]
        %v1233 = vld [vmem:[%s471 + $0x1d0] sm:$0xff]
        %v1234 = vld [vmem:[%s471 + $0x1d8] sm:$0xff]
        %v1235 = vld [vmem:[%s471 + $0x1e0] sm:$0xff]
        %v1236 = vld [vmem:[%s471 + $0x1e8] sm:$0xff]
        %v1237 = vld [vmem:[%s471 + $0x1f0] sm:$0xff]
        %v1238 = vld [vmem:[%s471 + $0x1f8] sm:$0xff]
        %v1239 = vld [vmem:[%s471 + $0x200] sm:$0xff]
        %v1240 = vld [vmem:[%s471 + $0x208] sm:$0xff]
        %v1241 = vld [vmem:[%s471 + $0x210] sm:$0xff]
        %v1242 = vld [vmem:[%s471 + $0x218] sm:$0xff]
        %v1243 = vld [vmem:[%s471 + $0x220] sm:$0xff]
        %v1244 = vld [vmem:[%s471 + $0x228] sm:$0xff]
        %v1245 = vld [vmem:[%s471 + $0x230] sm:$0xff]
        %v1246 = vld [vmem:[%s471 + $0x238] sm:$0xff]
        %v1247 = vld [vmem:[%s471 + $0x240] sm:$0xff]
        %v1248 = vld [vmem:[%s471 + $0x248] sm:$0xff]
        %v1249 = vld [vmem:[%s471 + $0x250] sm:$0xff]
        %v1250 = vld [vmem:[%s471 + $0x258] sm:$0xff]
        %v1251 = vld [vmem:[%s471 + $0x260] sm:$0xff]
        %v1252 = vld [vmem:[%s471 + $0x268] sm:$0xff]
        %v1253 = vld [vmem:[%s471 + $0x270] sm:$0xff]
        %v1254 = vld [vmem:[%s471 + $0x278] sm:$0xff]
        %v1255 = vld [vmem:[%s471 + $0x280] sm:$0xff]
        %v1256 = vld [vmem:[%s471 + $0x288] sm:$0xff]
        %v1257 = vld [vmem:[%s471 + $0x290] sm:$0xff]
        %v1258 = vld [vmem:[%s471 + $0x298] sm:$0xff]
        %v1259 = vld [vmem:[%s471 + $0x2a0] sm:$0xff]
        %v1260 = vld [vmem:[%s471 + $0x2a8] sm:$0xff]
        %v1261 = vld [vmem:[%s471 + $0x2b0] sm:$0xff]
        %v1262 = vld [vmem:[%s471 + $0x2b8] sm:$0xff]
        %v1263 = vld [vmem:[%s471 + $0x2c0] sm:$0xff]
        %v1264 = vld [vmem:[%s471 + $0x2c8] sm:$0xff]
        %v1265 = vld [vmem:[%s471 + $0x2d0] sm:$0xff]
        %v1266 = vld [vmem:[%s471 + $0x2d8] sm:$0xff]
        %v1267 = vld [vmem:[%s471 + $0x2e0] sm:$0xff]
        %v1268 = vld [vmem:[%s471 + $0x2e8] sm:$0xff]
        %v1269 = vld [vmem:[%s471 + $0x2f0] sm:$0xff]
        %v1270 = vld [vmem:[%s471 + $0x2f8] sm:$0xff]
        %v1271 = vld [vmem:[%s471 + $0x300] sm:$0xff]
        %v1272 = vld [vmem:[%s471 + $0x308] sm:$0xff]
        %v1273 = vld [vmem:[%s471 + $0x310] sm:$0xff]
        %v1274 = vld [vmem:[%s471 + $0x318] sm:$0xff]
        %v1275 = vld [vmem:[%s471 + $0x320] sm:$0xff]
        %v1276 = vld [vmem:[%s471 + $0x328] sm:$0xff]
        %v1277 = vld [vmem:[%s471 + $0x330] sm:$0xff]
        %v1278 = vld [vmem:[%s471 + $0x338] sm:$0xff]
        %v1279 = vld [vmem:[%s471 + $0x340] sm:$0xff]
        %v1280 = vld [vmem:[%s471 + $0x348] sm:$0xff]
        %v1281 = vld [vmem:[%s471 + $0x350] sm:$0xff]
        %v1282 = vld [vmem:[%s471 + $0x358] sm:$0xff]
        %v1283 = vld [vmem:[%s471 + $0x360] sm:$0xff]
        %v1284 = vld [vmem:[%s471 + $0x368] sm:$0xff]
        %v1285 = vld [vmem:[%s471 + $0x370] sm:$0xff]
        %v1286 = vld [vmem:[%s471 + $0x378] sm:$0xff]
        %v1287 = vld [vmem:[%s471 + $0x380] sm:$0xff]
        %v1288 = vld [vmem:[%s471 + $0x388] sm:$0xff]
        %v1289 = vld [vmem:[%s471 + $0x390] sm:$0xff]
        %v1290 = vld [vmem:[%s471 + $0x398] sm:$0xff]
        %v1291 = vld [vmem:[%s471 + $0x3a0] sm:$0xff]
        %v1292 = vld [vmem:[%s471 + $0x3a8] sm:$0xff]
        %v1293 = vld [vmem:[%s471 + $0x3b0] sm:$0xff]
        %v1294 = vld [vmem:[%s471 + $0x3b8] sm:$0xff]
        %v1295 = vld [vmem:[%s471 + $0x3c0] sm:$0xff]
        %v1296 = vld [vmem:[%s471 + $0x3c8] sm:$0xff]
        %v1297 = vld [vmem:[%s471 + $0x3d0] sm:$0xff]
        %v1298 = vld [vmem:[%s471 + $0x3d8] sm:$0xff]
        %v1299 = vld [vmem:[%s471 + $0x3e0] sm:$0xff]
        %v1300 = vld [vmem:[%s471 + $0x3e8] sm:$0xff]
        %v1301 = vld [vmem:[%s471 + $0x3f0] sm:$0xff]
        %v1302 = vld [vmem:[%s471 + $0x3f8] sm:$0xff]
        %v1303 = vld [vmem:[#allocation12] sm:$0xff]
        %v1304 = vld [vmem:[#allocation12 + $0x8] sm:$0xff]
        %v1305 = vld [vmem:[#allocation12 + $0x10] sm:$0xff]
        %v1306 = vld [vmem:[#allocation12 + $0x18] sm:$0xff]
        %v1307 = vld [vmem:[#allocation12 + $0x20] sm:$0xff]
        %v1308 = vld [vmem:[#allocation12 + $0x28] sm:$0xff]
        %v1309 = vld [vmem:[#allocation12 + $0x30] sm:$0xff]
        %v1310 = vld [vmem:[#allocation12 + $0x38] sm:$0xff]
        %v1311 = vld [vmem:[#allocation12 + $0x40] sm:$0xff]
        %v1312 = vld [vmem:[#allocation12 + $0x48] sm:$0xff]
        %v1313 = vld [vmem:[#allocation12 + $0x50] sm:$0xff]
        %v1314 = vld [vmem:[#allocation12 + $0x58] sm:$0xff]
        %v1315 = vld [vmem:[#allocation12 + $0x60] sm:$0xff]
        %v1316 = vld [vmem:[#allocation12 + $0x68] sm:$0xff]
        %v1317 = vld [vmem:[#allocation12 + $0x70] sm:$0xff]
        %v1318 = vld [vmem:[#allocation12 + $0x78] sm:$0xff]
        %v1319 = vld [vmem:[#allocation12 + $0x80] sm:$0xff]
        %v1320 = vld [vmem:[#allocation12 + $0x88] sm:$0xff]
        %v1321 = vld [vmem:[#allocation12 + $0x90] sm:$0xff]
        %v1322 = vld [vmem:[#allocation12 + $0x98] sm:$0xff]
        %v1323 = vld [vmem:[#allocation12 + $0xa0] sm:$0xff]
        %v1324 = vld [vmem:[#allocation12 + $0xa8] sm:$0xff]
        %v1325 = vld [vmem:[#allocation12 + $0xb0] sm:$0xff]
        %v1326 = vld [vmem:[#allocation12 + $0xb8] sm:$0xff]
        %v1327 = vld [vmem:[#allocation12 + $0xc0] sm:$0xff]
        %v1328 = vld [vmem:[#allocation12 + $0xc8] sm:$0xff]
        %v1329 = vld [vmem:[#allocation12 + $0xd0] sm:$0xff]
        %v1330 = vld [vmem:[#allocation12 + $0xd8] sm:$0xff]
        %v1331 = vld [vmem:[#allocation12 + $0xe0] sm:$0xff]
        %v1332 = vld [vmem:[#allocation12 + $0xe8] sm:$0xff]
        %v1333 = vld [vmem:[#allocation12 + $0xf0] sm:$0xff]
        %v1334 = vld [vmem:[#allocation12 + $0xf8] sm:$0xff]
        %v1335 = vld [vmem:[#allocation12 + $0x100] sm:$0xff]
        %v1336 = vld [vmem:[#allocation12 + $0x108] sm:$0xff]
        %v1337 = vld [vmem:[#allocation12 + $0x110] sm:$0xff]
        %v1338 = vld [vmem:[#allocation12 + $0x118] sm:$0xff]
        %v1339 = vld [vmem:[#allocation12 + $0x120] sm:$0xff]
        %v1340 = vld [vmem:[#allocation12 + $0x128] sm:$0xff]
        %v1341 = vld [vmem:[#allocation12 + $0x130] sm:$0xff]
        %v1342 = vld [vmem:[#allocation12 + $0x138] sm:$0xff]
        %v1343 = vld [vmem:[#allocation12 + $0x140] sm:$0xff]
        %v1344 = vld [vmem:[#allocation12 + $0x148] sm:$0xff]
        %v1345 = vld [vmem:[#allocation12 + $0x150] sm:$0xff]
        %v1346 = vld [vmem:[#allocation12 + $0x158] sm:$0xff]
        %v1347 = vld [vmem:[#allocation12 + $0x160] sm:$0xff]
        %v1348 = vld [vmem:[#allocation12 + $0x168] sm:$0xff]
        %v1349 = vld [vmem:[#allocation12 + $0x170] sm:$0xff]
        %v1350 = vld [vmem:[#allocation12 + $0x178] sm:$0xff]
        %v1351 = vld [vmem:[#allocation12 + $0x180] sm:$0xff]
        %v1352 = vld [vmem:[#allocation12 + $0x188] sm:$0xff]
        %v1353 = vld [vmem:[#allocation12 + $0x190] sm:$0xff]
        %v1354 = vld [vmem:[#allocation12 + $0x198] sm:$0xff]
        %v1355 = vld [vmem:[#allocation12 + $0x1a0] sm:$0xff]
        %v1356 = vld [vmem:[#allocation12 + $0x1a8] sm:$0xff]
        %v1357 = vld [vmem:[#allocation12 + $0x1b0] sm:$0xff]
        %v1358 = vld [vmem:[#allocation12 + $0x1b8] sm:$0xff]
        %v1359 = vld [vmem:[#allocation12 + $0x1c0] sm:$0xff]
        %v1360 = vld [vmem:[#allocation12 + $0x1c8] sm:$0xff]
        %v1361 = vld [vmem:[#allocation12 + $0x1d0] sm:$0xff]
        %v1362 = vld [vmem:[#allocation12 + $0x1d8] sm:$0xff]
        %v1363 = vld [vmem:[#allocation12 + $0x1e0] sm:$0xff]
        %v1364 = vld [vmem:[#allocation12 + $0x1e8] sm:$0xff]
        %v1365 = vld [vmem:[#allocation12 + $0x1f0] sm:$0xff]
        %v1366 = vld [vmem:[#allocation12 + $0x1f8] sm:$0xff]
        %v1367 = vld [vmem:[%s6] sm:$0x1]
        %v1369 = vlaneseq
        %v1370 = vshrl.u32 %v1369, 7
        %v1371 = vsub.s32 0, %v1370
        %v1372 = vrot.slane %v1367, %v1371
        %1374 = vmatprep.subr.mxu0 0.0
        %1375 = vmatpush1.msra.mxu0 %v1303
        %1376 = vmatprep.subr.mxu0 0.0
        %1377 = vmatpush1.msra.mxu0 %v1304
        %1378 = vmatprep.subr.mxu0 0.0
        %1379 = vmatpush1.msra.mxu0 %v1305
        %1380 = vmatprep.subr.mxu0 0.0
        %1381 = vmatpush1.msra.mxu0 %v1306
        %1382 = vmatprep.subr.mxu0 0.0
        %1383 = vmatpush1.msra.mxu0 %v1307
        %1384 = vmatprep.subr.mxu0 0.0
        %1385 = vmatpush1.msra.mxu0 %v1308
        %1386 = vmatprep.subr.mxu0 0.0
        %1387 = vmatpush1.msra.mxu0 %v1309
        %1388 = vmatprep.subr.mxu0 0.0
        %1389 = vmatpush1.msra.mxu0 %v1310
        %1390 = vmatprep.subr.mxu0 0.0
        %1391 = vmatpush1.msra.mxu0 %v1311
        %1392 = vmatprep.subr.mxu0 0.0
        %1393 = vmatpush1.msra.mxu0 %v1312
        %1394 = vmatprep.subr.mxu0 0.0
        %1395 = vmatpush1.msra.mxu0 %v1313
        %1396 = vmatprep.subr.mxu0 0.0
        %1397 = vmatpush1.msra.mxu0 %v1314
        %1398 = vmatprep.subr.mxu0 0.0
        %1399 = vmatpush1.msra.mxu0 %v1315
        %1400 = vmatprep.subr.mxu0 0.0
        %1401 = vmatpush1.msra.mxu0 %v1316
        %1402 = vmatprep.subr.mxu0 0.0
        %1403 = vmatpush1.msra.mxu0 %v1317
        %1404 = vmatprep.subr.mxu0 0.0
        %1405 = vmatpush1.msra.mxu0 %v1318
        %1406 = vmatprep.subr.mxu0 0.0
        %1407 = vmatpush1.msra.mxu0 %v1319
        %1408 = vmatprep.subr.mxu0 0.0
        %1409 = vmatpush1.msra.mxu0 %v1320
        %1410 = vmatprep.subr.mxu0 0.0
        %1411 = vmatpush1.msra.mxu0 %v1321
        %1412 = vmatprep.subr.mxu0 0.0
        %1413 = vmatpush1.msra.mxu0 %v1322
        %1414 = vmatprep.subr.mxu0 0.0
        %1415 = vmatpush1.msra.mxu0 %v1323
        %1416 = vmatprep.subr.mxu0 0.0
        %1417 = vmatpush1.msra.mxu0 %v1324
        %1418 = vmatprep.subr.mxu0 0.0
        %1419 = vmatpush1.msra.mxu0 %v1325
        %1420 = vmatprep.subr.mxu0 0.0
        %1421 = vmatpush1.msra.mxu0 %v1326
        %1422 = vmatprep.subr.mxu0 0.0
        %1423 = vmatpush1.msra.mxu0 %v1327
        %1424 = vmatprep.subr.mxu0 0.0
        %1425 = vmatpush1.msra.mxu0 %v1328
        %1426 = vmatprep.subr.mxu0 0.0
        %1427 = vmatpush1.msra.mxu0 %v1329
        %1428 = vmatprep.subr.mxu0 0.0
        %1429 = vmatpush1.msra.mxu0 %v1330
        %1430 = vmatprep.subr.mxu0 0.0
        %1431 = vmatpush1.msra.mxu0 %v1331
        %1432 = vmatprep.subr.mxu0 0.0
        %1433 = vmatpush1.msra.mxu0 %v1332
        %1434 = vmatprep.subr.mxu0 0.0
        %1435 = vmatpush1.msra.mxu0 %v1333
        %1436 = vmatprep.subr.mxu0 0.0
        %1437 = vmatpush1.msra.mxu0 %v1334
        %1438 = vmatprep.mubr.f32.mxu0 %v1176
        %1439 = vmatmul.mubr.f32.gmra.mrb[0].mxu0 %v1175
        %v1440 = vpop.f32.mrb[0].mxu0
        %v1441 = vadd.f32 %v1372, %v1440
        %v1442 = vpop.f32.mrb[0].mxu0
        %1443 = vmatprep.mubr.f32.mxu0 %v1180
        %1444 = vmatmul.mubr.f32.gmra.mrb[0].mxu0 %v1179
        %v1445 = vpop.f32.mrb[0].mxu0
        %v1446 = vadd.f32 %v1372, %v1445
        %v1447 = vpop.f32.mrb[0].mxu0
        %1448 = vmatprep.mubr.f32.mxu0 %v1184
        %1449 = vmatmul.mubr.f32.gmra.mrb[0].mxu0 %v1183
        %v1450 = vpop.f32.mrb[0].mxu0
        %v1451 = vadd.f32 %v1372, %v1450
        %v1452 = vpop.f32.mrb[0].mxu0
        %1453 = vmatprep.mubr.f32.mxu0 %v1188
        %1454 = vmatmul.mubr.f32.gmra.mrb[0].mxu0 %v1187
        %v1455 = vpop.f32.mrb[0].mxu0
        %v1456 = vadd.f32 %v1372, %v1455
        %v1457 = vpop.f32.mrb[0].mxu0
        %1458 = vmatprep.mubr.f32.mxu0 %v1192
        %1459 = vmatmul.mubr.f32.gmra.mrb[0].mxu0 %v1191
        %v1460 = vpop.f32.mrb[0].mxu0
        %v1461 = vadd.f32 %v1372, %v1460
        %v1462 = vpop.f32.mrb[0].mxu0
        %1463 = vmatprep.mubr.f32.mxu0 %v1196
        %1464 = vmatmul.mubr.f32.gmra.mrb[0].mxu0 %v1195
        %v1465 = vpop.f32.mrb[0].mxu0
        %v1466 = vadd.f32 %v1372, %v1465
        %v1467 = vpop.f32.mrb[0].mxu0
        %1468 = vmatprep.mubr.f32.mxu0 %v1200
        %1469 = vmatmul.mubr.f32.gmra.mrb[0].mxu0 %v1199
        %v1470 = vpop.f32.mrb[0].mxu0
        %v1471 = vadd.f32 %v1372, %v1470
        %v1472 = vpop.f32.mrb[0].mxu0
        %1473 = vmatprep.mubr.f32.mxu0 %v1204
        %1474 = vmatmul.mubr.f32.gmra.mrb[0].mxu0 %v1203
        %v1475 = vpop.f32.mrb[0].mxu0
        %v1476 = vadd.f32 %v1372, %v1475
        %v1477 = vpop.f32.mrb[0].mxu0
        %1478 = vmatprep.mubr.f32.mxu0 %v1208
        %1479 = vmatmul.mubr.f32.gmra.mrb[0].mxu0 %v1207
        %v1480 = vpop.f32.mrb[0].mxu0
        %v1481 = vadd.f32 %v1372, %v1480
        %v1482 = vpop.f32.mrb[0].mxu0
        %1483 = vmatprep.mubr.f32.mxu0 %v1212
        %1484 = vmatmul.mubr.f32.gmra.mrb[0].mxu0 %v1211
        %v1485 = vpop.f32.mrb[0].mxu0
        %v1486 = vadd.f32 %v1372, %v1485
        %v1487 = vpop.f32.mrb[0].mxu0
        %1488 = vmatprep.mubr.f32.mxu0 %v1216
        %1489 = vmatmul.mubr.f32.gmra.mrb[0].mxu0 %v1215
        %v1490 = vpop.f32.mrb[0].mxu0
        %v1491 = vadd.f32 %v1372, %v1490
        %v1492 = vpop.f32.mrb[0].mxu0
        %1493 = vmatprep.mubr.f32.mxu0 %v1220
        %1494 = vmatmul.mubr.f32.gmra.mrb[0].mxu0 %v1219
        %v1495 = vpop.f32.mrb[0].mxu0
        %v1496 = vadd.f32 %v1372, %v1495
        %v1497 = vpop.f32.mrb[0].mxu0
        %1498 = vmatprep.mubr.f32.mxu0 %v1224
        %1499 = vmatmul.mubr.f32.gmra.mrb[0].mxu0 %v1223
        %v1500 = vpop.f32.mrb[0].mxu0
        %v1501 = vadd.f32 %v1372, %v1500
        %v1502 = vpop.f32.mrb[0].mxu0
        %1503 = vmatprep.mubr.f32.mxu0 %v1228
        %1504 = vmatmul.mubr.f32.gmra.mrb[0].mxu0 %v1227
        %v1505 = vpop.f32.mrb[0].mxu0
        %v1506 = vadd.f32 %v1372, %v1505
        %v1507 = vpop.f32.mrb[0].mxu0
        %1508 = vmatprep.mubr.f32.mxu0 %v1232
        %1509 = vmatmul.mubr.f32.gmra.mrb[0].mxu0 %v1231
        %v1510 = vpop.f32.mrb[0].mxu0
        %v1511 = vadd.f32 %v1372, %v1510
        %v1512 = vpop.f32.mrb[0].mxu0
        %1513 = vmatprep.mubr.f32.mxu0 %v1236
        %1514 = vmatmul.mubr.f32.gmra.mrb[0].mxu0 %v1235
        %v1515 = vpop.f32.mrb[0].mxu0
        %v1516 = vadd.f32 %v1372, %v1515
        %v1517 = vpop.f32.mrb[0].mxu0
        %1518 = vmatprep.mubr.f32.mxu0 %v1240
        %1519 = vmatmul.mubr.f32.gmra.mrb[0].mxu0 %v1239
        %v1520 = vpop.f32.mrb[0].mxu0
        %v1521 = vadd.f32 %v1372, %v1520
        %v1522 = vpop.f32.mrb[0].mxu0
        %1523 = vmatprep.mubr.f32.mxu0 %v1244
        %1524 = vmatmul.mubr.f32.gmra.mrb[0].mxu0 %v1243
        %v1525 = vpop.f32.mrb[0].mxu0
        %v1526 = vadd.f32 %v1372, %v1525
        %v1527 = vpop.f32.mrb[0].mxu0
        %1528 = vmatprep.mubr.f32.mxu0 %v1248
        %1529 = vmatmul.mubr.f32.gmra.mrb[0].mxu0 %v1247
        %v1530 = vpop.f32.mrb[0].mxu0
        %v1531 = vadd.f32 %v1372, %v1530
        %v1532 = vpop.f32.mrb[0].mxu0
        %1533 = vmatprep.mubr.f32.mxu0 %v1252
        %1534 = vmatmul.mubr.f32.gmra.mrb[0].mxu0 %v1251
        %v1535 = vpop.f32.mrb[0].mxu0
        %v1536 = vadd.f32 %v1372, %v1535
        %v1537 = vpop.f32.mrb[0].mxu0
        %1538 = vmatprep.mubr.f32.mxu0 %v1256
        %1539 = vmatmul.mubr.f32.gmra.mrb[0].mxu0 %v1255
        %v1540 = vpop.f32.mrb[0].mxu0
        %v1541 = vadd.f32 %v1372, %v1540
        %v1542 = vpop.f32.mrb[0].mxu0
        %1543 = vmatprep.mubr.f32.mxu0 %v1260
        %1544 = vmatmul.mubr.f32.gmra.mrb[0].mxu0 %v1259
        %v1545 = vpop.f32.mrb[0].mxu0
        %v1546 = vadd.f32 %v1372, %v1545
        %v1547 = vpop.f32.mrb[0].mxu0
        %1548 = vmatprep.mubr.f32.mxu0 %v1264
        %1549 = vmatmul.mubr.f32.gmra.mrb[0].mxu0 %v1263
        %v1550 = vpop.f32.mrb[0].mxu0
        %v1551 = vadd.f32 %v1372, %v1550
        %v1552 = vpop.f32.mrb[0].mxu0
        %1553 = vmatprep.mubr.f32.mxu0 %v1268
        %1554 = vmatmul.mubr.f32.gmra.mrb[0].mxu0 %v1267
        %v1555 = vpop.f32.mrb[0].mxu0
        %v1556 = vadd.f32 %v1372, %v1555
        %v1557 = vpop.f32.mrb[0].mxu0
        %1558 = vmatprep.mubr.f32.mxu0 %v1272
        %1559 = vmatmul.mubr.f32.gmra.mrb[0].mxu0 %v1271
        %v1560 = vpop.f32.mrb[0].mxu0
        %v1561 = vadd.f32 %v1372, %v1560
        %v1562 = vpop.f32.mrb[0].mxu0
        %1563 = vmatprep.mubr.f32.mxu0 %v1276
        %1564 = vmatmul.mubr.f32.gmra.mrb[0].mxu0 %v1275
        %v1565 = vpop.f32.mrb[0].mxu0
        %v1566 = vadd.f32 %v1372, %v1565
        %v1567 = vpop.f32.mrb[0].mxu0
        %1568 = vmatprep.mubr.f32.mxu0 %v1280
        %1569 = vmatmul.mubr.f32.gmra.mrb[0].mxu0 %v1279
        %v1570 = vpop.f32.mrb[0].mxu0
        %v1571 = vadd.f32 %v1372, %v1570
        %v1572 = vpop.f32.mrb[0].mxu0
        %1573 = vmatprep.mubr.f32.mxu0 %v1284
        %1574 = vmatmul.mubr.f32.gmra.mrb[0].mxu0 %v1283
        %v1575 = vpop.f32.mrb[0].mxu0
        %v1576 = vadd.f32 %v1372, %v1575
        %v1577 = vpop.f32.mrb[0].mxu0
        %1578 = vmatprep.mubr.f32.mxu0 %v1288
        %1579 = vmatmul.mubr.f32.gmra.mrb[0].mxu0 %v1287
        %v1580 = vpop.f32.mrb[0].mxu0
        %v1581 = vadd.f32 %v1372, %v1580
        %v1582 = vpop.f32.mrb[0].mxu0
        %1583 = vmatprep.mubr.f32.mxu0 %v1292
        %1584 = vmatmul.mubr.f32.gmra.mrb[0].mxu0 %v1291
        %v1585 = vpop.f32.mrb[0].mxu0
        %v1586 = vadd.f32 %v1372, %v1585
        %v1587 = vpop.f32.mrb[0].mxu0
        %1588 = vmatprep.mubr.f32.mxu0 %v1296
        %1589 = vmatmul.mubr.f32.gmra.mrb[0].mxu0 %v1295
        %v1590 = vpop.f32.mrb[0].mxu0
        %v1591 = vadd.f32 %v1372, %v1590
        %v1592 = vpop.f32.mrb[0].mxu0
        %1593 = vmatprep.mubr.f32.mxu0 %v1300
        %1594 = vmatmul.mubr.f32.gmra.mrb[0].mxu0 %v1299
        %v1595 = vpop.f32.mrb[0].mxu0
        %v1596 = vadd.f32 %v1372, %v1595
        %v1597 = vpop.f32.mrb[0].mxu0
        %1598 = vdwg.mxu0
        %1599 = vmatprep.subr.mxu0 0.0
        %1600 = vmatpush1.msra.mxu0 %v1335
        %1601 = vmatprep.subr.mxu0 0.0
        %1602 = vmatpush1.msra.mxu0 %v1336
        %1603 = vmatprep.subr.mxu0 0.0
        %1604 = vmatpush1.msra.mxu0 %v1337
        %1605 = vmatprep.subr.mxu0 0.0
        %1606 = vmatpush1.msra.mxu0 %v1338
        %1607 = vmatprep.subr.mxu0 0.0
        %1608 = vmatpush1.msra.mxu0 %v1339
        %1609 = vmatprep.subr.mxu0 0.0
        %1610 = vmatpush1.msra.mxu0 %v1340
        %1611 = vmatprep.subr.mxu0 0.0
        %1612 = vmatpush1.msra.mxu0 %v1341
        %1613 = vmatprep.subr.mxu0 0.0
        %1614 = vmatpush1.msra.mxu0 %v1342
        %1615 = vmatprep.subr.mxu0 0.0
        %1616 = vmatpush1.msra.mxu0 %v1343
        %1617 = vmatprep.subr.mxu0 0.0
        %1618 = vmatpush1.msra.mxu0 %v1344
        %1619 = vmatprep.subr.mxu0 0.0
        %1620 = vmatpush1.msra.mxu0 %v1345
        %1621 = vmatprep.subr.mxu0 0.0
        %1622 = vmatpush1.msra.mxu0 %v1346
        %1623 = vmatprep.subr.mxu0 0.0
        %1624 = vmatpush1.msra.mxu0 %v1347
        %1625 = vmatprep.subr.mxu0 0.0
        %1626 = vmatpush1.msra.mxu0 %v1348
        %1627 = vmatprep.subr.mxu0 0.0
        %1628 = vmatpush1.msra.mxu0 %v1349
        %1629 = vmatprep.subr.mxu0 0.0
        %1630 = vmatpush1.msra.mxu0 %v1350
        %1631 = vmatprep.subr.mxu0 0.0
        %1632 = vmatpush1.msra.mxu0 %v1351
        %1633 = vmatprep.subr.mxu0 0.0
        %1634 = vmatpush1.msra.mxu0 %v1352
        %1635 = vmatprep.subr.mxu0 0.0
        %1636 = vmatpush1.msra.mxu0 %v1353
        %1637 = vmatprep.subr.mxu0 0.0
        %1638 = vmatpush1.msra.mxu0 %v1354
        %1639 = vmatprep.subr.mxu0 0.0
        %1640 = vmatpush1.msra.mxu0 %v1355
        %1641 = vmatprep.subr.mxu0 0.0
        %1642 = vmatpush1.msra.mxu0 %v1356
        %1643 = vmatprep.subr.mxu0 0.0
        %1644 = vmatpush1.msra.mxu0 %v1357
        %1645 = vmatprep.subr.mxu0 0.0
        %1646 = vmatpush1.msra.mxu0 %v1358
        %1647 = vmatprep.subr.mxu0 0.0
        %1648 = vmatpush1.msra.mxu0 %v1359
        %1649 = vmatprep.subr.mxu0 0.0
        %1650 = vmatpush1.msra.mxu0 %v1360
        %1651 = vmatprep.subr.mxu0 0.0
        %1652 = vmatpush1.msra.mxu0 %v1361
        %1653 = vmatprep.subr.mxu0 0.0
        %1654 = vmatpush1.msra.mxu0 %v1362
        %1655 = vmatprep.subr.mxu0 0.0
        %1656 = vmatpush1.msra.mxu0 %v1363
        %1657 = vmatprep.subr.mxu0 0.0
        %1658 = vmatpush1.msra.mxu0 %v1364
        %1659 = vmatprep.subr.mxu0 0.0
        %1660 = vmatpush1.msra.mxu0 %v1365
        %1661 = vmatprep.subr.mxu0 0.0
        %1662 = vmatpush1.msra.mxu0 %v1366
        %1663 = vmatprep.mubr.f32.mxu0 %v1178
        %1664 = vmatmul.mubr.f32.gmra.mrb[0].mxu0 %v1177
        %v1665 = vpop.f32.mrb[0].mxu0
        %v1666 = vadd.f32 %v1441, %v1665
        %v1667 = vpop.f32.mrb[0].mxu0
        %1668 = vmatprep.mubr.f32.mxu0 %v1182
        %1669 = vmatmul.mubr.f32.gmra.mrb[0].mxu0 %v1181
        %v1670 = vpop.f32.mrb[0].mxu0
        %v1671 = vadd.f32 %v1446, %v1670
        %v1672 = vpop.f32.mrb[0].mxu0
        %1673 = vmatprep.mubr.f32.mxu0 %v1186
        %1674 = vmatmul.mubr.f32.gmra.mrb[0].mxu0 %v1185
        %v1675 = vpop.f32.mrb[0].mxu0
        %v1676 = vadd.f32 %v1451, %v1675
        %v1677 = vpop.f32.mrb[0].mxu0
        %1678 = vmatprep.mubr.f32.mxu0 %v1190
        %1679 = vmatmul.mubr.f32.gmra.mrb[0].mxu0 %v1189
        %v1680 = vpop.f32.mrb[0].mxu0
        %v1681 = vadd.f32 %v1456, %v1680
        %v1682 = vpop.f32.mrb[0].mxu0
        %1683 = vmatprep.mubr.f32.mxu0 %v1194
        %1684 = vmatmul.mubr.f32.gmra.mrb[0].mxu0 %v1193
        %v1685 = vpop.f32.mrb[0].mxu0
        %v1686 = vadd.f32 %v1461, %v1685
        %v1687 = vpop.f32.mrb[0].mxu0
        %1688 = vmatprep.mubr.f32.mxu0 %v1198
        %1689 = vmatmul.mubr.f32.gmra.mrb[0].mxu0 %v1197
        %v1690 = vpop.f32.mrb[0].mxu0
        %v1691 = vadd.f32 %v1466, %v1690
        %v1692 = vpop.f32.mrb[0].mxu0
        %1693 = vmatprep.mubr.f32.mxu0 %v1202
        %1694 = vmatmul.mubr.f32.gmra.mrb[0].mxu0 %v1201
        %v1695 = vpop.f32.mrb[0].mxu0
        %v1696 = vadd.f32 %v1471, %v1695
        %v1697 = vpop.f32.mrb[0].mxu0
        %1698 = vmatprep.mubr.f32.mxu0 %v1206
        %1699 = vmatmul.mubr.f32.gmra.mrb[0].mxu0 %v1205
        %v1700 = vpop.f32.mrb[0].mxu0
        %v1701 = vadd.f32 %v1476, %v1700
        %v1702 = vpop.f32.mrb[0].mxu0
        %1703 = vmatprep.mubr.f32.mxu0 %v1210
        %1704 = vmatmul.mubr.f32.gmra.mrb[0].mxu0 %v1209
        %v1705 = vpop.f32.mrb[0].mxu0
        %v1706 = vadd.f32 %v1481, %v1705
        %v1707 = vpop.f32.mrb[0].mxu0
        %1708 = vmatprep.mubr.f32.mxu0 %v1214
        %1709 = vmatmul.mubr.f32.gmra.mrb[0].mxu0 %v1213
        %v1710 = vpop.f32.mrb[0].mxu0
        %v1711 = vadd.f32 %v1486, %v1710
        %v1712 = vpop.f32.mrb[0].mxu0
        %1713 = vmatprep.mubr.f32.mxu0 %v1218
        %1714 = vmatmul.mubr.f32.gmra.mrb[0].mxu0 %v1217
        %v1715 = vpop.f32.mrb[0].mxu0
        %v1716 = vadd.f32 %v1491, %v1715
        %v1717 = vpop.f32.mrb[0].mxu0
        %1718 = vmatprep.mubr.f32.mxu0 %v1222
        %1719 = vmatmul.mubr.f32.gmra.mrb[0].mxu0 %v1221
        %v1720 = vpop.f32.mrb[0].mxu0
        %v1721 = vadd.f32 %v1496, %v1720
        %v1722 = vpop.f32.mrb[0].mxu0
        %1723 = vmatprep.mubr.f32.mxu0 %v1226
        %1724 = vmatmul.mubr.f32.gmra.mrb[0].mxu0 %v1225
        %v1725 = vpop.f32.mrb[0].mxu0
        %v1726 = vadd.f32 %v1501, %v1725
        %v1727 = vpop.f32.mrb[0].mxu0
        %1728 = vmatprep.mubr.f32.mxu0 %v1230
        %1729 = vmatmul.mubr.f32.gmra.mrb[0].mxu0 %v1229
        %v1730 = vpop.f32.mrb[0].mxu0
        %v1731 = vadd.f32 %v1506, %v1730
        %v1732 = vpop.f32.mrb[0].mxu0
        %1733 = vmatprep.mubr.f32.mxu0 %v1234
        %1734 = vmatmul.mubr.f32.gmra.mrb[0].mxu0 %v1233
        %v1735 = vpop.f32.mrb[0].mxu0
        %v1736 = vadd.f32 %v1511, %v1735
        %v1737 = vpop.f32.mrb[0].mxu0
        %1738 = vmatprep.mubr.f32.mxu0 %v1238
        %1739 = vmatmul.mubr.f32.gmra.mrb[0].mxu0 %v1237
        %v1740 = vpop.f32.mrb[0].mxu0
        %v1741 = vadd.f32 %v1516, %v1740
        %v1742 = vpop.f32.mrb[0].mxu0
        %1743 = vmatprep.mubr.f32.mxu0 %v1242
        %1744 = vmatmul.mubr.f32.gmra.mrb[0].mxu0 %v1241
        %v1745 = vpop.f32.mrb[0].mxu0
        %v1746 = vadd.f32 %v1521, %v1745
        %v1747 = vpop.f32.mrb[0].mxu0
        %1748 = vmatprep.mubr.f32.mxu0 %v1246
        %1749 = vmatmul.mubr.f32.gmra.mrb[0].mxu0 %v1245
        %v1750 = vpop.f32.mrb[0].mxu0
        %v1751 = vadd.f32 %v1526, %v1750
        %v1752 = vpop.f32.mrb[0].mxu0
        %1753 = vmatprep.mubr.f32.mxu0 %v1250
        %1754 = vmatmul.mubr.f32.gmra.mrb[0].mxu0 %v1249
        %v1755 = vpop.f32.mrb[0].mxu0
        %v1756 = vadd.f32 %v1531, %v1755
        %v1757 = vpop.f32.mrb[0].mxu0
        %1758 = vmatprep.mubr.f32.mxu0 %v1254
        %1759 = vmatmul.mubr.f32.gmra.mrb[0].mxu0 %v1253
        %v1760 = vpop.f32.mrb[0].mxu0
        %v1761 = vadd.f32 %v1536, %v1760
        %v1762 = vpop.f32.mrb[0].mxu0
        %1763 = vmatprep.mubr.f32.mxu0 %v1258
        %1764 = vmatmul.mubr.f32.gmra.mrb[0].mxu0 %v1257
        %v1765 = vpop.f32.mrb[0].mxu0
        %v1766 = vadd.f32 %v1541, %v1765
        %v1767 = vpop.f32.mrb[0].mxu0
        %1768 = vmatprep.mubr.f32.mxu0 %v1262
        %1769 = vmatmul.mubr.f32.gmra.mrb[0].mxu0 %v1261
        %v1770 = vpop.f32.mrb[0].mxu0
        %v1771 = vadd.f32 %v1546, %v1770
        %v1772 = vpop.f32.mrb[0].mxu0
        %1773 = vmatprep.mubr.f32.mxu0 %v1266
        %1774 = vmatmul.mubr.f32.gmra.mrb[0].mxu0 %v1265
        %v1775 = vpop.f32.mrb[0].mxu0
        %v1776 = vadd.f32 %v1551, %v1775
        %v1777 = vpop.f32.mrb[0].mxu0
        %1778 = vmatprep.mubr.f32.mxu0 %v1270
        %1779 = vmatmul.mubr.f32.gmra.mrb[0].mxu0 %v1269
        %v1780 = vpop.f32.mrb[0].mxu0
        %v1781 = vadd.f32 %v1556, %v1780
        %v1782 = vpop.f32.mrb[0].mxu0
        %1783 = vmatprep.mubr.f32.mxu0 %v1274
        %1784 = vmatmul.mubr.f32.gmra.mrb[0].mxu0 %v1273
        %v1785 = vpop.f32.mrb[0].mxu0
        %v1786 = vadd.f32 %v1561, %v1785
        %v1787 = vpop.f32.mrb[0].mxu0
        %1788 = vmatprep.mubr.f32.mxu0 %v1278
        %1789 = vmatmul.mubr.f32.gmra.mrb[0].mxu0 %v1277
        %v1790 = vpop.f32.mrb[0].mxu0
        %v1791 = vadd.f32 %v1566, %v1790
        %v1792 = vpop.f32.mrb[0].mxu0
        %1793 = vmatprep.mubr.f32.mxu0 %v1282
        %1794 = vmatmul.mubr.f32.gmra.mrb[0].mxu0 %v1281
        %v1795 = vpop.f32.mrb[0].mxu0
        %v1796 = vadd.f32 %v1571, %v1795
        %v1797 = vpop.f32.mrb[0].mxu0
        %1798 = vmatprep.mubr.f32.mxu0 %v1286
        %1799 = vmatmul.mubr.f32.gmra.mrb[0].mxu0 %v1285
        %v1800 = vpop.f32.mrb[0].mxu0
        %v1801 = vadd.f32 %v1576, %v1800
        %v1802 = vpop.f32.mrb[0].mxu0
        %1803 = vmatprep.mubr.f32.mxu0 %v1290
        %1804 = vmatmul.mubr.f32.gmra.mrb[0].mxu0 %v1289
        %v1805 = vpop.f32.mrb[0].mxu0
        %v1806 = vadd.f32 %v1581, %v1805
        %v1807 = vpop.f32.mrb[0].mxu0
        %1808 = vmatprep.mubr.f32.mxu0 %v1294
        %1809 = vmatmul.mubr.f32.gmra.mrb[0].mxu0 %v1293
        %v1810 = vpop.f32.mrb[0].mxu0
        %v1811 = vadd.f32 %v1586, %v1810
        %v1812 = vpop.f32.mrb[0].mxu0
        %1813 = vmatprep.mubr.f32.mxu0 %v1298
        %1814 = vmatmul.mubr.f32.gmra.mrb[0].mxu0 %v1297
        %v1815 = vpop.f32.mrb[0].mxu0
        %v1816 = vadd.f32 %v1591, %v1815
        %v1817 = vpop.f32.mrb[0].mxu0
        %1818 = vmatprep.mubr.f32.mxu0 %v1302
        %1819 = vmatmul.mubr.f32.gmra.mrb[0].mxu0 %v1301
        %v1820 = vpop.f32.mrb[0].mxu0
        %v1821 = vadd.f32 %v1596, %v1820
        %v1822 = vpop.f32.mrb[0].mxu0
        %1823 = vdwg.mxu0
        %v1824 = vmax.f32 %v1666, 0.0
        %v1825 = vmax.f32 %v1671, 0.0
        %v1826 = vmax.f32 %v1676, 0.0
        %v1827 = vmax.f32 %v1681, 0.0
        %v1828 = vmax.f32 %v1686, 0.0
        %v1829 = vmax.f32 %v1691, 0.0
        %v1830 = vmax.f32 %v1696, 0.0
        %v1831 = vmax.f32 %v1701, 0.0
        %v1832 = vmax.f32 %v1706, 0.0
        %v1833 = vmax.f32 %v1711, 0.0
        %v1834 = vmax.f32 %v1716, 0.0
        %v1835 = vmax.f32 %v1721, 0.0
        %v1836 = vmax.f32 %v1726, 0.0
        %v1837 = vmax.f32 %v1731, 0.0
        %v1838 = vmax.f32 %v1736, 0.0
        %v1839 = vmax.f32 %v1741, 0.0
        %v1840 = vmax.f32 %v1746, 0.0
        %v1841 = vmax.f32 %v1751, 0.0
        %v1842 = vmax.f32 %v1756, 0.0
        %v1843 = vmax.f32 %v1761, 0.0
        %v1844 = vmax.f32 %v1766, 0.0
        %v1845 = vmax.f32 %v1771, 0.0
        %v1846 = vmax.f32 %v1776, 0.0
        %v1847 = vmax.f32 %v1781, 0.0
        %v1848 = vmax.f32 %v1786, 0.0
        %v1849 = vmax.f32 %v1791, 0.0
        %v1850 = vmax.f32 %v1796, 0.0
        %v1851 = vmax.f32 %v1801, 0.0
        %v1852 = vmax.f32 %v1806, 0.0
        %v1853 = vmax.f32 %v1811, 0.0
        %v1854 = vmax.f32 %v1816, 0.0
        %v1855 = vmax.f32 %v1821, 0.0
        %1856 = vst [vmem:[#allocation2 + $0x20] sm:$0xff] %v1824
        %1857 = vst [vmem:[#allocation2 + $0x28] sm:$0xff] %v1825
        %1858 = vst [vmem:[#allocation2 + $0x30] sm:$0xff] %v1826
        %1859 = vst [vmem:[#allocation2 + $0x38] sm:$0xff] %v1827
        %1860 = vst [vmem:[#allocation2 + $0x40] sm:$0xff] %v1828
        %1861 = vst [vmem:[#allocation2 + $0x48] sm:$0xff] %v1829
        %1862 = vst [vmem:[#allocation2 + $0x50] sm:$0xff] %v1830
        %1863 = vst [vmem:[#allocation2 + $0x58] sm:$0xff] %v1831
        %1864 = vst [vmem:[#allocation2 + $0x60] sm:$0xff] %v1832
        %1865 = vst [vmem:[#allocation2 + $0x68] sm:$0xff] %v1833
        %1866 = vst [vmem:[#allocation2 + $0x70] sm:$0xff] %v1834
        %1867 = vst [vmem:[#allocation2 + $0x78] sm:$0xff] %v1835
        %1868 = vst [vmem:[#allocation2 + $0x80] sm:$0xff] %v1836
        %1869 = vst [vmem:[#allocation2 + $0x88] sm:$0xff] %v1837
        %1870 = vst [vmem:[#allocation2 + $0x90] sm:$0xff] %v1838
        %1871 = vst [vmem:[#allocation2 + $0x98] sm:$0xff] %v1839
        %1872 = vst [vmem:[#allocation2 + $0xa0] sm:$0xff] %v1840
        %1873 = vst [vmem:[#allocation2 + $0xa8] sm:$0xff] %v1841
        %1874 = vst [vmem:[#allocation2 + $0xb0] sm:$0xff] %v1842
        %1875 = vst [vmem:[#allocation2 + $0xb8] sm:$0xff] %v1843
        %1876 = vst [vmem:[#allocation2 + $0xc0] sm:$0xff] %v1844
        %1877 = vst [vmem:[#allocation2 + $0xc8] sm:$0xff] %v1845
        %1878 = vst [vmem:[#allocation2 + $0xd0] sm:$0xff] %v1846
        %1879 = vst [vmem:[#allocation2 + $0xd8] sm:$0xff] %v1847
        %1880 = vst [vmem:[#allocation2 + $0xe0] sm:$0xff] %v1848
        %1881 = vst [vmem:[#allocation2 + $0xe8] sm:$0xff] %v1849
        %1882 = vst [vmem:[#allocation2 + $0xf0] sm:$0xff] %v1850
        %1883 = vst [vmem:[#allocation2 + $0xf8] sm:$0xff] %v1851
        %1884 = vst [vmem:[#allocation2 + $0x100] sm:$0xff] %v1852
        %1885 = vst [vmem:[#allocation2 + $0x108] sm:$0xff] %v1853
        %1886 = vst [vmem:[#allocation2 + $0x110] sm:$0xff] %v1854
        %1887 = vst [vmem:[#allocation2 + $0x118] sm:$0xff] %v1855
        %p1888 = scmp.gt.s32.totalorder %s41, 0
        // Predicated region
        $region89: #{tpu_custom_call.1} parent=59 // pred_check
          %p1889 = pneg %p1888
        $region90: #{tpu_custom_call.1} parent=59 // pred_check_branch
          %1891 = sbr.rel (%p1889) target = $region92
        $region91: #{tpu_custom_call.1} parent=59 // pred_region
          %v1892 = vld [vmem:[%s480] sm:$0xff]
          %v1893 = vld [vmem:[%s480 + $0x8] sm:$0xff]
          %v1894 = vld [vmem:[%s480 + $0x10] sm:$0xff]
          %v1895 = vld [vmem:[%s480 + $0x18] sm:$0xff]
          %v1896 = vld [vmem:[%s480 + $0x20] sm:$0xff]
          %v1897 = vld [vmem:[%s480 + $0x28] sm:$0xff]
          %v1898 = vld [vmem:[%s480 + $0x30] sm:$0xff]
          %v1899 = vld [vmem:[%s480 + $0x38] sm:$0xff]
          %v1900 = vld [vmem:[#allocation12] sm:$0xff]
          %v1901 = vld [vmem:[#allocation12 + $0x8] sm:$0xff]
          %v1902 = vld [vmem:[#allocation12 + $0x10] sm:$0xff]
          %v1903 = vld [vmem:[#allocation12 + $0x18] sm:$0xff]
          %v1904 = vld [vmem:[#allocation12 + $0x20] sm:$0xff]
          %v1905 = vld [vmem:[#allocation12 + $0x28] sm:$0xff]
          %v1906 = vld [vmem:[#allocation12 + $0x30] sm:$0xff]
          %v1907 = vld [vmem:[#allocation12 + $0x38] sm:$0xff]
          %v1908 = vld [vmem:[#allocation12 + $0x40] sm:$0xff]
          %v1909 = vld [vmem:[#allocation12 + $0x48] sm:$0xff]
          %v1910 = vld [vmem:[#allocation12 + $0x50] sm:$0xff]
          %v1911 = vld [vmem:[#allocation12 + $0x58] sm:$0xff]
          %v1912 = vld [vmem:[#allocation12 + $0x60] sm:$0xff]
          %v1913 = vld [vmem:[#allocation12 + $0x68] sm:$0xff]
          %v1914 = vld [vmem:[#allocation12 + $0x70] sm:$0xff]
          %v1915 = vld [vmem:[#allocation12 + $0x78] sm:$0xff]
          %v1916 = vld [vmem:[#allocation12 + $0x80] sm:$0xff]
          %v1917 = vld [vmem:[#allocation12 + $0x88] sm:$0xff]
          %v1918 = vld [vmem:[#allocation12 + $0x90] sm:$0xff]
          %v1919 = vld [vmem:[#allocation12 + $0x98] sm:$0xff]
          %v1920 = vld [vmem:[#allocation12 + $0xa0] sm:$0xff]
          %v1921 = vld [vmem:[#allocation12 + $0xa8] sm:$0xff]
          %v1922 = vld [vmem:[#allocation12 + $0xb0] sm:$0xff]
          %v1923 = vld [vmem:[#allocation12 + $0xb8] sm:$0xff]
          %v1924 = vld [vmem:[#allocation12 + $0xc0] sm:$0xff]
          %v1925 = vld [vmem:[#allocation12 + $0xc8] sm:$0xff]
          %v1926 = vld [vmem:[#allocation12 + $0xd0] sm:$0xff]
          %v1927 = vld [vmem:[#allocation12 + $0xd8] sm:$0xff]
          %v1928 = vld [vmem:[#allocation12 + $0xe0] sm:$0xff]
          %v1929 = vld [vmem:[#allocation12 + $0xe8] sm:$0xff]
          %v1930 = vld [vmem:[#allocation12 + $0xf0] sm:$0xff]
          %v1931 = vld [vmem:[#allocation12 + $0xf8] sm:$0xff]
          %v1932 = vld [vmem:[#allocation12 + $0x100] sm:$0xff]
          %v1933 = vld [vmem:[#allocation12 + $0x108] sm:$0xff]
          %v1934 = vld [vmem:[#allocation12 + $0x110] sm:$0xff]
          %v1935 = vld [vmem:[#allocation12 + $0x118] sm:$0xff]
          %v1936 = vld [vmem:[#allocation12 + $0x120] sm:$0xff]
          %v1937 = vld [vmem:[#allocation12 + $0x128] sm:$0xff]
          %v1938 = vld [vmem:[#allocation12 + $0x130] sm:$0xff]
          %v1939 = vld [vmem:[#allocation12 + $0x138] sm:$0xff]
          %v1940 = vld [vmem:[#allocation12 + $0x140] sm:$0xff]
          %v1941 = vld [vmem:[#allocation12 + $0x148] sm:$0xff]
          %v1942 = vld [vmem:[#allocation12 + $0x150] sm:$0xff]
          %v1943 = vld [vmem:[#allocation12 + $0x158] sm:$0xff]
          %v1944 = vld [vmem:[#allocation12 + $0x160] sm:$0xff]
          %v1945 = vld [vmem:[#allocation12 + $0x168] sm:$0xff]
          %v1946 = vld [vmem:[#allocation12 + $0x170] sm:$0xff]
          %v1947 = vld [vmem:[#allocation12 + $0x178] sm:$0xff]
          %v1948 = vld [vmem:[#allocation12 + $0x180] sm:$0xff]
          %v1949 = vld [vmem:[#allocation12 + $0x188] sm:$0xff]
          %v1950 = vld [vmem:[#allocation12 + $0x190] sm:$0xff]
          %v1951 = vld [vmem:[#allocation12 + $0x198] sm:$0xff]
          %v1952 = vld [vmem:[#allocation12 + $0x1a0] sm:$0xff]
          %v1953 = vld [vmem:[#allocation12 + $0x1a8] sm:$0xff]
          %v1954 = vld [vmem:[#allocation12 + $0x1b0] sm:$0xff]
          %v1955 = vld [vmem:[#allocation12 + $0x1b8] sm:$0xff]
          %v1956 = vld [vmem:[#allocation12 + $0x1c0] sm:$0xff]
          %v1957 = vld [vmem:[#allocation12 + $0x1c8] sm:$0xff]
          %v1958 = vld [vmem:[#allocation12 + $0x1d0] sm:$0xff]
          %v1959 = vld [vmem:[#allocation12 + $0x1d8] sm:$0xff]
          %v1960 = vld [vmem:[#allocation12 + $0x1e0] sm:$0xff]
          %v1961 = vld [vmem:[#allocation12 + $0x1e8] sm:$0xff]
          %v1962 = vld [vmem:[#allocation12 + $0x1f0] sm:$0xff]
          %v1963 = vld [vmem:[#allocation12 + $0x1f8] sm:$0xff]
          %v1964 = vld [vmem:[%s6] sm:$0x1]
          %v1966 = vlaneseq
          %v1967 = vshrl.u32 %v1966, 7
          %v1968 = vsub.s32 0, %v1967
          %v1969 = vrot.slane %v1964, %v1968
          %1971 = vmatprep.subr.mxu0 0.0
          %1972 = vmatpush1.msra.mxu0 %v1900
          %1973 = vmatprep.subr.mxu0 0.0
          %1974 = vmatpush1.msra.mxu0 %v1901
          %1975 = vmatprep.subr.mxu0 0.0
          %1976 = vmatpush1.msra.mxu0 %v1902
          %1977 = vmatprep.subr.mxu0 0.0
          %1978 = vmatpush1.msra.mxu0 %v1903
          %1979 = vmatprep.subr.mxu0 0.0
          %1980 = vmatpush1.msra.mxu0 %v1904
          %1981 = vmatprep.subr.mxu0 0.0
          %1982 = vmatpush1.msra.mxu0 %v1905
          %1983 = vmatprep.subr.mxu0 0.0
          %1984 = vmatpush1.msra.mxu0 %v1906
          %1985 = vmatprep.subr.mxu0 0.0
          %1986 = vmatpush1.msra.mxu0 %v1907
          %1987 = vmatprep.subr.mxu0 0.0
          %1988 = vmatpush1.msra.mxu0 %v1908
          %1989 = vmatprep.subr.mxu0 0.0
          %1990 = vmatpush1.msra.mxu0 %v1909
          %1991 = vmatprep.subr.mxu0 0.0
          %1992 = vmatpush1.msra.mxu0 %v1910
          %1993 = vmatprep.subr.mxu0 0.0
          %1994 = vmatpush1.msra.mxu0 %v1911
          %1995 = vmatprep.subr.mxu0 0.0
          %1996 = vmatpush1.msra.mxu0 %v1912
          %1997 = vmatprep.subr.mxu0 0.0
          %1998 = vmatpush1.msra.mxu0 %v1913
          %1999 = vmatprep.subr.mxu0 0.0
          %2000 = vmatpush1.msra.mxu0 %v1914
          %2001 = vmatprep.subr.mxu0 0.0
          %2002 = vmatpush1.msra.mxu0 %v1915
          %2003 = vmatprep.subr.mxu0 0.0
          %2004 = vmatpush1.msra.mxu0 %v1916
          %2005 = vmatprep.subr.mxu0 0.0
          %2006 = vmatpush1.msra.mxu0 %v1917
          %2007 = vmatprep.subr.mxu0 0.0
          %2008 = vmatpush1.msra.mxu0 %v1918
          %2009 = vmatprep.subr.mxu0 0.0
          %2010 = vmatpush1.msra.mxu0 %v1919
          %2011 = vmatprep.subr.mxu0 0.0
          %2012 = vmatpush1.msra.mxu0 %v1920
          %2013 = vmatprep.subr.mxu0 0.0
          %2014 = vmatpush1.msra.mxu0 %v1921
          %2015 = vmatprep.subr.mxu0 0.0
          %2016 = vmatpush1.msra.mxu0 %v1922
          %2017 = vmatprep.subr.mxu0 0.0
          %2018 = vmatpush1.msra.mxu0 %v1923
          %2019 = vmatprep.subr.mxu0 0.0
          %2020 = vmatpush1.msra.mxu0 %v1924
          %2021 = vmatprep.subr.mxu0 0.0
          %2022 = vmatpush1.msra.mxu0 %v1925
          %2023 = vmatprep.subr.mxu0 0.0
          %2024 = vmatpush1.msra.mxu0 %v1926
          %2025 = vmatprep.subr.mxu0 0.0
          %2026 = vmatpush1.msra.mxu0 %v1927
          %2027 = vmatprep.subr.mxu0 0.0
          %2028 = vmatpush1.msra.mxu0 %v1928
          %2029 = vmatprep.subr.mxu0 0.0
          %2030 = vmatpush1.msra.mxu0 %v1929
          %2031 = vmatprep.subr.mxu0 0.0
          %2032 = vmatpush1.msra.mxu0 %v1930
          %2033 = vmatprep.subr.mxu0 0.0
          %2034 = vmatpush1.msra.mxu0 %v1931
          %2035 = vmatprep.mubr.f32.mxu0 %v1893
          %2036 = vmatmul.mubr.f32.gmra.mrb[0].mxu0 %v1892
          %v2037 = vpop.f32.mrb[0].mxu0
          %v2038 = vadd.f32 %v1969, %v2037
          %v2039 = vpop.f32.mrb[0].mxu0
          %2040 = vmatprep.mubr.f32.mxu0 %v1897
          %2041 = vmatmul.mubr.f32.gmra.mrb[0].mxu0 %v1896
          %v2042 = vpop.f32.mrb[0].mxu0
          %v2043 = vadd.f32 %v1969, %v2042
          %v2044 = vpop.f32.mrb[0].mxu0
          %2045 = vdwg.mxu0
          %2046 = vmatprep.subr.mxu0 0.0
          %2047 = vmatpush1.msra.mxu0 %v1932
          %2048 = vmatprep.subr.mxu0 0.0
          %2049 = vmatpush1.msra.mxu0 %v1933
          %2050 = vmatprep.subr.mxu0 0.0
          %2051 = vmatpush1.msra.mxu0 %v1934
          %2052 = vmatprep.subr.mxu0 0.0
          %2053 = vmatpush1.msra.mxu0 %v1935
          %2054 = vmatprep.subr.mxu0 0.0
          %2055 = vmatpush1.msra.mxu0 %v1936
          %2056 = vmatprep.subr.mxu0 0.0
          %2057 = vmatpush1.msra.mxu0 %v1937
          %2058 = vmatprep.subr.mxu0 0.0
          %2059 = vmatpush1.msra.mxu0 %v1938
          %2060 = vmatprep.subr.mxu0 0.0
          %2061 = vmatpush1.msra.mxu0 %v1939
          %2062 = vmatprep.subr.mxu0 0.0
          %2063 = vmatpush1.msra.mxu0 %v1940
          %2064 = vmatprep.subr.mxu0 0.0
          %2065 = vmatpush1.msra.mxu0 %v1941
          %2066 = vmatprep.subr.mxu0 0.0
          %2067 = vmatpush1.msra.mxu0 %v1942
          %2068 = vmatprep.subr.mxu0 0.0
          %2069 = vmatpush1.msra.mxu0 %v1943
          %2070 = vmatprep.subr.mxu0 0.0
          %2071 = vmatpush1.msra.mxu0 %v1944
          %2072 = vmatprep.subr.mxu0 0.0
          %2073 = vmatpush1.msra.mxu0 %v1945
          %2074 = vmatprep.subr.mxu0 0.0
          %2075 = vmatpush1.msra.mxu0 %v1946
          %2076 = vmatprep.subr.mxu0 0.0
          %2077 = vmatpush1.msra.mxu0 %v1947
          %2078 = vmatprep.subr.mxu0 0.0
          %2079 = vmatpush1.msra.mxu0 %v1948
          %2080 = vmatprep.subr.mxu0 0.0
          %2081 = vmatpush1.msra.mxu0 %v1949
          %2082 = vmatprep.subr.mxu0 0.0
          %2083 = vmatpush1.msra.mxu0 %v1950
          %2084 = vmatprep.subr.mxu0 0.0
          %2085 = vmatpush1.msra.mxu0 %v1951
          %2086 = vmatprep.subr.mxu0 0.0
          %2087 = vmatpush1.msra.mxu0 %v1952
          %2088 = vmatprep.subr.mxu0 0.0
          %2089 = vmatpush1.msra.mxu0 %v1953
          %2090 = vmatprep.subr.mxu0 0.0
          %2091 = vmatpush1.msra.mxu0 %v1954
          %2092 = vmatprep.subr.mxu0 0.0
          %2093 = vmatpush1.msra.mxu0 %v1955
          %2094 = vmatprep.subr.mxu0 0.0
          %2095 = vmatpush1.msra.mxu0 %v1956
          %2096 = vmatprep.subr.mxu0 0.0
          %2097 = vmatpush1.msra.mxu0 %v1957
          %2098 = vmatprep.subr.mxu0 0.0
          %2099 = vmatpush1.msra.mxu0 %v1958
          %2100 = vmatprep.subr.mxu0 0.0
          %2101 = vmatpush1.msra.mxu0 %v1959
          %2102 = vmatprep.subr.mxu0 0.0
          %2103 = vmatpush1.msra.mxu0 %v1960
          %2104 = vmatprep.subr.mxu0 0.0
          %2105 = vmatpush1.msra.mxu0 %v1961
          %2106 = vmatprep.subr.mxu0 0.0
          %2107 = vmatpush1.msra.mxu0 %v1962
          %2108 = vmatprep.subr.mxu0 0.0
          %2109 = vmatpush1.msra.mxu0 %v1963
          %2110 = vmatprep.mubr.f32.mxu0 %v1895
          %2111 = vmatmul.mubr.f32.gmra.mrb[0].mxu0 %v1894
          %v2112 = vpop.f32.mrb[0].mxu0
          %v2113 = vadd.f32 %v2038, %v2112
          %v2114 = vpop.f32.mrb[0].mxu0
          %2115 = vmatprep.mubr.f32.mxu0 %v1899
          %2116 = vmatmul.mubr.f32.gmra.mrb[0].mxu0 %v1898
          %v2117 = vpop.f32.mrb[0].mxu0
          %v2118 = vadd.f32 %v2043, %v2117
          %v2119 = vpop.f32.mrb[0].mxu0
          %2120 = vdwg.mxu0
          %v2121 = vmax.f32 %v2113, 0.0
          %v2122 = vmax.f32 %v2118, 0.0
          %2123 = vst [vmem:[#allocation2 + $0x10] sm:$0xff] %v2121
          %2124 = vst [vmem:[#allocation2 + $0x18] sm:$0xff] %v2122
        $region92: #{tpu_custom_call.1} parent=59 // pred_fallthru
          _
        %p2125 = scmp.lt.s32.totalorder %s41, 0
        // Predicated region
        $region93: #{tpu_custom_call.1} parent=59 // pred_check
          %p2126 = pneg %p2125
        $region94: #{tpu_custom_call.1} parent=59 // pred_check_branch
          %2128 = sbr.rel (%p2126) target = $region96
        $region95: #{tpu_custom_call.1} parent=59 // pred_region
          %v2129 = vld [vmem:[%s489] sm:$0xff]
          %v2130 = vld [vmem:[%s489 + $0x8] sm:$0xff]
          %v2131 = vld [vmem:[%s489 + $0x10] sm:$0xff]
          %v2132 = vld [vmem:[%s489 + $0x18] sm:$0xff]
          %v2133 = vld [vmem:[%s489 + $0x20] sm:$0xff]
          %v2134 = vld [vmem:[%s489 + $0x28] sm:$0xff]
          %v2135 = vld [vmem:[%s489 + $0x30] sm:$0xff]
          %v2136 = vld [vmem:[%s489 + $0x38] sm:$0xff]
          %v2137 = vld [vmem:[#allocation12] sm:$0xff]
          %v2138 = vld [vmem:[#allocation12 + $0x8] sm:$0xff]
          %v2139 = vld [vmem:[#allocation12 + $0x10] sm:$0xff]
          %v2140 = vld [vmem:[#allocation12 + $0x18] sm:$0xff]
          %v2141 = vld [vmem:[#allocation12 + $0x20] sm:$0xff]
          %v2142 = vld [vmem:[#allocation12 + $0x28] sm:$0xff]
          %v2143 = vld [vmem:[#allocation12 + $0x30] sm:$0xff]
          %v2144 = vld [vmem:[#allocation12 + $0x38] sm:$0xff]
          %v2145 = vld [vmem:[#allocation12 + $0x40] sm:$0xff]
          %v2146 = vld [vmem:[#allocation12 + $0x48] sm:$0xff]
          %v2147 = vld [vmem:[#allocation12 + $0x50] sm:$0xff]
          %v2148 = vld [vmem:[#allocation12 + $0x58] sm:$0xff]
          %v2149 = vld [vmem:[#allocation12 + $0x60] sm:$0xff]
          %v2150 = vld [vmem:[#allocation12 + $0x68] sm:$0xff]
          %v2151 = vld [vmem:[#allocation12 + $0x70] sm:$0xff]
          %v2152 = vld [vmem:[#allocation12 + $0x78] sm:$0xff]
          %v2153 = vld [vmem:[#allocation12 + $0x80] sm:$0xff]
          %v2154 = vld [vmem:[#allocation12 + $0x88] sm:$0xff]
          %v2155 = vld [vmem:[#allocation12 + $0x90] sm:$0xff]
          %v2156 = vld [vmem:[#allocation12 + $0x98] sm:$0xff]
          %v2157 = vld [vmem:[#allocation12 + $0xa0] sm:$0xff]
          %v2158 = vld [vmem:[#allocation12 + $0xa8] sm:$0xff]
          %v2159 = vld [vmem:[#allocation12 + $0xb0] sm:$0xff]
          %v2160 = vld [vmem:[#allocation12 + $0xb8] sm:$0xff]
          %v2161 = vld [vmem:[#allocation12 + $0xc0] sm:$0xff]
          %v2162 = vld [vmem:[#allocation12 + $0xc8] sm:$0xff]
          %v2163 = vld [vmem:[#allocation12 + $0xd0] sm:$0xff]
          %v2164 = vld [vmem:[#allocation12 + $0xd8] sm:$0xff]
          %v2165 = vld [vmem:[#allocation12 + $0xe0] sm:$0xff]
          %v2166 = vld [vmem:[#allocation12 + $0xe8] sm:$0xff]
          %v2167 = vld [vmem:[#allocation12 + $0xf0] sm:$0xff]
          %v2168 = vld [vmem:[#allocation12 + $0xf8] sm:$0xff]
          %v2169 = vld [vmem:[#allocation12 + $0x100] sm:$0xff]
          %v2170 = vld [vmem:[#allocation12 + $0x108] sm:$0xff]
          %v2171 = vld [vmem:[#allocation12 + $0x110] sm:$0xff]
          %v2172 = vld [vmem:[#allocation12 + $0x118] sm:$0xff]
          %v2173 = vld [vmem:[#allocation12 + $0x120] sm:$0xff]
          %v2174 = vld [vmem:[#allocation12 + $0x128] sm:$0xff]
          %v2175 = vld [vmem:[#allocation12 + $0x130] sm:$0xff]
          %v2176 = vld [vmem:[#allocation12 + $0x138] sm:$0xff]
          %v2177 = vld [vmem:[#allocation12 + $0x140] sm:$0xff]
          %v2178 = vld [vmem:[#allocation12 + $0x148] sm:$0xff]
          %v2179 = vld [vmem:[#allocation12 + $0x150] sm:$0xff]
          %v2180 = vld [vmem:[#allocation12 + $0x158] sm:$0xff]
          %v2181 = vld [vmem:[#allocation12 + $0x160] sm:$0xff]
          %v2182 = vld [vmem:[#allocation12 + $0x168] sm:$0xff]
          %v2183 = vld [vmem:[#allocation12 + $0x170] sm:$0xff]
          %v2184 = vld [vmem:[#allocation12 + $0x178] sm:$0xff]
          %v2185 = vld [vmem:[#allocation12 + $0x180] sm:$0xff]
          %v2186 = vld [vmem:[#allocation12 + $0x188] sm:$0xff]
          %v2187 = vld [vmem:[#allocation12 + $0x190] sm:$0xff]
          %v2188 = vld [vmem:[#allocation12 + $0x198] sm:$0xff]
          %v2189 = vld [vmem:[#allocation12 + $0x1a0] sm:$0xff]
          %v2190 = vld [vmem:[#allocation12 + $0x1a8] sm:$0xff]
          %v2191 = vld [vmem:[#allocation12 + $0x1b0] sm:$0xff]
          %v2192 = vld [vmem:[#allocation12 + $0x1b8] sm:$0xff]
          %v2193 = vld [vmem:[#allocation12 + $0x1c0] sm:$0xff]
          %v2194 = vld [vmem:[#allocation12 + $0x1c8] sm:$0xff]
          %v2195 = vld [vmem:[#allocation12 + $0x1d0] sm:$0xff]
          %v2196 = vld [vmem:[#allocation12 + $0x1d8] sm:$0xff]
          %v2197 = vld [vmem:[#allocation12 + $0x1e0] sm:$0xff]
          %v2198 = vld [vmem:[#allocation12 + $0x1e8] sm:$0xff]
          %v2199 = vld [vmem:[#allocation12 + $0x1f0] sm:$0xff]
          %v2200 = vld [vmem:[#allocation12 + $0x1f8] sm:$0xff]
          %v2201 = vld [vmem:[%s6] sm:$0x1]
          %v2203 = vlaneseq
          %v2204 = vshrl.u32 %v2203, 7
          %v2205 = vsub.s32 0, %v2204
          %v2206 = vrot.slane %v2201, %v2205
          %2208 = vmatprep.subr.mxu0 0.0
          %2209 = vmatpush1.msra.mxu0 %v2137
          %2210 = vmatprep.subr.mxu0 0.0
          %2211 = vmatpush1.msra.mxu0 %v2138
          %2212 = vmatprep.subr.mxu0 0.0
          %2213 = vmatpush1.msra.mxu0 %v2139
          %2214 = vmatprep.subr.mxu0 0.0
          %2215 = vmatpush1.msra.mxu0 %v2140
          %2216 = vmatprep.subr.mxu0 0.0
          %2217 = vmatpush1.msra.mxu0 %v2141
          %2218 = vmatprep.subr.mxu0 0.0
          %2219 = vmatpush1.msra.mxu0 %v2142
          %2220 = vmatprep.subr.mxu0 0.0
          %2221 = vmatpush1.msra.mxu0 %v2143
          %2222 = vmatprep.subr.mxu0 0.0
          %2223 = vmatpush1.msra.mxu0 %v2144
          %2224 = vmatprep.subr.mxu0 0.0
          %2225 = vmatpush1.msra.mxu0 %v2145
          %2226 = vmatprep.subr.mxu0 0.0
          %2227 = vmatpush1.msra.mxu0 %v2146
          %2228 = vmatprep.subr.mxu0 0.0
          %2229 = vmatpush1.msra.mxu0 %v2147
          %2230 = vmatprep.subr.mxu0 0.0
          %2231 = vmatpush1.msra.mxu0 %v2148
          %2232 = vmatprep.subr.mxu0 0.0
          %2233 = vmatpush1.msra.mxu0 %v2149
          %2234 = vmatprep.subr.mxu0 0.0
          %2235 = vmatpush1.msra.mxu0 %v2150
          %2236 = vmatprep.subr.mxu0 0.0
          %2237 = vmatpush1.msra.mxu0 %v2151
          %2238 = vmatprep.subr.mxu0 0.0
          %2239 = vmatpush1.msra.mxu0 %v2152
          %2240 = vmatprep.subr.mxu0 0.0
          %2241 = vmatpush1.msra.mxu0 %v2153
          %2242 = vmatprep.subr.mxu0 0.0
          %2243 = vmatpush1.msra.mxu0 %v2154
          %2244 = vmatprep.subr.mxu0 0.0
          %2245 = vmatpush1.msra.mxu0 %v2155
          %2246 = vmatprep.subr.mxu0 0.0
          %2247 = vmatpush1.msra.mxu0 %v2156
          %2248 = vmatprep.subr.mxu0 0.0
          %2249 = vmatpush1.msra.mxu0 %v2157
          %2250 = vmatprep.subr.mxu0 0.0
          %2251 = vmatpush1.msra.mxu0 %v2158
          %2252 = vmatprep.subr.mxu0 0.0
          %2253 = vmatpush1.msra.mxu0 %v2159
          %2254 = vmatprep.subr.mxu0 0.0
          %2255 = vmatpush1.msra.mxu0 %v2160
          %2256 = vmatprep.subr.mxu0 0.0
          %2257 = vmatpush1.msra.mxu0 %v2161
          %2258 = vmatprep.subr.mxu0 0.0
          %2259 = vmatpush1.msra.mxu0 %v2162
          %2260 = vmatprep.subr.mxu0 0.0
          %2261 = vmatpush1.msra.mxu0 %v2163
          %2262 = vmatprep.subr.mxu0 0.0
          %2263 = vmatpush1.msra.mxu0 %v2164
          %2264 = vmatprep.subr.mxu0 0.0
          %2265 = vmatpush1.msra.mxu0 %v2165
          %2266 = vmatprep.subr.mxu0 0.0
          %2267 = vmatpush1.msra.mxu0 %v2166
          %2268 = vmatprep.subr.mxu0 0.0
          %2269 = vmatpush1.msra.mxu0 %v2167
          %2270 = vmatprep.subr.mxu0 0.0
          %2271 = vmatpush1.msra.mxu0 %v2168
          %2272 = vmatprep.mubr.f32.mxu0 %v2130
          %2273 = vmatmul.mubr.f32.gmra.mrb[0].mxu0 %v2129
          %v2274 = vpop.f32.mrb[0].mxu0
          %v2275 = vadd.f32 %v2206, %v2274
          %v2276 = vpop.f32.mrb[0].mxu0
          %2277 = vmatprep.mubr.f32.mxu0 %v2134
          %2278 = vmatmul.mubr.f32.gmra.mrb[0].mxu0 %v2133
          %v2279 = vpop.f32.mrb[0].mxu0
          %v2280 = vadd.f32 %v2206, %v2279
          %v2281 = vpop.f32.mrb[0].mxu0
          %2282 = vdwg.mxu0
          %2283 = vmatprep.subr.mxu0 0.0
          %2284 = vmatpush1.msra.mxu0 %v2169
          %2285 = vmatprep.subr.mxu0 0.0
          %2286 = vmatpush1.msra.mxu0 %v2170
          %2287 = vmatprep.subr.mxu0 0.0
          %2288 = vmatpush1.msra.mxu0 %v2171
          %2289 = vmatprep.subr.mxu0 0.0
          %2290 = vmatpush1.msra.mxu0 %v2172
          %2291 = vmatprep.subr.mxu0 0.0
          %2292 = vmatpush1.msra.mxu0 %v2173
          %2293 = vmatprep.subr.mxu0 0.0
          %2294 = vmatpush1.msra.mxu0 %v2174
          %2295 = vmatprep.subr.mxu0 0.0
          %2296 = vmatpush1.msra.mxu0 %v2175
          %2297 = vmatprep.subr.mxu0 0.0
          %2298 = vmatpush1.msra.mxu0 %v2176
          %2299 = vmatprep.subr.mxu0 0.0
          %2300 = vmatpush1.msra.mxu0 %v2177
          %2301 = vmatprep.subr.mxu0 0.0
          %2302 = vmatpush1.msra.mxu0 %v2178
          %2303 = vmatprep.subr.mxu0 0.0
          %2304 = vmatpush1.msra.mxu0 %v2179
          %2305 = vmatprep.subr.mxu0 0.0
          %2306 = vmatpush1.msra.mxu0 %v2180
          %2307 = vmatprep.subr.mxu0 0.0
          %2308 = vmatpush1.msra.mxu0 %v2181
          %2309 = vmatprep.subr.mxu0 0.0
          %2310 = vmatpush1.msra.mxu0 %v2182
          %2311 = vmatprep.subr.mxu0 0.0
          %2312 = vmatpush1.msra.mxu0 %v2183
          %2313 = vmatprep.subr.mxu0 0.0
          %2314 = vmatpush1.msra.mxu0 %v2184
          %2315 = vmatprep.subr.mxu0 0.0
          %2316 = vmatpush1.msra.mxu0 %v2185
          %2317 = vmatprep.subr.mxu0 0.0
          %2318 = vmatpush1.msra.mxu0 %v2186
          %2319 = vmatprep.subr.mxu0 0.0
          %2320 = vmatpush1.msra.mxu0 %v2187
          %2321 = vmatprep.subr.mxu0 0.0
          %2322 = vmatpush1.msra.mxu0 %v2188
          %2323 = vmatprep.subr.mxu0 0.0
          %2324 = vmatpush1.msra.mxu0 %v2189
          %2325 = vmatprep.subr.mxu0 0.0
          %2326 = vmatpush1.msra.mxu0 %v2190
          %2327 = vmatprep.subr.mxu0 0.0
          %2328 = vmatpush1.msra.mxu0 %v2191
          %2329 = vmatprep.subr.mxu0 0.0
          %2330 = vmatpush1.msra.mxu0 %v2192
          %2331 = vmatprep.subr.mxu0 0.0
          %2332 = vmatpush1.msra.mxu0 %v2193
          %2333 = vmatprep.subr.mxu0 0.0
          %2334 = vmatpush1.msra.mxu0 %v2194
          %2335 = vmatprep.subr.mxu0 0.0
          %2336 = vmatpush1.msra.mxu0 %v2195
          %2337 = vmatprep.subr.mxu0 0.0
          %2338 = vmatpush1.msra.mxu0 %v2196
          %2339 = vmatprep.subr.mxu0 0.0
          %2340 = vmatpush1.msra.mxu0 %v2197
          %2341 = vmatprep.subr.mxu0 0.0
          %2342 = vmatpush1.msra.mxu0 %v2198
          %2343 = vmatprep.subr.mxu0 0.0
          %2344 = vmatpush1.msra.mxu0 %v2199
          %2345 = vmatprep.subr.mxu0 0.0
          %2346 = vmatpush1.msra.mxu0 %v2200
          %2347 = vmatprep.mubr.f32.mxu0 %v2132
          %2348 = vmatmul.mubr.f32.gmra.mrb[0].mxu0 %v2131
          %v2349 = vpop.f32.mrb[0].mxu0
          %v2350 = vadd.f32 %v2275, %v2349
          %v2351 = vpop.f32.mrb[0].mxu0
          %2352 = vmatprep.mubr.f32.mxu0 %v2136
          %2353 = vmatmul.mubr.f32.gmra.mrb[0].mxu0 %v2135
          %v2354 = vpop.f32.mrb[0].mxu0
          %v2355 = vadd.f32 %v2280, %v2354
          %v2356 = vpop.f32.mrb[0].mxu0
          %2357 = vdwg.mxu0
          %v2358 = vmax.f32 %v2350, 0.0
          %v2359 = vmax.f32 %v2355, 0.0
          %2360 = vst [vmem:[#allocation2 + $0x120] sm:$0xff] %v2358
          %2361 = vst [vmem:[#allocation2 + $0x128] sm:$0xff] %v2359
        $region96: #{tpu_custom_call.1} parent=59 // pred_fallthru
          _
        %v2362 = vld [vmem:[#allocation15] sm:$0xff]
        %v2363 = vld [vmem:[#allocation15 + $0x8] sm:$0xff]
        %v2364 = vld [vmem:[#allocation15 + $0x10] sm:$0xff]
        %v2365 = vld [vmem:[#allocation15 + $0x18] sm:$0xff]
        %v2366 = vld [vmem:[#allocation15 + $0x20] sm:$0xff]
        %v2367 = vld [vmem:[#allocation15 + $0x28] sm:$0xff]
        %v2368 = vld [vmem:[#allocation15 + $0x30] sm:$0xff]
        %v2369 = vld [vmem:[#allocation15 + $0x38] sm:$0xff]
        %v2370 = vld [vmem:[#allocation15 + $0x40] sm:$0xff]
        %v2371 = vld [vmem:[#allocation15 + $0x48] sm:$0xff]
        %v2372 = vld [vmem:[#allocation15 + $0x50] sm:$0xff]
        %v2373 = vld [vmem:[#allocation15 + $0x58] sm:$0xff]
        %v2374 = vld [vmem:[#allocation15 + $0x60] sm:$0xff]
        %v2375 = vld [vmem:[#allocation15 + $0x68] sm:$0xff]
        %v2376 = vld [vmem:[#allocation15 + $0x70] sm:$0xff]
        %v2377 = vld [vmem:[#allocation15 + $0x78] sm:$0xff]
        %v2378 = vld [vmem:[#allocation2 + $0xf] sm:$0xff]
        %v2379 = vld [vmem:[#allocation2 + $0x17] sm:$0xff]
        %v2380 = vld [vmem:[#allocation2 + $0x1f] sm:$0xff]
        %v2381 = vld [vmem:[#allocation2 + $0x27] sm:$0xff]
        %v2382 = vld [vmem:[#allocation2 + $0x2f] sm:$0xff]
        %v2383 = vld [vmem:[#allocation2 + $0x37] sm:$0xff]
        %v2384 = vld [vmem:[#allocation2 + $0x3f] sm:$0xff]
        %v2385 = vld [vmem:[#allocation2 + $0x47] sm:$0xff]
        %v2386 = vld [vmem:[#allocation2 + $0x4f] sm:$0xff]
        %v2387 = vld [vmem:[#allocation2 + $0x57] sm:$0xff]
        %v2388 = vld [vmem:[#allocation2 + $0x5f] sm:$0xff]
        %v2389 = vld [vmem:[#allocation2 + $0x67] sm:$0xff]
        %v2390 = vld [vmem:[#allocation2 + $0x6f] sm:$0xff]
        %v2391 = vld [vmem:[#allocation2 + $0x77] sm:$0xff]
        %v2392 = vld [vmem:[#allocation2 + $0x7f] sm:$0xff]
        %v2393 = vld [vmem:[#allocation2 + $0x87] sm:$0xff]
        %v2394 = vld [vmem:[#allocation2 + $0x8f] sm:$0xff]
        %v2395 = vld [vmem:[#allocation2 + $0x97] sm:$0xff]
        %v2396 = vld [vmem:[#allocation2 + $0x9f] sm:$0xff]
        %v2397 = vld [vmem:[#allocation2 + $0xa7] sm:$0xff]
        %v2398 = vld [vmem:[#allocation2 + $0xaf] sm:$0xff]
        %v2399 = vld [vmem:[#allocation2 + $0xb7] sm:$0xff]
        %v2400 = vld [vmem:[#allocation2 + $0xbf] sm:$0xff]
        %v2401 = vld [vmem:[#allocation2 + $0xc7] sm:$0xff]
        %v2402 = vld [vmem:[#allocation2 + $0xcf] sm:$0xff]
        %v2403 = vld [vmem:[#allocation2 + $0xd7] sm:$0xff]
        %v2404 = vld [vmem:[#allocation2 + $0xdf] sm:$0xff]
        %v2405 = vld [vmem:[#allocation2 + $0xe7] sm:$0xff]
        %v2406 = vld [vmem:[#allocation2 + $0xef] sm:$0xff]
        %v2407 = vld [vmem:[#allocation2 + $0xf7] sm:$0xff]
        %v2408 = vld [vmem:[#allocation2 + $0xff] sm:$0xff]
        %v2409 = vld [vmem:[#allocation2 + $0x107] sm:$0xff]
        %v2410 = vmul.f32 %v2378, %v1047
        %v2411 = vmul.f32 %v2379, %v1048
        %v2412 = vmul.f32 %v2380, %v1049
        %v2413 = vmul.f32 %v2381, %v1050
        %v2414 = vmul.f32 %v2382, %v1051
        %v2415 = vmul.f32 %v2383, %v1052
        %v2416 = vmul.f32 %v2384, %v1053
        %v2417 = vmul.f32 %v2385, %v1054
        %v2418 = vmul.f32 %v2386, %v1055
        %v2419 = vmul.f32 %v2387, %v1056
        %v2420 = vmul.f32 %v2388, %v1057
        %v2421 = vmul.f32 %v2389, %v1058
        %v2422 = vmul.f32 %v2390, %v1059
        %v2423 = vmul.f32 %v2391, %v1060
        %v2424 = vmul.f32 %v2392, %v1061
        %v2425 = vmul.f32 %v2393, %v1062
        %v2426 = vmul.f32 %v2394, %v1063
        %v2427 = vmul.f32 %v2395, %v1064
        %v2428 = vmul.f32 %v2396, %v1065
        %v2429 = vmul.f32 %v2397, %v1066
        %v2430 = vmul.f32 %v2398, %v1067
        %v2431 = vmul.f32 %v2399, %v1068
        %v2432 = vmul.f32 %v2400, %v1069
        %v2433 = vmul.f32 %v2401, %v1070
        %v2434 = vmul.f32 %v2402, %v1071
        %v2435 = vmul.f32 %v2403, %v1072
        %v2436 = vmul.f32 %v2404, %v1073
        %v2437 = vmul.f32 %v2405, %v1074
        %v2438 = vmul.f32 %v2406, %v1075
        %v2439 = vmul.f32 %v2407, %v1076
        %v2440 = vmul.f32 %v2408, %v1077
        %v2441 = vmul.f32 %v2409, %v1078
        %v2442 = vld [vmem:[#allocation2 + $0x10f] sm:$0xff]
        %v2443 = vld [vmem:[#allocation2 + $0x117] sm:$0xff]
        %v2444 = vld [vmem:[#allocation2 + $0x11f] sm:$0xff]
        %v2445 = vld [vmem:[#allocation2 + $0x127] sm:$0xff]
        %v2446 = vmul.f32 %v2382, %v1047
        %v2447 = vmul.f32 %v2383, %v1048
        %v2448 = vmul.f32 %v2384, %v1049
        %v2449 = vmul.f32 %v2385, %v1050
        %v2450 = vmul.f32 %v2386, %v1051
        %v2451 = vmul.f32 %v2387, %v1052
        %v2452 = vmul.f32 %v2388, %v1053
        %v2453 = vmul.f32 %v2389, %v1054
        %v2454 = vmul.f32 %v2390, %v1055
        %v2455 = vmul.f32 %v2391, %v1056
        %v2456 = vmul.f32 %v2392, %v1057
        %v2457 = vmul.f32 %v2393, %v1058
        %v2458 = vmul.f32 %v2394, %v1059
        %v2459 = vmul.f32 %v2395, %v1060
        %v2460 = vmul.f32 %v2396, %v1061
        %v2461 = vmul.f32 %v2397, %v1062
        %v2462 = vmul.f32 %v2398, %v1063
        %v2463 = vmul.f32 %v2399, %v1064
        %v2464 = vmul.f32 %v2400, %v1065
        %v2465 = vmul.f32 %v2401, %v1066
        %v2466 = vmul.f32 %v2402, %v1067
        %v2467 = vmul.f32 %v2403, %v1068
        %v2468 = vmul.f32 %v2404, %v1069
        %v2469 = vmul.f32 %v2405, %v1070
        %v2470 = vmul.f32 %v2406, %v1071
        %v2471 = vmul.f32 %v2407, %v1072
        %v2472 = vmul.f32 %v2408, %v1073
        %v2473 = vmul.f32 %v2409, %v1074
        %v2474 = vmul.f32 %v2442, %v1075
        %v2475 = vmul.f32 %v2443, %v1076
        %v2476 = vmul.f32 %v2444, %v1077
        %v2477 = vmul.f32 %v2445, %v1078
        %v2478 = vld [vmem:[#allocation14] sm:$0xff]
        %v2479 = vld [vmem:[#allocation14 + $0x8] sm:$0xff]
        %v2480 = vld [vmem:[#allocation14 + $0x10] sm:$0xff]
        %v2481 = vld [vmem:[#allocation14 + $0x18] sm:$0xff]
        %v2482 = vld [vmem:[#allocation14 + $0x20] sm:$0xff]
        %v2483 = vld [vmem:[#allocation14 + $0x28] sm:$0xff]
        %v2484 = vld [vmem:[#allocation14 + $0x30] sm:$0xff]
        %v2485 = vld [vmem:[#allocation14 + $0x38] sm:$0xff]
        %v2486 = vld [vmem:[#allocation14 + $0x40] sm:$0xff]
        %v2487 = vld [vmem:[#allocation14 + $0x48] sm:$0xff]
        %v2488 = vld [vmem:[#allocation14 + $0x50] sm:$0xff]
        %v2489 = vld [vmem:[#allocation14 + $0x58] sm:$0xff]
        %v2490 = vld [vmem:[#allocation14 + $0x60] sm:$0xff]
        %v2491 = vld [vmem:[#allocation14 + $0x68] sm:$0xff]
        %v2492 = vld [vmem:[#allocation14 + $0x70] sm:$0xff]
        %v2493 = vld [vmem:[#allocation14 + $0x78] sm:$0xff]
        %v2494 = vld [vmem:[#allocation14 + $0x80] sm:$0xff]
        %v2495 = vld [vmem:[#allocation14 + $0x88] sm:$0xff]
        %v2496 = vld [vmem:[#allocation14 + $0x90] sm:$0xff]
        %v2497 = vld [vmem:[#allocation14 + $0x98] sm:$0xff]
        %v2498 = vld [vmem:[#allocation14 + $0xa0] sm:$0xff]
        %v2499 = vld [vmem:[#allocation14 + $0xa8] sm:$0xff]
        %v2500 = vld [vmem:[#allocation14 + $0xb0] sm:$0xff]
        %v2501 = vld [vmem:[#allocation14 + $0xb8] sm:$0xff]
        %v2502 = vld [vmem:[#allocation14 + $0xc0] sm:$0xff]
        %v2503 = vld [vmem:[#allocation14 + $0xc8] sm:$0xff]
        %v2504 = vld [vmem:[#allocation14 + $0xd0] sm:$0xff]
        %v2505 = vld [vmem:[#allocation14 + $0xd8] sm:$0xff]
        %v2506 = vld [vmem:[#allocation14 + $0xe0] sm:$0xff]
        %v2507 = vld [vmem:[#allocation14 + $0xe8] sm:$0xff]
        %v2508 = vld [vmem:[#allocation14 + $0xf0] sm:$0xff]
        %v2509 = vld [vmem:[#allocation14 + $0xf8] sm:$0xff]
        %2510 = vmatprep.subr.mxu0 0.0
        %2511 = vmatpush1.msra.mxu0 %v2478
        %2512 = vmatprep.subr.mxu0 0.0
        %2513 = vmatpush1.msra.mxu0 %v2479
        %2514 = vmatprep.subr.mxu0 0.0
        %2515 = vmatpush1.msra.mxu0 %v2480
        %2516 = vmatprep.subr.mxu0 0.0
        %2517 = vmatpush1.msra.mxu0 %v2481
        %2518 = vmatprep.subr.mxu0 0.0
        %2519 = vmatpush1.msra.mxu0 %v2482
        %2520 = vmatprep.subr.mxu0 0.0
        %2521 = vmatpush1.msra.mxu0 %v2483
        %2522 = vmatprep.subr.mxu0 0.0
        %2523 = vmatpush1.msra.mxu0 %v2484
        %2524 = vmatprep.subr.mxu0 0.0
        %2525 = vmatpush1.msra.mxu0 %v2485
        %2526 = vmatprep.subr.mxu0 0.0
        %2527 = vmatpush1.msra.mxu0 %v2486
        %2528 = vmatprep.subr.mxu0 0.0
        %2529 = vmatpush1.msra.mxu0 %v2487
        %2530 = vmatprep.subr.mxu0 0.0
        %2531 = vmatpush1.msra.mxu0 %v2488
        %2532 = vmatprep.subr.mxu0 0.0
        %2533 = vmatpush1.msra.mxu0 %v2489
        %2534 = vmatprep.subr.mxu0 0.0
        %2535 = vmatpush1.msra.mxu0 %v2490
        %2536 = vmatprep.subr.mxu0 0.0
        %2537 = vmatpush1.msra.mxu0 %v2491
        %2538 = vmatprep.subr.mxu0 0.0
        %2539 = vmatpush1.msra.mxu0 %v2492
        %2540 = vmatprep.subr.mxu0 0.0
        %2541 = vmatpush1.msra.mxu0 %v2493
        %2542 = vmatprep.subr.mxu0 0.0
        %2543 = vmatpush1.msra.mxu0 %v2494
        %2544 = vmatprep.subr.mxu0 0.0
        %2545 = vmatpush1.msra.mxu0 %v2495
        %2546 = vmatprep.subr.mxu0 0.0
        %2547 = vmatpush1.msra.mxu0 %v2496
        %2548 = vmatprep.subr.mxu0 0.0
        %2549 = vmatpush1.msra.mxu0 %v2497
        %2550 = vmatprep.subr.mxu0 0.0
        %2551 = vmatpush1.msra.mxu0 %v2498
        %2552 = vmatprep.subr.mxu0 0.0
        %2553 = vmatpush1.msra.mxu0 %v2499
        %2554 = vmatprep.subr.mxu0 0.0
        %2555 = vmatpush1.msra.mxu0 %v2500
        %2556 = vmatprep.subr.mxu0 0.0
        %2557 = vmatpush1.msra.mxu0 %v2501
        %2558 = vmatprep.subr.mxu0 0.0
        %2559 = vmatpush1.msra.mxu0 %v2502
        %2560 = vmatprep.subr.mxu0 0.0
        %2561 = vmatpush1.msra.mxu0 %v2503
        %2562 = vmatprep.subr.mxu0 0.0
        %2563 = vmatpush1.msra.mxu0 %v2504
        %2564 = vmatprep.subr.mxu0 0.0
        %2565 = vmatpush1.msra.mxu0 %v2505
        %2566 = vmatprep.subr.mxu0 0.0
        %2567 = vmatpush1.msra.mxu0 %v2506
        %2568 = vmatprep.subr.mxu0 0.0
        %2569 = vmatpush1.msra.mxu0 %v2507
        %2570 = vmatprep.subr.mxu0 0.0
        %2571 = vmatpush1.msra.mxu0 %v2508
        %2572 = vmatprep.subr.mxu0 0.0
        %2573 = vmatpush1.msra.mxu0 %v2509
        %2574 = vmatprep.mubr.f32.mxu0 %v2446
        %2575 = vmatmul.mubr.f32.gmra.mrb[0].mxu0 %v2410
        %v2576 = vpop.f32.mrb[0].mxu0
        %v2577 = vadd.f32 0.0, %v2576
        %v2578 = vpop.f32.mrb[0].mxu0
        %2579 = vmatprep.mubr.f32.mxu0 %v2447
        %2580 = vmatmul.mubr.f32.gmra.mrb[0].mxu0 %v2411
        %v2581 = vpop.f32.mrb[0].mxu0
        %v2582 = vadd.f32 0.0, %v2581
        %v2583 = vpop.f32.mrb[0].mxu0
        %2584 = vmatprep.mubr.f32.mxu0 %v2448
        %2585 = vmatmul.mubr.f32.gmra.mrb[0].mxu0 %v2412
        %v2586 = vpop.f32.mrb[0].mxu0
        %v2587 = vadd.f32 0.0, %v2586
        %v2588 = vpop.f32.mrb[0].mxu0
        %2589 = vmatprep.mubr.f32.mxu0 %v2449
        %2590 = vmatmul.mubr.f32.gmra.mrb[0].mxu0 %v2413
        %v2591 = vpop.f32.mrb[0].mxu0
        %v2592 = vadd.f32 0.0, %v2591
        %v2593 = vpop.f32.mrb[0].mxu0
        %2594 = vmatprep.mubr.f32.mxu0 %v2450
        %2595 = vmatmul.mubr.f32.gmra.mrb[0].mxu0 %v2414
        %v2596 = vpop.f32.mrb[0].mxu0
        %v2597 = vadd.f32 0.0, %v2596
        %v2598 = vpop.f32.mrb[0].mxu0
        %2599 = vmatprep.mubr.f32.mxu0 %v2451
        %2600 = vmatmul.mubr.f32.gmra.mrb[0].mxu0 %v2415
        %v2601 = vpop.f32.mrb[0].mxu0
        %v2602 = vadd.f32 0.0, %v2601
        %v2603 = vpop.f32.mrb[0].mxu0
        %2604 = vmatprep.mubr.f32.mxu0 %v2452
        %2605 = vmatmul.mubr.f32.gmra.mrb[0].mxu0 %v2416
        %v2606 = vpop.f32.mrb[0].mxu0
        %v2607 = vadd.f32 0.0, %v2606
        %v2608 = vpop.f32.mrb[0].mxu0
        %2609 = vmatprep.mubr.f32.mxu0 %v2453
        %2610 = vmatmul.mubr.f32.gmra.mrb[0].mxu0 %v2417
        %v2611 = vpop.f32.mrb[0].mxu0
        %v2612 = vadd.f32 0.0, %v2611
        %v2613 = vpop.f32.mrb[0].mxu0
        %2614 = vmatprep.mubr.f32.mxu0 %v2454
        %2615 = vmatmul.mubr.f32.gmra.mrb[0].mxu0 %v2418
        %v2616 = vpop.f32.mrb[0].mxu0
        %v2617 = vadd.f32 0.0, %v2616
        %v2618 = vpop.f32.mrb[0].mxu0
        %2619 = vmatprep.mubr.f32.mxu0 %v2455
        %2620 = vmatmul.mubr.f32.gmra.mrb[0].mxu0 %v2419
        %v2621 = vpop.f32.mrb[0].mxu0
        %v2622 = vadd.f32 0.0, %v2621
        %v2623 = vpop.f32.mrb[0].mxu0
        %2624 = vmatprep.mubr.f32.mxu0 %v2456
        %2625 = vmatmul.mubr.f32.gmra.mrb[0].mxu0 %v2420
        %v2626 = vpop.f32.mrb[0].mxu0
        %v2627 = vadd.f32 0.0, %v2626
        %v2628 = vpop.f32.mrb[0].mxu0
        %2629 = vmatprep.mubr.f32.mxu0 %v2457
        %2630 = vmatmul.mubr.f32.gmra.mrb[0].mxu0 %v2421
        %v2631 = vpop.f32.mrb[0].mxu0
        %v2632 = vadd.f32 0.0, %v2631
        %v2633 = vpop.f32.mrb[0].mxu0
        %2634 = vmatprep.mubr.f32.mxu0 %v2458
        %2635 = vmatmul.mubr.f32.gmra.mrb[0].mxu0 %v2422
        %v2636 = vpop.f32.mrb[0].mxu0
        %v2637 = vadd.f32 0.0, %v2636
        %v2638 = vpop.f32.mrb[0].mxu0
        %2639 = vmatprep.mubr.f32.mxu0 %v2459
        %2640 = vmatmul.mubr.f32.gmra.mrb[0].mxu0 %v2423
        %v2641 = vpop.f32.mrb[0].mxu0
        %v2642 = vadd.f32 0.0, %v2641
        %v2643 = vpop.f32.mrb[0].mxu0
        %2644 = vmatprep.mubr.f32.mxu0 %v2460
        %2645 = vmatmul.mubr.f32.gmra.mrb[0].mxu0 %v2424
        %v2646 = vpop.f32.mrb[0].mxu0
        %v2647 = vadd.f32 0.0, %v2646
        %v2648 = vpop.f32.mrb[0].mxu0
        %2649 = vmatprep.mubr.f32.mxu0 %v2461
        %2650 = vmatmul.mubr.f32.gmra.mrb[0].mxu0 %v2425
        %v2651 = vpop.f32.mrb[0].mxu0
        %v2652 = vadd.f32 0.0, %v2651
        %v2653 = vpop.f32.mrb[0].mxu0
        %2654 = vmatprep.mubr.f32.mxu0 %v2462
        %2655 = vmatmul.mubr.f32.gmra.mrb[0].mxu0 %v2426
        %v2656 = vpop.f32.mrb[0].mxu0
        %v2657 = vadd.f32 0.0, %v2656
        %v2658 = vpop.f32.mrb[0].mxu0
        %2659 = vmatprep.mubr.f32.mxu0 %v2463
        %2660 = vmatmul.mubr.f32.gmra.mrb[0].mxu0 %v2427
        %v2661 = vpop.f32.mrb[0].mxu0
        %v2662 = vadd.f32 0.0, %v2661
        %v2663 = vpop.f32.mrb[0].mxu0
        %2664 = vmatprep.mubr.f32.mxu0 %v2464
        %2665 = vmatmul.mubr.f32.gmra.mrb[0].mxu0 %v2428
        %v2666 = vpop.f32.mrb[0].mxu0
        %v2667 = vadd.f32 0.0, %v2666
        %v2668 = vpop.f32.mrb[0].mxu0
        %2669 = vmatprep.mubr.f32.mxu0 %v2465
        %2670 = vmatmul.mubr.f32.gmra.mrb[0].mxu0 %v2429
        %v2671 = vpop.f32.mrb[0].mxu0
        %v2672 = vadd.f32 0.0, %v2671
        %v2673 = vpop.f32.mrb[0].mxu0
        %2674 = vmatprep.mubr.f32.mxu0 %v2466
        %2675 = vmatmul.mubr.f32.gmra.mrb[0].mxu0 %v2430
        %v2676 = vpop.f32.mrb[0].mxu0
        %v2677 = vadd.f32 0.0, %v2676
        %v2678 = vpop.f32.mrb[0].mxu0
        %2679 = vmatprep.mubr.f32.mxu0 %v2467
        %2680 = vmatmul.mubr.f32.gmra.mrb[0].mxu0 %v2431
        %v2681 = vpop.f32.mrb[0].mxu0
        %v2682 = vadd.f32 0.0, %v2681
        %v2683 = vpop.f32.mrb[0].mxu0
        %2684 = vmatprep.mubr.f32.mxu0 %v2468
        %2685 = vmatmul.mubr.f32.gmra.mrb[0].mxu0 %v2432
        %v2686 = vpop.f32.mrb[0].mxu0
        %v2687 = vadd.f32 0.0, %v2686
        %v2688 = vpop.f32.mrb[0].mxu0
        %2689 = vmatprep.mubr.f32.mxu0 %v2469
        %2690 = vmatmul.mubr.f32.gmra.mrb[0].mxu0 %v2433
        %v2691 = vpop.f32.mrb[0].mxu0
        %v2692 = vadd.f32 0.0, %v2691
        %v2693 = vpop.f32.mrb[0].mxu0
        %2694 = vmatprep.mubr.f32.mxu0 %v2470
        %2695 = vmatmul.mubr.f32.gmra.mrb[0].mxu0 %v2434
        %v2696 = vpop.f32.mrb[0].mxu0
        %v2697 = vadd.f32 0.0, %v2696
        %v2698 = vpop.f32.mrb[0].mxu0
        %2699 = vmatprep.mubr.f32.mxu0 %v2471
        %2700 = vmatmul.mubr.f32.gmra.mrb[0].mxu0 %v2435
        %v2701 = vpop.f32.mrb[0].mxu0
        %v2702 = vadd.f32 0.0, %v2701
        %v2703 = vpop.f32.mrb[0].mxu0
        %2704 = vmatprep.mubr.f32.mxu0 %v2472
        %2705 = vmatmul.mubr.f32.gmra.mrb[0].mxu0 %v2436
        %v2706 = vpop.f32.mrb[0].mxu0
        %v2707 = vadd.f32 0.0, %v2706
        %v2708 = vpop.f32.mrb[0].mxu0
        %2709 = vmatprep.mubr.f32.mxu0 %v2473
        %2710 = vmatmul.mubr.f32.gmra.mrb[0].mxu0 %v2437
        %v2711 = vpop.f32.mrb[0].mxu0
        %v2712 = vadd.f32 0.0, %v2711
        %v2713 = vpop.f32.mrb[0].mxu0
        %2714 = vmatprep.mubr.f32.mxu0 %v2474
        %2715 = vmatmul.mubr.f32.gmra.mrb[0].mxu0 %v2438
        %v2716 = vpop.f32.mrb[0].mxu0
        %v2717 = vadd.f32 0.0, %v2716
        %v2718 = vpop.f32.mrb[0].mxu0
        %2719 = vmatprep.mubr.f32.mxu0 %v2475
        %2720 = vmatmul.mubr.f32.gmra.mrb[0].mxu0 %v2439
        %v2721 = vpop.f32.mrb[0].mxu0
        %v2722 = vadd.f32 0.0, %v2721
        %v2723 = vpop.f32.mrb[0].mxu0
        %2724 = vmatprep.mubr.f32.mxu0 %v2476
        %2725 = vmatmul.mubr.f32.gmra.mrb[0].mxu0 %v2440
        %v2726 = vpop.f32.mrb[0].mxu0
        %v2727 = vadd.f32 0.0, %v2726
        %v2728 = vpop.f32.mrb[0].mxu0
        %2729 = vmatprep.mubr.f32.mxu0 %v2477
        %2730 = vmatmul.mubr.f32.gmra.mrb[0].mxu0 %v2441
        %v2731 = vpop.f32.mrb[0].mxu0
        %v2732 = vadd.f32 0.0, %v2731
        %v2733 = vpop.f32.mrb[0].mxu0
        %2734 = vdwg.mxu0
        %2735 = vmatprep.subr.mxu0 0.0
        %2736 = vmatpush1.msra.mxu0 %v2362
        %2737 = vmatprep.subr.mxu0 0.0
        %2738 = vmatpush1.msra.mxu0 %v2363
        %2739 = vmatprep.subr.mxu0 0.0
        %2740 = vmatpush1.msra.mxu0 %v2364
        %2741 = vmatprep.subr.mxu0 0.0
        %2742 = vmatpush1.msra.mxu0 %v2365
        %2743 = vmatprep.subr.mxu0 0.0
        %2744 = vmatpush1.msra.mxu0 %v2366
        %2745 = vmatprep.subr.mxu0 0.0
        %2746 = vmatpush1.msra.mxu0 %v2367
        %2747 = vmatprep.subr.mxu0 0.0
        %2748 = vmatpush1.msra.mxu0 %v2368
        %2749 = vmatprep.subr.mxu0 0.0
        %2750 = vmatpush1.msra.mxu0 %v2369
        %2751 = vmatprep.subr.mxu0 0.0
        %2752 = vmatpush1.msra.mxu0 %v2370
        %2753 = vmatprep.subr.mxu0 0.0
        %2754 = vmatpush1.msra.mxu0 %v2371
        %2755 = vmatprep.subr.mxu0 0.0
        %2756 = vmatpush1.msra.mxu0 %v2372
        %2757 = vmatprep.subr.mxu0 0.0
        %2758 = vmatpush1.msra.mxu0 %v2373
        %2759 = vmatprep.subr.mxu0 0.0
        %2760 = vmatpush1.msra.mxu0 %v2374
        %2761 = vmatprep.subr.mxu0 0.0
        %2762 = vmatpush1.msra.mxu0 %v2375
        %2763 = vmatprep.subr.mxu0 0.0
        %2764 = vmatpush1.msra.mxu0 %v2376
        %2765 = vmatprep.subr.mxu0 0.0
        %2766 = vmatpush1.msra.mxu0 %v2377
        %2767 = vmatprep.subr.mxu0 0.0
        %2768 = vmatpush1.msra.mxu0 0.0
        %2769 = vmatprep.subr.mxu0 0.0
        %2770 = vmatpush1.msra.mxu0 0.0
        %2771 = vmatprep.subr.mxu0 0.0
        %2772 = vmatpush1.msra.mxu0 0.0
        %2773 = vmatprep.subr.mxu0 0.0
        %2774 = vmatpush1.msra.mxu0 0.0
        %2775 = vmatprep.subr.mxu0 0.0
        %2776 = vmatpush1.msra.mxu0 0.0
        %2777 = vmatprep.subr.mxu0 0.0
        %2778 = vmatpush1.msra.mxu0 0.0
        %2779 = vmatprep.subr.mxu0 0.0
        %2780 = vmatpush1.msra.mxu0 0.0
        %2781 = vmatprep.subr.mxu0 0.0
        %2782 = vmatpush1.msra.mxu0 0.0
        %2783 = vmatprep.subr.mxu0 0.0
        %2784 = vmatpush1.msra.mxu0 0.0
        %2785 = vmatprep.subr.mxu0 0.0
        %2786 = vmatpush1.msra.mxu0 0.0
        %2787 = vmatprep.subr.mxu0 0.0
        %2788 = vmatpush1.msra.mxu0 0.0
        %2789 = vmatprep.subr.mxu0 0.0
        %2790 = vmatpush1.msra.mxu0 0.0
        %2791 = vmatprep.subr.mxu0 0.0
        %2792 = vmatpush1.msra.mxu0 0.0
        %2793 = vmatprep.subr.mxu0 0.0
        %2794 = vmatpush1.msra.mxu0 0.0
        %2795 = vmatprep.subr.mxu0 0.0
        %2796 = vmatpush1.msra.mxu0 0.0
        %2797 = vmatprep.subr.mxu0 0.0
        %2798 = vmatpush1.msra.mxu0 0.0
        %2799 = vmatprep.mubr.f32.mxu0 0.0
        %2800 = vmatmul.mubr.f32.gmra.mrb[0].mxu0 %v1824
        %v2801 = vpop.f32.mrb[0].mxu0
        %v2802 = vadd.f32 %v2577, %v2801
        %v2803 = vpop.f32.mrb[0].mxu0
        %2804 = vmatprep.mubr.f32.mxu0 0.0
        %2805 = vmatmul.mubr.f32.gmra.mrb[0].mxu0 %v1825
        %v2806 = vpop.f32.mrb[0].mxu0
        %v2807 = vadd.f32 %v2582, %v2806
        %v2808 = vpop.f32.mrb[0].mxu0
        %2809 = vmatprep.mubr.f32.mxu0 0.0
        %2810 = vmatmul.mubr.f32.gmra.mrb[0].mxu0 %v1826
        %v2811 = vpop.f32.mrb[0].mxu0
        %v2812 = vadd.f32 %v2587, %v2811
        %v2813 = vpop.f32.mrb[0].mxu0
        %2814 = vmatprep.mubr.f32.mxu0 0.0
        %2815 = vmatmul.mubr.f32.gmra.mrb[0].mxu0 %v1827
        %v2816 = vpop.f32.mrb[0].mxu0
        %v2817 = vadd.f32 %v2592, %v2816
        %v2818 = vpop.f32.mrb[0].mxu0
        %2819 = vmatprep.mubr.f32.mxu0 0.0
        %2820 = vmatmul.mubr.f32.gmra.mrb[0].mxu0 %v1828
        %v2821 = vpop.f32.mrb[0].mxu0
        %v2822 = vadd.f32 %v2597, %v2821
        %v2823 = vpop.f32.mrb[0].mxu0
        %2824 = vmatprep.mubr.f32.mxu0 0.0
        %2825 = vmatmul.mubr.f32.gmra.mrb[0].mxu0 %v1829
        %v2826 = vpop.f32.mrb[0].mxu0
        %v2827 = vadd.f32 %v2602, %v2826
        %v2828 = vpop.f32.mrb[0].mxu0
        %2829 = vmatprep.mubr.f32.mxu0 0.0
        %2830 = vmatmul.mubr.f32.gmra.mrb[0].mxu0 %v1830
        %v2831 = vpop.f32.mrb[0].mxu0
        %v2832 = vadd.f32 %v2607, %v2831
        %v2833 = vpop.f32.mrb[0].mxu0
        %2834 = vmatprep.mubr.f32.mxu0 0.0
        %2835 = vmatmul.mubr.f32.gmra.mrb[0].mxu0 %v1831
        %v2836 = vpop.f32.mrb[0].mxu0
        %v2837 = vadd.f32 %v2612, %v2836
        %v2838 = vpop.f32.mrb[0].mxu0
        %2839 = vmatprep.mubr.f32.mxu0 0.0
        %2840 = vmatmul.mubr.f32.gmra.mrb[0].mxu0 %v1832
        %v2841 = vpop.f32.mrb[0].mxu0
        %v2842 = vadd.f32 %v2617, %v2841
        %v2843 = vpop.f32.mrb[0].mxu0
        %2844 = vmatprep.mubr.f32.mxu0 0.0
        %2845 = vmatmul.mubr.f32.gmra.mrb[0].mxu0 %v1833
        %v2846 = vpop.f32.mrb[0].mxu0
        %v2847 = vadd.f32 %v2622, %v2846
        %v2848 = vpop.f32.mrb[0].mxu0
        %2849 = vmatprep.mubr.f32.mxu0 0.0
        %2850 = vmatmul.mubr.f32.gmra.mrb[0].mxu0 %v1834
        %v2851 = vpop.f32.mrb[0].mxu0
        %v2852 = vadd.f32 %v2627, %v2851
        %v2853 = vpop.f32.mrb[0].mxu0
        %2854 = vmatprep.mubr.f32.mxu0 0.0
        %2855 = vmatmul.mubr.f32.gmra.mrb[0].mxu0 %v1835
        %v2856 = vpop.f32.mrb[0].mxu0
        %v2857 = vadd.f32 %v2632, %v2856
        %v2858 = vpop.f32.mrb[0].mxu0
        %2859 = vmatprep.mubr.f32.mxu0 0.0
        %2860 = vmatmul.mubr.f32.gmra.mrb[0].mxu0 %v1836
        %v2861 = vpop.f32.mrb[0].mxu0
        %v2862 = vadd.f32 %v2637, %v2861
        %v2863 = vpop.f32.mrb[0].mxu0
        %2864 = vmatprep.mubr.f32.mxu0 0.0
        %2865 = vmatmul.mubr.f32.gmra.mrb[0].mxu0 %v1837
        %v2866 = vpop.f32.mrb[0].mxu0
        %v2867 = vadd.f32 %v2642, %v2866
        %v2868 = vpop.f32.mrb[0].mxu0
        %2869 = vmatprep.mubr.f32.mxu0 0.0
        %2870 = vmatmul.mubr.f32.gmra.mrb[0].mxu0 %v1838
        %v2871 = vpop.f32.mrb[0].mxu0
        %v2872 = vadd.f32 %v2647, %v2871
        %v2873 = vpop.f32.mrb[0].mxu0
        %2874 = vmatprep.mubr.f32.mxu0 0.0
        %2875 = vmatmul.mubr.f32.gmra.mrb[0].mxu0 %v1839
        %v2876 = vpop.f32.mrb[0].mxu0
        %v2877 = vadd.f32 %v2652, %v2876
        %v2878 = vpop.f32.mrb[0].mxu0
        %2879 = vmatprep.mubr.f32.mxu0 0.0
        %2880 = vmatmul.mubr.f32.gmra.mrb[0].mxu0 %v1840
        %v2881 = vpop.f32.mrb[0].mxu0
        %v2882 = vadd.f32 %v2657, %v2881
        %v2883 = vpop.f32.mrb[0].mxu0
        %2884 = vmatprep.mubr.f32.mxu0 0.0
        %2885 = vmatmul.mubr.f32.gmra.mrb[0].mxu0 %v1841
        %v2886 = vpop.f32.mrb[0].mxu0
        %v2887 = vadd.f32 %v2662, %v2886
        %v2888 = vpop.f32.mrb[0].mxu0
        %2889 = vmatprep.mubr.f32.mxu0 0.0
        %2890 = vmatmul.mubr.f32.gmra.mrb[0].mxu0 %v1842
        %v2891 = vpop.f32.mrb[0].mxu0
        %v2892 = vadd.f32 %v2667, %v2891
        %v2893 = vpop.f32.mrb[0].mxu0
        %2894 = vmatprep.mubr.f32.mxu0 0.0
        %2895 = vmatmul.mubr.f32.gmra.mrb[0].mxu0 %v1843
        %v2896 = vpop.f32.mrb[0].mxu0
        %v2897 = vadd.f32 %v2672, %v2896
        %v2898 = vpop.f32.mrb[0].mxu0
        %2899 = vmatprep.mubr.f32.mxu0 0.0
        %2900 = vmatmul.mubr.f32.gmra.mrb[0].mxu0 %v1844
        %v2901 = vpop.f32.mrb[0].mxu0
        %v2902 = vadd.f32 %v2677, %v2901
        %v2903 = vpop.f32.mrb[0].mxu0
        %2904 = vmatprep.mubr.f32.mxu0 0.0
        %2905 = vmatmul.mubr.f32.gmra.mrb[0].mxu0 %v1845
        %v2906 = vpop.f32.mrb[0].mxu0
        %v2907 = vadd.f32 %v2682, %v2906
        %v2908 = vpop.f32.mrb[0].mxu0
        %2909 = vmatprep.mubr.f32.mxu0 0.0
        %2910 = vmatmul.mubr.f32.gmra.mrb[0].mxu0 %v1846
        %v2911 = vpop.f32.mrb[0].mxu0
        %v2912 = vadd.f32 %v2687, %v2911
        %v2913 = vpop.f32.mrb[0].mxu0
        %2914 = vmatprep.mubr.f32.mxu0 0.0
        %2915 = vmatmul.mubr.f32.gmra.mrb[0].mxu0 %v1847
        %v2916 = vpop.f32.mrb[0].mxu0
        %v2917 = vadd.f32 %v2692, %v2916
        %v2918 = vpop.f32.mrb[0].mxu0
        %2919 = vmatprep.mubr.f32.mxu0 0.0
        %2920 = vmatmul.mubr.f32.gmra.mrb[0].mxu0 %v1848
        %v2921 = vpop.f32.mrb[0].mxu0
        %v2922 = vadd.f32 %v2697, %v2921
        %v2923 = vpop.f32.mrb[0].mxu0
        %2924 = vmatprep.mubr.f32.mxu0 0.0
        %2925 = vmatmul.mubr.f32.gmra.mrb[0].mxu0 %v1849
        %v2926 = vpop.f32.mrb[0].mxu0
        %v2927 = vadd.f32 %v2702, %v2926
        %v2928 = vpop.f32.mrb[0].mxu0
        %2929 = vmatprep.mubr.f32.mxu0 0.0
        %2930 = vmatmul.mubr.f32.gmra.mrb[0].mxu0 %v1850
        %v2931 = vpop.f32.mrb[0].mxu0
        %v2932 = vadd.f32 %v2707, %v2931
        %v2933 = vpop.f32.mrb[0].mxu0
        %2934 = vmatprep.mubr.f32.mxu0 0.0
        %2935 = vmatmul.mubr.f32.gmra.mrb[0].mxu0 %v1851
        %v2936 = vpop.f32.mrb[0].mxu0
        %v2937 = vadd.f32 %v2712, %v2936
        %v2938 = vpop.f32.mrb[0].mxu0
        %2939 = vmatprep.mubr.f32.mxu0 0.0
        %2940 = vmatmul.mubr.f32.gmra.mrb[0].mxu0 %v1852
        %v2941 = vpop.f32.mrb[0].mxu0
        %v2942 = vadd.f32 %v2717, %v2941
        %v2943 = vpop.f32.mrb[0].mxu0
        %2944 = vmatprep.mubr.f32.mxu0 0.0
        %2945 = vmatmul.mubr.f32.gmra.mrb[0].mxu0 %v1853
        %v2946 = vpop.f32.mrb[0].mxu0
        %v2947 = vadd.f32 %v2722, %v2946
        %v2948 = vpop.f32.mrb[0].mxu0
        %2949 = vmatprep.mubr.f32.mxu0 0.0
        %2950 = vmatmul.mubr.f32.gmra.mrb[0].mxu0 %v1854
        %v2951 = vpop.f32.mrb[0].mxu0
        %v2952 = vadd.f32 %v2727, %v2951
        %v2953 = vpop.f32.mrb[0].mxu0
        %2954 = vmatprep.mubr.f32.mxu0 0.0
        %2955 = vmatmul.mubr.f32.gmra.mrb[0].mxu0 %v1855
        %v2956 = vpop.f32.mrb[0].mxu0
        %v2957 = vadd.f32 %v2732, %v2956
        %v2958 = vpop.f32.mrb[0].mxu0
        %2959 = vdwg.mxu0
        %v2960 = vld [vmem:[#allocation2 + $0x10] sm:$0xff]
        %v2961 = vld [vmem:[#allocation2 + $0x18] sm:$0xff]
        %v2962 = vld [vmem:[#allocation2 + $0x20] sm:$0xff]
        %v2963 = vld [vmem:[#allocation2 + $0x28] sm:$0xff]
        %v2964 = vld [vmem:[#allocation2 + $0x30] sm:$0xff]
        %v2965 = vld [vmem:[#allocation2 + $0x38] sm:$0xff]
        %v2966 = vld [vmem:[#allocation2 + $0x40] sm:$0xff]
        %v2967 = vld [vmem:[#allocation2 + $0x48] sm:$0xff]
        %v2968 = vld [vmem:[#allocation2 + $0x50] sm:$0xff]
        %v2969 = vld [vmem:[#allocation2 + $0x58] sm:$0xff]
        %v2970 = vld [vmem:[#allocation2 + $0x60] sm:$0xff]
        %v2971 = vld [vmem:[#allocation2 + $0x68] sm:$0xff]
        %v2972 = vld [vmem:[#allocation2 + $0x70] sm:$0xff]
        %v2973 = vld [vmem:[#allocation2 + $0x78] sm:$0xff]
        %v2974 = vld [vmem:[#allocation2 + $0x80] sm:$0xff]
        %v2975 = vld [vmem:[#allocation2 + $0x88] sm:$0xff]
        %v2976 = vld [vmem:[#allocation2 + $0x90] sm:$0xff]
        %v2977 = vld [vmem:[#allocation2 + $0x98] sm:$0xff]
        %v2978 = vld [vmem:[#allocation2 + $0xa0] sm:$0xff]
        %v2979 = vld [vmem:[#allocation2 + $0xa8] sm:$0xff]
        %v2980 = vld [vmem:[#allocation2 + $0xb0] sm:$0xff]
        %v2981 = vld [vmem:[#allocation2 + $0xb8] sm:$0xff]
        %v2982 = vld [vmem:[#allocation2 + $0xc0] sm:$0xff]
        %v2983 = vld [vmem:[#allocation2 + $0xc8] sm:$0xff]
        %v2984 = vld [vmem:[#allocation2 + $0xd0] sm:$0xff]
        %v2985 = vld [vmem:[#allocation2 + $0xd8] sm:$0xff]
        %v2986 = vld [vmem:[#allocation2 + $0xe0] sm:$0xff]
        %v2987 = vld [vmem:[#allocation2 + $0xe8] sm:$0xff]
        %v2988 = vld [vmem:[#allocation2 + $0xf0] sm:$0xff]
        %v2989 = vld [vmem:[#allocation2 + $0xf8] sm:$0xff]
        %v2990 = vld [vmem:[#allocation2 + $0x100] sm:$0xff]
        %v2991 = vld [vmem:[#allocation2 + $0x108] sm:$0xff]
        %v2992 = vld [vmem:[#allocation2 + $0x110] sm:$0xff]
        %v2993 = vld [vmem:[#allocation2 + $0x118] sm:$0xff]
        %v2994 = vld [vmem:[#allocation2 + $0x120] sm:$0xff]
        %v2995 = vld [vmem:[#allocation2 + $0x128] sm:$0xff]
        %s2996 = scalar_lea.vmem [#allocation14], 256
        %v2997 = vld [vmem:[%s2996] sm:$0xff]
        %v2998 = vld [vmem:[%s2996 + $0x8] sm:$0xff]
        %v2999 = vld [vmem:[%s2996 + $0x10] sm:$0xff]
        %v3000 = vld [vmem:[%s2996 + $0x18] sm:$0xff]
        %v3001 = vld [vmem:[%s2996 + $0x20] sm:$0xff]
        %v3002 = vld [vmem:[%s2996 + $0x28] sm:$0xff]
        %v3003 = vld [vmem:[%s2996 + $0x30] sm:$0xff]
        %v3004 = vld [vmem:[%s2996 + $0x38] sm:$0xff]
        %v3005 = vld [vmem:[%s2996 + $0x40] sm:$0xff]
        %v3006 = vld [vmem:[%s2996 + $0x48] sm:$0xff]
        %v3007 = vld [vmem:[%s2996 + $0x50] sm:$0xff]
        %v3008 = vld [vmem:[%s2996 + $0x58] sm:$0xff]
        %v3009 = vld [vmem:[%s2996 + $0x60] sm:$0xff]
        %v3010 = vld [vmem:[%s2996 + $0x68] sm:$0xff]
        %v3011 = vld [vmem:[%s2996 + $0x70] sm:$0xff]
        %v3012 = vld [vmem:[%s2996 + $0x78] sm:$0xff]
        %v3013 = vld [vmem:[%s2996 + $0x80] sm:$0xff]
        %v3014 = vld [vmem:[%s2996 + $0x88] sm:$0xff]
        %v3015 = vld [vmem:[%s2996 + $0x90] sm:$0xff]
        %v3016 = vld [vmem:[%s2996 + $0x98] sm:$0xff]
        %v3017 = vld [vmem:[%s2996 + $0xa0] sm:$0xff]
        %v3018 = vld [vmem:[%s2996 + $0xa8] sm:$0xff]
        %v3019 = vld [vmem:[%s2996 + $0xb0] sm:$0xff]
        %v3020 = vld [vmem:[%s2996 + $0xb8] sm:$0xff]
        %v3021 = vld [vmem:[%s2996 + $0xc0] sm:$0xff]
        %v3022 = vld [vmem:[%s2996 + $0xc8] sm:$0xff]
        %v3023 = vld [vmem:[%s2996 + $0xd0] sm:$0xff]
        %v3024 = vld [vmem:[%s2996 + $0xd8] sm:$0xff]
        %v3025 = vld [vmem:[%s2996 + $0xe0] sm:$0xff]
        %v3026 = vld [vmem:[%s2996 + $0xe8] sm:$0xff]
        %v3027 = vld [vmem:[%s2996 + $0xf0] sm:$0xff]
        %v3028 = vld [vmem:[%s2996 + $0xf8] sm:$0xff]
        %3029 = vmatprep.subr.mxu0 0.0
        %3030 = vmatpush1.msra.mxu0 %v2997
        %3031 = vmatprep.subr.mxu0 0.0
        %3032 = vmatpush1.msra.mxu0 %v2998
        %3033 = vmatprep.subr.mxu0 0.0
        %3034 = vmatpush1.msra.mxu0 %v2999
        %3035 = vmatprep.subr.mxu0 0.0
        %3036 = vmatpush1.msra.mxu0 %v3000
        %3037 = vmatprep.subr.mxu0 0.0
        %3038 = vmatpush1.msra.mxu0 %v3001
        %3039 = vmatprep.subr.mxu0 0.0
        %3040 = vmatpush1.msra.mxu0 %v3002
        %3041 = vmatprep.subr.mxu0 0.0
        %3042 = vmatpush1.msra.mxu0 %v3003
        %3043 = vmatprep.subr.mxu0 0.0
        %3044 = vmatpush1.msra.mxu0 %v3004
        %3045 = vmatprep.subr.mxu0 0.0
        %3046 = vmatpush1.msra.mxu0 %v3005
        %3047 = vmatprep.subr.mxu0 0.0
        %3048 = vmatpush1.msra.mxu0 %v3006
        %3049 = vmatprep.subr.mxu0 0.0
        %3050 = vmatpush1.msra.mxu0 %v3007
        %3051 = vmatprep.subr.mxu0 0.0
        %3052 = vmatpush1.msra.mxu0 %v3008
        %3053 = vmatprep.subr.mxu0 0.0
        %3054 = vmatpush1.msra.mxu0 %v3009
        %3055 = vmatprep.subr.mxu0 0.0
        %3056 = vmatpush1.msra.mxu0 %v3010
        %3057 = vmatprep.subr.mxu0 0.0
        %3058 = vmatpush1.msra.mxu0 %v3011
        %3059 = vmatprep.subr.mxu0 0.0
        %3060 = vmatpush1.msra.mxu0 %v3012
        %3061 = vmatprep.subr.mxu0 0.0
        %3062 = vmatpush1.msra.mxu0 %v3013
        %3063 = vmatprep.subr.mxu0 0.0
        %3064 = vmatpush1.msra.mxu0 %v3014
        %3065 = vmatprep.subr.mxu0 0.0
        %3066 = vmatpush1.msra.mxu0 %v3015
        %3067 = vmatprep.subr.mxu0 0.0
        %3068 = vmatpush1.msra.mxu0 %v3016
        %3069 = vmatprep.subr.mxu0 0.0
        %3070 = vmatpush1.msra.mxu0 %v3017
        %3071 = vmatprep.subr.mxu0 0.0
        %3072 = vmatpush1.msra.mxu0 %v3018
        %3073 = vmatprep.subr.mxu0 0.0
        %3074 = vmatpush1.msra.mxu0 %v3019
        %3075 = vmatprep.subr.mxu0 0.0
        %3076 = vmatpush1.msra.mxu0 %v3020
        %3077 = vmatprep.subr.mxu0 0.0
        %3078 = vmatpush1.msra.mxu0 %v3021
        %3079 = vmatprep.subr.mxu0 0.0
        %3080 = vmatpush1.msra.mxu0 %v3022
        %3081 = vmatprep.subr.mxu0 0.0
        %3082 = vmatpush1.msra.mxu0 %v3023
        %3083 = vmatprep.subr.mxu0 0.0
        %3084 = vmatpush1.msra.mxu0 %v3024
        %3085 = vmatprep.subr.mxu0 0.0
        %3086 = vmatpush1.msra.mxu0 %v3025
        %3087 = vmatprep.subr.mxu0 0.0
        %3088 = vmatpush1.msra.mxu0 %v3026
        %3089 = vmatprep.subr.mxu0 0.0
        %3090 = vmatpush1.msra.mxu0 %v3027
        %3091 = vmatprep.subr.mxu0 0.0
        %3092 = vmatpush1.msra.mxu0 %v3028
        %3093 = vmatprep.mubr.f32.mxu0 %v2964
        %3094 = vmatmul.mubr.f32.gmra.mrb[0].mxu0 %v2960
        %v3095 = vpop.f32.mrb[0].mxu0
        %v3096 = vadd.f32 0.0, %v3095
        %v3097 = vpop.f32.mrb[0].mxu0
        %3098 = vmatprep.mubr.f32.mxu0 %v2965
        %3099 = vmatmul.mubr.f32.gmra.mrb[0].mxu0 %v2961
        %v3100 = vpop.f32.mrb[0].mxu0
        %v3101 = vadd.f32 0.0, %v3100
        %v3102 = vpop.f32.mrb[0].mxu0
        %3103 = vmatprep.mubr.f32.mxu0 %v2966
        %3104 = vmatmul.mubr.f32.gmra.mrb[0].mxu0 %v2962
        %v3105 = vpop.f32.mrb[0].mxu0
        %v3106 = vadd.f32 0.0, %v3105
        %v3107 = vpop.f32.mrb[0].mxu0
        %3108 = vmatprep.mubr.f32.mxu0 %v2967
        %3109 = vmatmul.mubr.f32.gmra.mrb[0].mxu0 %v2963
        %v3110 = vpop.f32.mrb[0].mxu0
        %v3111 = vadd.f32 0.0, %v3110
        %v3112 = vpop.f32.mrb[0].mxu0
        %3113 = vmatprep.mubr.f32.mxu0 %v2968
        %3114 = vmatmul.mubr.f32.gmra.mrb[0].mxu0 %v2964
        %v3115 = vpop.f32.mrb[0].mxu0
        %v3116 = vadd.f32 0.0, %v3115
        %v3117 = vpop.f32.mrb[0].mxu0
        %3118 = vmatprep.mubr.f32.mxu0 %v2969
        %3119 = vmatmul.mubr.f32.gmra.mrb[0].mxu0 %v2965
        %v3120 = vpop.f32.mrb[0].mxu0
        %v3121 = vadd.f32 0.0, %v3120
        %v3122 = vpop.f32.mrb[0].mxu0
        %3123 = vmatprep.mubr.f32.mxu0 %v2970
        %3124 = vmatmul.mubr.f32.gmra.mrb[0].mxu0 %v2966
        %v3125 = vpop.f32.mrb[0].mxu0
        %v3126 = vadd.f32 0.0, %v3125
        %v3127 = vpop.f32.mrb[0].mxu0
        %3128 = vmatprep.mubr.f32.mxu0 %v2971
        %3129 = vmatmul.mubr.f32.gmra.mrb[0].mxu0 %v2967
        %v3130 = vpop.f32.mrb[0].mxu0
        %v3131 = vadd.f32 0.0, %v3130
        %v3132 = vpop.f32.mrb[0].mxu0
        %3133 = vmatprep.mubr.f32.mxu0 %v2972
        %3134 = vmatmul.mubr.f32.gmra.mrb[0].mxu0 %v2968
        %v3135 = vpop.f32.mrb[0].mxu0
        %v3136 = vadd.f32 0.0, %v3135
        %v3137 = vpop.f32.mrb[0].mxu0
        %3138 = vmatprep.mubr.f32.mxu0 %v2973
        %3139 = vmatmul.mubr.f32.gmra.mrb[0].mxu0 %v2969
        %v3140 = vpop.f32.mrb[0].mxu0
        %v3141 = vadd.f32 0.0, %v3140
        %v3142 = vpop.f32.mrb[0].mxu0
        %3143 = vmatprep.mubr.f32.mxu0 %v2974
        %3144 = vmatmul.mubr.f32.gmra.mrb[0].mxu0 %v2970
        %v3145 = vpop.f32.mrb[0].mxu0
        %v3146 = vadd.f32 0.0, %v3145
        %v3147 = vpop.f32.mrb[0].mxu0
        %3148 = vmatprep.mubr.f32.mxu0 %v2975
        %3149 = vmatmul.mubr.f32.gmra.mrb[0].mxu0 %v2971
        %v3150 = vpop.f32.mrb[0].mxu0
        %v3151 = vadd.f32 0.0, %v3150
        %v3152 = vpop.f32.mrb[0].mxu0
        %3153 = vmatprep.mubr.f32.mxu0 %v2976
        %3154 = vmatmul.mubr.f32.gmra.mrb[0].mxu0 %v2972
        %v3155 = vpop.f32.mrb[0].mxu0
        %v3156 = vadd.f32 0.0, %v3155
        %v3157 = vpop.f32.mrb[0].mxu0
        %3158 = vmatprep.mubr.f32.mxu0 %v2977
        %3159 = vmatmul.mubr.f32.gmra.mrb[0].mxu0 %v2973
        %v3160 = vpop.f32.mrb[0].mxu0
        %v3161 = vadd.f32 0.0, %v3160
        %v3162 = vpop.f32.mrb[0].mxu0
        %3163 = vmatprep.mubr.f32.mxu0 %v2978
        %3164 = vmatmul.mubr.f32.gmra.mrb[0].mxu0 %v2974
        %v3165 = vpop.f32.mrb[0].mxu0
        %v3166 = vadd.f32 0.0, %v3165
        %v3167 = vpop.f32.mrb[0].mxu0
        %3168 = vmatprep.mubr.f32.mxu0 %v2979
        %3169 = vmatmul.mubr.f32.gmra.mrb[0].mxu0 %v2975
        %v3170 = vpop.f32.mrb[0].mxu0
        %v3171 = vadd.f32 0.0, %v3170
        %v3172 = vpop.f32.mrb[0].mxu0
        %3173 = vmatprep.mubr.f32.mxu0 %v2980
        %3174 = vmatmul.mubr.f32.gmra.mrb[0].mxu0 %v2976
        %v3175 = vpop.f32.mrb[0].mxu0
        %v3176 = vadd.f32 0.0, %v3175
        %v3177 = vpop.f32.mrb[0].mxu0
        %3178 = vmatprep.mubr.f32.mxu0 %v2981
        %3179 = vmatmul.mubr.f32.gmra.mrb[0].mxu0 %v2977
        %v3180 = vpop.f32.mrb[0].mxu0
        %v3181 = vadd.f32 0.0, %v3180
        %v3182 = vpop.f32.mrb[0].mxu0
        %3183 = vmatprep.mubr.f32.mxu0 %v2982
        %3184 = vmatmul.mubr.f32.gmra.mrb[0].mxu0 %v2978
        %v3185 = vpop.f32.mrb[0].mxu0
        %v3186 = vadd.f32 0.0, %v3185
        %v3187 = vpop.f32.mrb[0].mxu0
        %3188 = vmatprep.mubr.f32.mxu0 %v2983
        %3189 = vmatmul.mubr.f32.gmra.mrb[0].mxu0 %v2979
        %v3190 = vpop.f32.mrb[0].mxu0
        %v3191 = vadd.f32 0.0, %v3190
        %v3192 = vpop.f32.mrb[0].mxu0
        %3193 = vmatprep.mubr.f32.mxu0 %v2984
        %3194 = vmatmul.mubr.f32.gmra.mrb[0].mxu0 %v2980
        %v3195 = vpop.f32.mrb[0].mxu0
        %v3196 = vadd.f32 0.0, %v3195
        %v3197 = vpop.f32.mrb[0].mxu0
        %3198 = vmatprep.mubr.f32.mxu0 %v2985
        %3199 = vmatmul.mubr.f32.gmra.mrb[0].mxu0 %v2981
        %v3200 = vpop.f32.mrb[0].mxu0
        %v3201 = vadd.f32 0.0, %v3200
        %v3202 = vpop.f32.mrb[0].mxu0
        %3203 = vmatprep.mubr.f32.mxu0 %v2986
        %3204 = vmatmul.mubr.f32.gmra.mrb[0].mxu0 %v2982
        %v3205 = vpop.f32.mrb[0].mxu0
        %v3206 = vadd.f32 0.0, %v3205
        %v3207 = vpop.f32.mrb[0].mxu0
        %3208 = vmatprep.mubr.f32.mxu0 %v2987
        %3209 = vmatmul.mubr.f32.gmra.mrb[0].mxu0 %v2983
        %v3210 = vpop.f32.mrb[0].mxu0
        %v3211 = vadd.f32 0.0, %v3210
        %v3212 = vpop.f32.mrb[0].mxu0
        %3213 = vmatprep.mubr.f32.mxu0 %v2988
        %3214 = vmatmul.mubr.f32.gmra.mrb[0].mxu0 %v2984
        %v3215 = vpop.f32.mrb[0].mxu0
        %v3216 = vadd.f32 0.0, %v3215
        %v3217 = vpop.f32.mrb[0].mxu0
        %3218 = vmatprep.mubr.f32.mxu0 %v2989
        %3219 = vmatmul.mubr.f32.gmra.mrb[0].mxu0 %v2985
        %v3220 = vpop.f32.mrb[0].mxu0
        %v3221 = vadd.f32 0.0, %v3220
        %v3222 = vpop.f32.mrb[0].mxu0
        %3223 = vmatprep.mubr.f32.mxu0 %v2990
        %3224 = vmatmul.mubr.f32.gmra.mrb[0].mxu0 %v2986
        %v3225 = vpop.f32.mrb[0].mxu0
        %v3226 = vadd.f32 0.0, %v3225
        %v3227 = vpop.f32.mrb[0].mxu0
        %3228 = vmatprep.mubr.f32.mxu0 %v2991
        %3229 = vmatmul.mubr.f32.gmra.mrb[0].mxu0 %v2987
        %v3230 = vpop.f32.mrb[0].mxu0
        %v3231 = vadd.f32 0.0, %v3230
        %v3232 = vpop.f32.mrb[0].mxu0
        %3233 = vmatprep.mubr.f32.mxu0 %v2992
        %3234 = vmatmul.mubr.f32.gmra.mrb[0].mxu0 %v2988
        %v3235 = vpop.f32.mrb[0].mxu0
        %v3236 = vadd.f32 0.0, %v3235
        %v3237 = vpop.f32.mrb[0].mxu0
        %3238 = vmatprep.mubr.f32.mxu0 %v2993
        %3239 = vmatmul.mubr.f32.gmra.mrb[0].mxu0 %v2989
        %v3240 = vpop.f32.mrb[0].mxu0
        %v3241 = vadd.f32 0.0, %v3240
        %v3242 = vpop.f32.mrb[0].mxu0
        %3243 = vmatprep.mubr.f32.mxu0 %v2994
        %3244 = vmatmul.mubr.f32.gmra.mrb[0].mxu0 %v2990
        %v3245 = vpop.f32.mrb[0].mxu0
        %v3246 = vadd.f32 0.0, %v3245
        %v3247 = vpop.f32.mrb[0].mxu0
        %3248 = vmatprep.mubr.f32.mxu0 %v2995
        %3249 = vmatmul.mubr.f32.gmra.mrb[0].mxu0 %v2991
        %v3250 = vpop.f32.mrb[0].mxu0
        %v3251 = vadd.f32 0.0, %v3250
        %v3252 = vpop.f32.mrb[0].mxu0
        %3253 = vdwg.mxu0
        %v3254 = vadd.f32 %v2802, %v3096
        %v3255 = vadd.f32 %v2807, %v3101
        %v3256 = vadd.f32 %v2812, %v3106
        %v3257 = vadd.f32 %v2817, %v3111
        %v3258 = vadd.f32 %v2822, %v3116
        %v3259 = vadd.f32 %v2827, %v3121
        %v3260 = vadd.f32 %v2832, %v3126
        %v3261 = vadd.f32 %v2837, %v3131
        %v3262 = vadd.f32 %v2842, %v3136
        %v3263 = vadd.f32 %v2847, %v3141
        %v3264 = vadd.f32 %v2852, %v3146
        %v3265 = vadd.f32 %v2857, %v3151
        %v3266 = vadd.f32 %v2862, %v3156
        %v3267 = vadd.f32 %v2867, %v3161
        %v3268 = vadd.f32 %v2872, %v3166
        %v3269 = vadd.f32 %v2877, %v3171
        %v3270 = vadd.f32 %v2882, %v3176
        %v3271 = vadd.f32 %v2887, %v3181
        %v3272 = vadd.f32 %v2892, %v3186
        %v3273 = vadd.f32 %v2897, %v3191
        %v3274 = vadd.f32 %v2902, %v3196
        %v3275 = vadd.f32 %v2907, %v3201
        %v3276 = vadd.f32 %v2912, %v3206
        %v3277 = vadd.f32 %v2917, %v3211
        %v3278 = vadd.f32 %v2922, %v3216
        %v3279 = vadd.f32 %v2927, %v3221
        %v3280 = vadd.f32 %v2932, %v3226
        %v3281 = vadd.f32 %v2937, %v3231
        %v3282 = vadd.f32 %v2942, %v3236
        %v3283 = vadd.f32 %v2947, %v3241
        %v3284 = vadd.f32 %v2952, %v3246
        %v3285 = vadd.f32 %v2957, %v3251
        %v3286 = vld [vmem:[#allocation2 + $0x11] sm:$0xff]
        %v3287 = vld [vmem:[#allocation2 + $0x19] sm:$0xff]
        %v3288 = vld [vmem:[#allocation2 + $0x21] sm:$0xff]
        %v3289 = vld [vmem:[#allocation2 + $0x29] sm:$0xff]
        %v3290 = vld [vmem:[#allocation2 + $0x31] sm:$0xff]
        %v3291 = vld [vmem:[#allocation2 + $0x39] sm:$0xff]
        %v3292 = vld [vmem:[#allocation2 + $0x41] sm:$0xff]
        %v3293 = vld [vmem:[#allocation2 + $0x49] sm:$0xff]
        %v3294 = vld [vmem:[#allocation2 + $0x51] sm:$0xff]
        %v3295 = vld [vmem:[#allocation2 + $0x59] sm:$0xff]
        %v3296 = vld [vmem:[#allocation2 + $0x61] sm:$0xff]
        %v3297 = vld [vmem:[#allocation2 + $0x69] sm:$0xff]
        %v3298 = vld [vmem:[#allocation2 + $0x71] sm:$0xff]
        %v3299 = vld [vmem:[#allocation2 + $0x79] sm:$0xff]
        %v3300 = vld [vmem:[#allocation2 + $0x81] sm:$0xff]
        %v3301 = vld [vmem:[#allocation2 + $0x89] sm:$0xff]
        %v3302 = vld [vmem:[#allocation2 + $0x91] sm:$0xff]
        %v3303 = vld [vmem:[#allocation2 + $0x99] sm:$0xff]
        %v3304 = vld [vmem:[#allocation2 + $0xa1] sm:$0xff]
        %v3305 = vld [vmem:[#allocation2 + $0xa9] sm:$0xff]
        %v3306 = vld [vmem:[#allocation2 + $0xb1] sm:$0xff]
        %v3307 = vld [vmem:[#allocation2 + $0xb9] sm:$0xff]
        %v3308 = vld [vmem:[#allocation2 + $0xc1] sm:$0xff]
        %v3309 = vld [vmem:[#allocation2 + $0xc9] sm:$0xff]
        %v3310 = vld [vmem:[#allocation2 + $0xd1] sm:$0xff]
        %v3311 = vld [vmem:[#allocation2 + $0xd9] sm:$0xff]
        %v3312 = vld [vmem:[#allocation2 + $0xe1] sm:$0xff]
        %v3313 = vld [vmem:[#allocation2 + $0xe9] sm:$0xff]
        %v3314 = vld [vmem:[#allocation2 + $0xf1] sm:$0xff]
        %v3315 = vld [vmem:[#allocation2 + $0xf9] sm:$0xff]
        %v3316 = vld [vmem:[#allocation2 + $0x101] sm:$0xff]
        %v3317 = vld [vmem:[#allocation2 + $0x109] sm:$0xff]
        %v3318 = vmul.f32 %v3286, %v1143
        %v3319 = vmul.f32 %v3287, %v1144
        %v3320 = vmul.f32 %v3288, %v1145
        %v3321 = vmul.f32 %v3289, %v1146
        %v3322 = vmul.f32 %v3290, %v1147
        %v3323 = vmul.f32 %v3291, %v1148
        %v3324 = vmul.f32 %v3292, %v1149
        %v3325 = vmul.f32 %v3293, %v1150
        %v3326 = vmul.f32 %v3294, %v1151
        %v3327 = vmul.f32 %v3295, %v1152
        %v3328 = vmul.f32 %v3296, %v1153
        %v3329 = vmul.f32 %v3297, %v1154
        %v3330 = vmul.f32 %v3298, %v1155
        %v3331 = vmul.f32 %v3299, %v1156
        %v3332 = vmul.f32 %v3300, %v1157
        %v3333 = vmul.f32 %v3301, %v1158
        %v3334 = vmul.f32 %v3302, %v1159
        %v3335 = vmul.f32 %v3303, %v1160
        %v3336 = vmul.f32 %v3304, %v1161
        %v3337 = vmul.f32 %v3305, %v1162
        %v3338 = vmul.f32 %v3306, %v1163
        %v3339 = vmul.f32 %v3307, %v1164
        %v3340 = vmul.f32 %v3308, %v1165
        %v3341 = vmul.f32 %v3309, %v1166
        %v3342 = vmul.f32 %v3310, %v1167
        %v3343 = vmul.f32 %v3311, %v1168
        %v3344 = vmul.f32 %v3312, %v1169
        %v3345 = vmul.f32 %v3313, %v1170
        %v3346 = vmul.f32 %v3314, %v1171
        %v3347 = vmul.f32 %v3315, %v1172
        %v3348 = vmul.f32 %v3316, %v1173
        %v3349 = vmul.f32 %v3317, %v1174
        %v3350 = vld [vmem:[#allocation2 + $0x111] sm:$0xff]
        %v3351 = vld [vmem:[#allocation2 + $0x119] sm:$0xff]
        %v3352 = vld [vmem:[#allocation2 + $0x121] sm:$0xff]
        %v3353 = vld [vmem:[#allocation2 + $0x129] sm:$0xff]
        %v3354 = vmul.f32 %v3290, %v1143
        %v3355 = vmul.f32 %v3291, %v1144
        %v3356 = vmul.f32 %v3292, %v1145
        %v3357 = vmul.f32 %v3293, %v1146
        %v3358 = vmul.f32 %v3294, %v1147
        %v3359 = vmul.f32 %v3295, %v1148
        %v3360 = vmul.f32 %v3296, %v1149
        %v3361 = vmul.f32 %v3297, %v1150
        %v3362 = vmul.f32 %v3298, %v1151
        %v3363 = vmul.f32 %v3299, %v1152
        %v3364 = vmul.f32 %v3300, %v1153
        %v3365 = vmul.f32 %v3301, %v1154
        %v3366 = vmul.f32 %v3302, %v1155
        %v3367 = vmul.f32 %v3303, %v1156
        %v3368 = vmul.f32 %v3304, %v1157
        %v3369 = vmul.f32 %v3305, %v1158
        %v3370 = vmul.f32 %v3306, %v1159
        %v3371 = vmul.f32 %v3307, %v1160
        %v3372 = vmul.f32 %v3308, %v1161
        %v3373 = vmul.f32 %v3309, %v1162
        %v3374 = vmul.f32 %v3310, %v1163
        %v3375 = vmul.f32 %v3311, %v1164
        %v3376 = vmul.f32 %v3312, %v1165
        %v3377 = vmul.f32 %v3313, %v1166
        %v3378 = vmul.f32 %v3314, %v1167
        %v3379 = vmul.f32 %v3315, %v1168
        %v3380 = vmul.f32 %v3316, %v1169
        %v3381 = vmul.f32 %v3317, %v1170
        %v3382 = vmul.f32 %v3350, %v1171
        %v3383 = vmul.f32 %v3351, %v1172
        %v3384 = vmul.f32 %v3352, %v1173
        %v3385 = vmul.f32 %v3353, %v1174
        %s3386 = scalar_lea.vmem [#allocation14], 512
        %v3387 = vld [vmem:[%s3386] sm:$0xff]
        %v3388 = vld [vmem:[%s3386 + $0x8] sm:$0xff]
        %v3389 = vld [vmem:[%s3386 + $0x10] sm:$0xff]
        %v3390 = vld [vmem:[%s3386 + $0x18] sm:$0xff]
        %v3391 = vld [vmem:[%s3386 + $0x20] sm:$0xff]
        %v3392 = vld [vmem:[%s3386 + $0x28] sm:$0xff]
        %v3393 = vld [vmem:[%s3386 + $0x30] sm:$0xff]
        %v3394 = vld [vmem:[%s3386 + $0x38] sm:$0xff]
        %v3395 = vld [vmem:[%s3386 + $0x40] sm:$0xff]
        %v3396 = vld [vmem:[%s3386 + $0x48] sm:$0xff]
        %v3397 = vld [vmem:[%s3386 + $0x50] sm:$0xff]
        %v3398 = vld [vmem:[%s3386 + $0x58] sm:$0xff]
        %v3399 = vld [vmem:[%s3386 + $0x60] sm:$0xff]
        %v3400 = vld [vmem:[%s3386 + $0x68] sm:$0xff]
        %v3401 = vld [vmem:[%s3386 + $0x70] sm:$0xff]
        %v3402 = vld [vmem:[%s3386 + $0x78] sm:$0xff]
        %v3403 = vld [vmem:[%s3386 + $0x80] sm:$0xff]
        %v3404 = vld [vmem:[%s3386 + $0x88] sm:$0xff]
        %v3405 = vld [vmem:[%s3386 + $0x90] sm:$0xff]
        %v3406 = vld [vmem:[%s3386 + $0x98] sm:$0xff]
        %v3407 = vld [vmem:[%s3386 + $0xa0] sm:$0xff]
        %v3408 = vld [vmem:[%s3386 + $0xa8] sm:$0xff]
        %v3409 = vld [vmem:[%s3386 + $0xb0] sm:$0xff]
        %v3410 = vld [vmem:[%s3386 + $0xb8] sm:$0xff]
        %v3411 = vld [vmem:[%s3386 + $0xc0] sm:$0xff]
        %v3412 = vld [vmem:[%s3386 + $0xc8] sm:$0xff]
        %v3413 = vld [vmem:[%s3386 + $0xd0] sm:$0xff]
        %v3414 = vld [vmem:[%s3386 + $0xd8] sm:$0xff]
        %v3415 = vld [vmem:[%s3386 + $0xe0] sm:$0xff]
        %v3416 = vld [vmem:[%s3386 + $0xe8] sm:$0xff]
        %v3417 = vld [vmem:[%s3386 + $0xf0] sm:$0xff]
        %v3418 = vld [vmem:[%s3386 + $0xf8] sm:$0xff]
        %3419 = vmatprep.subr.mxu0 0.0
        %3420 = vmatpush1.msra.mxu0 %v3387
        %3421 = vmatprep.subr.mxu0 0.0
        %3422 = vmatpush1.msra.mxu0 %v3388
        %3423 = vmatprep.subr.mxu0 0.0
        %3424 = vmatpush1.msra.mxu0 %v3389
        %3425 = vmatprep.subr.mxu0 0.0
        %3426 = vmatpush1.msra.mxu0 %v3390
        %3427 = vmatprep.subr.mxu0 0.0
        %3428 = vmatpush1.msra.mxu0 %v3391
        %3429 = vmatprep.subr.mxu0 0.0
        %3430 = vmatpush1.msra.mxu0 %v3392
        %3431 = vmatprep.subr.mxu0 0.0
        %3432 = vmatpush1.msra.mxu0 %v3393
        %3433 = vmatprep.subr.mxu0 0.0
        %3434 = vmatpush1.msra.mxu0 %v3394
        %3435 = vmatprep.subr.mxu0 0.0
        %3436 = vmatpush1.msra.mxu0 %v3395
        %3437 = vmatprep.subr.mxu0 0.0
        %3438 = vmatpush1.msra.mxu0 %v3396
        %3439 = vmatprep.subr.mxu0 0.0
        %3440 = vmatpush1.msra.mxu0 %v3397
        %3441 = vmatprep.subr.mxu0 0.0
        %3442 = vmatpush1.msra.mxu0 %v3398
        %3443 = vmatprep.subr.mxu0 0.0
        %3444 = vmatpush1.msra.mxu0 %v3399
        %3445 = vmatprep.subr.mxu0 0.0
        %3446 = vmatpush1.msra.mxu0 %v3400
        %3447 = vmatprep.subr.mxu0 0.0
        %3448 = vmatpush1.msra.mxu0 %v3401
        %3449 = vmatprep.subr.mxu0 0.0
        %3450 = vmatpush1.msra.mxu0 %v3402
        %3451 = vmatprep.subr.mxu0 0.0
        %3452 = vmatpush1.msra.mxu0 %v3403
        %3453 = vmatprep.subr.mxu0 0.0
        %3454 = vmatpush1.msra.mxu0 %v3404
        %3455 = vmatprep.subr.mxu0 0.0
        %3456 = vmatpush1.msra.mxu0 %v3405
        %3457 = vmatprep.subr.mxu0 0.0
        %3458 = vmatpush1.msra.mxu0 %v3406
        %3459 = vmatprep.subr.mxu0 0.0
        %3460 = vmatpush1.msra.mxu0 %v3407
        %3461 = vmatprep.subr.mxu0 0.0
        %3462 = vmatpush1.msra.mxu0 %v3408
        %3463 = vmatprep.subr.mxu0 0.0
        %3464 = vmatpush1.msra.mxu0 %v3409
        %3465 = vmatprep.subr.mxu0 0.0
        %3466 = vmatpush1.msra.mxu0 %v3410
        %3467 = vmatprep.subr.mxu0 0.0
        %3468 = vmatpush1.msra.mxu0 %v3411
        %3469 = vmatprep.subr.mxu0 0.0
        %3470 = vmatpush1.msra.mxu0 %v3412
        %3471 = vmatprep.subr.mxu0 0.0
        %3472 = vmatpush1.msra.mxu0 %v3413
        %3473 = vmatprep.subr.mxu0 0.0
        %3474 = vmatpush1.msra.mxu0 %v3414
        %3475 = vmatprep.subr.mxu0 0.0
        %3476 = vmatpush1.msra.mxu0 %v3415
        %3477 = vmatprep.subr.mxu0 0.0
        %3478 = vmatpush1.msra.mxu0 %v3416
        %3479 = vmatprep.subr.mxu0 0.0
        %3480 = vmatpush1.msra.mxu0 %v3417
        %3481 = vmatprep.subr.mxu0 0.0
        %3482 = vmatpush1.msra.mxu0 %v3418
        %3483 = vmatprep.mubr.f32.mxu0 %v3354
        %3484 = vmatmul.mubr.f32.gmra.mrb[0].mxu0 %v3318
        %v3485 = vpop.f32.mrb[0].mxu0
        %v3486 = vadd.f32 0.0, %v3485
        %v3487 = vpop.f32.mrb[0].mxu0
        %3488 = vmatprep.mubr.f32.mxu0 %v3355
        %3489 = vmatmul.mubr.f32.gmra.mrb[0].mxu0 %v3319
        %v3490 = vpop.f32.mrb[0].mxu0
        %v3491 = vadd.f32 0.0, %v3490
        %v3492 = vpop.f32.mrb[0].mxu0
        %3493 = vmatprep.mubr.f32.mxu0 %v3356
        %3494 = vmatmul.mubr.f32.gmra.mrb[0].mxu0 %v3320
        %v3495 = vpop.f32.mrb[0].mxu0
        %v3496 = vadd.f32 0.0, %v3495
        %v3497 = vpop.f32.mrb[0].mxu0
        %3498 = vmatprep.mubr.f32.mxu0 %v3357
        %3499 = vmatmul.mubr.f32.gmra.mrb[0].mxu0 %v3321
        %v3500 = vpop.f32.mrb[0].mxu0
        %v3501 = vadd.f32 0.0, %v3500
        %v3502 = vpop.f32.mrb[0].mxu0
        %3503 = vmatprep.mubr.f32.mxu0 %v3358
        %3504 = vmatmul.mubr.f32.gmra.mrb[0].mxu0 %v3322
        %v3505 = vpop.f32.mrb[0].mxu0
        %v3506 = vadd.f32 0.0, %v3505
        %v3507 = vpop.f32.mrb[0].mxu0
        %3508 = vmatprep.mubr.f32.mxu0 %v3359
        %3509 = vmatmul.mubr.f32.gmra.mrb[0].mxu0 %v3323
        %v3510 = vpop.f32.mrb[0].mxu0
        %v3511 = vadd.f32 0.0, %v3510
        %v3512 = vpop.f32.mrb[0].mxu0
        %3513 = vmatprep.mubr.f32.mxu0 %v3360
        %3514 = vmatmul.mubr.f32.gmra.mrb[0].mxu0 %v3324
        %v3515 = vpop.f32.mrb[0].mxu0
        %v3516 = vadd.f32 0.0, %v3515
        %v3517 = vpop.f32.mrb[0].mxu0
        %3518 = vmatprep.mubr.f32.mxu0 %v3361
        %3519 = vmatmul.mubr.f32.gmra.mrb[0].mxu0 %v3325
        %v3520 = vpop.f32.mrb[0].mxu0
        %v3521 = vadd.f32 0.0, %v3520
        %v3522 = vpop.f32.mrb[0].mxu0
        %3523 = vmatprep.mubr.f32.mxu0 %v3362
        %3524 = vmatmul.mubr.f32.gmra.mrb[0].mxu0 %v3326
        %v3525 = vpop.f32.mrb[0].mxu0
        %v3526 = vadd.f32 0.0, %v3525
        %v3527 = vpop.f32.mrb[0].mxu0
        %3528 = vmatprep.mubr.f32.mxu0 %v3363
        %3529 = vmatmul.mubr.f32.gmra.mrb[0].mxu0 %v3327
        %v3530 = vpop.f32.mrb[0].mxu0
        %v3531 = vadd.f32 0.0, %v3530
        %v3532 = vpop.f32.mrb[0].mxu0
        %3533 = vmatprep.mubr.f32.mxu0 %v3364
        %3534 = vmatmul.mubr.f32.gmra.mrb[0].mxu0 %v3328
        %v3535 = vpop.f32.mrb[0].mxu0
        %v3536 = vadd.f32 0.0, %v3535
        %v3537 = vpop.f32.mrb[0].mxu0
        %3538 = vmatprep.mubr.f32.mxu0 %v3365
        %3539 = vmatmul.mubr.f32.gmra.mrb[0].mxu0 %v3329
        %v3540 = vpop.f32.mrb[0].mxu0
        %v3541 = vadd.f32 0.0, %v3540
        %v3542 = vpop.f32.mrb[0].mxu0
        %3543 = vmatprep.mubr.f32.mxu0 %v3366
        %3544 = vmatmul.mubr.f32.gmra.mrb[0].mxu0 %v3330
        %v3545 = vpop.f32.mrb[0].mxu0
        %v3546 = vadd.f32 0.0, %v3545
        %v3547 = vpop.f32.mrb[0].mxu0
        %3548 = vmatprep.mubr.f32.mxu0 %v3367
        %3549 = vmatmul.mubr.f32.gmra.mrb[0].mxu0 %v3331
        %v3550 = vpop.f32.mrb[0].mxu0
        %v3551 = vadd.f32 0.0, %v3550
        %v3552 = vpop.f32.mrb[0].mxu0
        %3553 = vmatprep.mubr.f32.mxu0 %v3368
        %3554 = vmatmul.mubr.f32.gmra.mrb[0].mxu0 %v3332
        %v3555 = vpop.f32.mrb[0].mxu0
        %v3556 = vadd.f32 0.0, %v3555
        %v3557 = vpop.f32.mrb[0].mxu0
        %3558 = vmatprep.mubr.f32.mxu0 %v3369
        %3559 = vmatmul.mubr.f32.gmra.mrb[0].mxu0 %v3333
        %v3560 = vpop.f32.mrb[0].mxu0
        %v3561 = vadd.f32 0.0, %v3560
        %v3562 = vpop.f32.mrb[0].mxu0
        %3563 = vmatprep.mubr.f32.mxu0 %v3370
        %3564 = vmatmul.mubr.f32.gmra.mrb[0].mxu0 %v3334
        %v3565 = vpop.f32.mrb[0].mxu0
        %v3566 = vadd.f32 0.0, %v3565
        %v3567 = vpop.f32.mrb[0].mxu0
        %3568 = vmatprep.mubr.f32.mxu0 %v3371
        %3569 = vmatmul.mubr.f32.gmra.mrb[0].mxu0 %v3335
        %v3570 = vpop.f32.mrb[0].mxu0
        %v3571 = vadd.f32 0.0, %v3570
        %v3572 = vpop.f32.mrb[0].mxu0
        %3573 = vmatprep.mubr.f32.mxu0 %v3372
        %3574 = vmatmul.mubr.f32.gmra.mrb[0].mxu0 %v3336
        %v3575 = vpop.f32.mrb[0].mxu0
        %v3576 = vadd.f32 0.0, %v3575
        %v3577 = vpop.f32.mrb[0].mxu0
        %3578 = vmatprep.mubr.f32.mxu0 %v3373
        %3579 = vmatmul.mubr.f32.gmra.mrb[0].mxu0 %v3337
        %v3580 = vpop.f32.mrb[0].mxu0
        %v3581 = vadd.f32 0.0, %v3580
        %v3582 = vpop.f32.mrb[0].mxu0
        %3583 = vmatprep.mubr.f32.mxu0 %v3374
        %3584 = vmatmul.mubr.f32.gmra.mrb[0].mxu0 %v3338
        %v3585 = vpop.f32.mrb[0].mxu0
        %v3586 = vadd.f32 0.0, %v3585
        %v3587 = vpop.f32.mrb[0].mxu0
        %3588 = vmatprep.mubr.f32.mxu0 %v3375
        %3589 = vmatmul.mubr.f32.gmra.mrb[0].mxu0 %v3339
        %v3590 = vpop.f32.mrb[0].mxu0
        %v3591 = vadd.f32 0.0, %v3590
        %v3592 = vpop.f32.mrb[0].mxu0
        %3593 = vmatprep.mubr.f32.mxu0 %v3376
        %3594 = vmatmul.mubr.f32.gmra.mrb[0].mxu0 %v3340
        %v3595 = vpop.f32.mrb[0].mxu0
        %v3596 = vadd.f32 0.0, %v3595
        %v3597 = vpop.f32.mrb[0].mxu0
        %3598 = vmatprep.mubr.f32.mxu0 %v3377
        %3599 = vmatmul.mubr.f32.gmra.mrb[0].mxu0 %v3341
        %v3600 = vpop.f32.mrb[0].mxu0
        %v3601 = vadd.f32 0.0, %v3600
        %v3602 = vpop.f32.mrb[0].mxu0
        %3603 = vmatprep.mubr.f32.mxu0 %v3378
        %3604 = vmatmul.mubr.f32.gmra.mrb[0].mxu0 %v3342
        %v3605 = vpop.f32.mrb[0].mxu0
        %v3606 = vadd.f32 0.0, %v3605
        %v3607 = vpop.f32.mrb[0].mxu0
        %3608 = vmatprep.mubr.f32.mxu0 %v3379
        %3609 = vmatmul.mubr.f32.gmra.mrb[0].mxu0 %v3343
        %v3610 = vpop.f32.mrb[0].mxu0
        %v3611 = vadd.f32 0.0, %v3610
        %v3612 = vpop.f32.mrb[0].mxu0
        %3613 = vmatprep.mubr.f32.mxu0 %v3380
        %3614 = vmatmul.mubr.f32.gmra.mrb[0].mxu0 %v3344
        %v3615 = vpop.f32.mrb[0].mxu0
        %v3616 = vadd.f32 0.0, %v3615
        %v3617 = vpop.f32.mrb[0].mxu0
        %3618 = vmatprep.mubr.f32.mxu0 %v3381
        %3619 = vmatmul.mubr.f32.gmra.mrb[0].mxu0 %v3345
        %v3620 = vpop.f32.mrb[0].mxu0
        %v3621 = vadd.f32 0.0, %v3620
        %v3622 = vpop.f32.mrb[0].mxu0
        %3623 = vmatprep.mubr.f32.mxu0 %v3382
        %3624 = vmatmul.mubr.f32.gmra.mrb[0].mxu0 %v3346
        %v3625 = vpop.f32.mrb[0].mxu0
        %v3626 = vadd.f32 0.0, %v3625
        %v3627 = vpop.f32.mrb[0].mxu0
        %3628 = vmatprep.mubr.f32.mxu0 %v3383
        %3629 = vmatmul.mubr.f32.gmra.mrb[0].mxu0 %v3347
        %v3630 = vpop.f32.mrb[0].mxu0
        %v3631 = vadd.f32 0.0, %v3630
        %v3632 = vpop.f32.mrb[0].mxu0
        %3633 = vmatprep.mubr.f32.mxu0 %v3384
        %3634 = vmatmul.mubr.f32.gmra.mrb[0].mxu0 %v3348
        %v3635 = vpop.f32.mrb[0].mxu0
        %v3636 = vadd.f32 0.0, %v3635
        %v3637 = vpop.f32.mrb[0].mxu0
        %3638 = vmatprep.mubr.f32.mxu0 %v3385
        %3639 = vmatmul.mubr.f32.gmra.mrb[0].mxu0 %v3349
        %v3640 = vpop.f32.mrb[0].mxu0
        %v3641 = vadd.f32 0.0, %v3640
        %v3642 = vpop.f32.mrb[0].mxu0
        %3643 = vdwg.mxu0
        %v3644 = vadd.f32 %v3254, %v3486
        %v3645 = vadd.f32 %v3255, %v3491
        %v3646 = vadd.f32 %v3256, %v3496
        %v3647 = vadd.f32 %v3257, %v3501
        %v3648 = vadd.f32 %v3258, %v3506
        %v3649 = vadd.f32 %v3259, %v3511
        %v3650 = vadd.f32 %v3260, %v3516
        %v3651 = vadd.f32 %v3261, %v3521
        %v3652 = vadd.f32 %v3262, %v3526
        %v3653 = vadd.f32 %v3263, %v3531
        %v3654 = vadd.f32 %v3264, %v3536
        %v3655 = vadd.f32 %v3265, %v3541
        %v3656 = vadd.f32 %v3266, %v3546
        %v3657 = vadd.f32 %v3267, %v3551
        %v3658 = vadd.f32 %v3268, %v3556
        %v3659 = vadd.f32 %v3269, %v3561
        %v3660 = vadd.f32 %v3270, %v3566
        %v3661 = vadd.f32 %v3271, %v3571
        %v3662 = vadd.f32 %v3272, %v3576
        %v3663 = vadd.f32 %v3273, %v3581
        %v3664 = vadd.f32 %v3274, %v3586
        %v3665 = vadd.f32 %v3275, %v3591
        %v3666 = vadd.f32 %v3276, %v3596
        %v3667 = vadd.f32 %v3277, %v3601
        %v3668 = vadd.f32 %v3278, %v3606
        %v3669 = vadd.f32 %v3279, %v3611
        %v3670 = vadd.f32 %v3280, %v3616
        %v3671 = vadd.f32 %v3281, %v3621
        %v3672 = vadd.f32 %v3282, %v3626
        %v3673 = vadd.f32 %v3283, %v3631
        %v3674 = vadd.f32 %v3284, %v3636
        %v3675 = vadd.f32 %v3285, %v3641
        %v3676 = vld [vmem:[#allocation2 + $0x1f] sm:$0xff]
        %v3677 = vld [vmem:[#allocation2 + $0x27] sm:$0xff]
        %v3678 = vld [vmem:[#allocation2 + $0x2f] sm:$0xff]
        %v3679 = vld [vmem:[#allocation2 + $0x37] sm:$0xff]
        %v3680 = vld [vmem:[#allocation2 + $0x3f] sm:$0xff]
        %v3681 = vld [vmem:[#allocation2 + $0x47] sm:$0xff]
        %v3682 = vld [vmem:[#allocation2 + $0x4f] sm:$0xff]
        %v3683 = vld [vmem:[#allocation2 + $0x57] sm:$0xff]
        %v3684 = vld [vmem:[#allocation2 + $0x5f] sm:$0xff]
        %v3685 = vld [vmem:[#allocation2 + $0x67] sm:$0xff]
        %v3686 = vld [vmem:[#allocation2 + $0x6f] sm:$0xff]
        %v3687 = vld [vmem:[#allocation2 + $0x77] sm:$0xff]
        %v3688 = vld [vmem:[#allocation2 + $0x7f] sm:$0xff]
        %v3689 = vld [vmem:[#allocation2 + $0x87] sm:$0xff]
        %v3690 = vld [vmem:[#allocation2 + $0x8f] sm:$0xff]
        %v3691 = vld [vmem:[#allocation2 + $0x97] sm:$0xff]
        %v3692 = vld [vmem:[#allocation2 + $0x9f] sm:$0xff]
        %v3693 = vld [vmem:[#allocation2 + $0xa7] sm:$0xff]
        %v3694 = vld [vmem:[#allocation2 + $0xaf] sm:$0xff]
        %v3695 = vld [vmem:[#allocation2 + $0xb7] sm:$0xff]
        %v3696 = vld [vmem:[#allocation2 + $0xbf] sm:$0xff]
        %v3697 = vld [vmem:[#allocation2 + $0xc7] sm:$0xff]
        %v3698 = vld [vmem:[#allocation2 + $0xcf] sm:$0xff]
        %v3699 = vld [vmem:[#allocation2 + $0xd7] sm:$0xff]
        %v3700 = vld [vmem:[#allocation2 + $0xdf] sm:$0xff]
        %v3701 = vld [vmem:[#allocation2 + $0xe7] sm:$0xff]
        %v3702 = vld [vmem:[#allocation2 + $0xef] sm:$0xff]
        %v3703 = vld [vmem:[#allocation2 + $0xf7] sm:$0xff]
        %v3704 = vld [vmem:[#allocation2 + $0xff] sm:$0xff]
        %v3705 = vld [vmem:[#allocation2 + $0x107] sm:$0xff]
        %v3706 = vld [vmem:[#allocation2 + $0x10f] sm:$0xff]
        %v3707 = vld [vmem:[#allocation2 + $0x117] sm:$0xff]
        %v3708 = vmul.f32 %v3676, %v1047
        %v3709 = vmul.f32 %v3677, %v1048
        %v3710 = vmul.f32 %v3678, %v1049
        %v3711 = vmul.f32 %v3679, %v1050
        %v3712 = vmul.f32 %v3680, %v1051
        %v3713 = vmul.f32 %v3681, %v1052
        %v3714 = vmul.f32 %v3682, %v1053
        %v3715 = vmul.f32 %v3683, %v1054
        %v3716 = vmul.f32 %v3684, %v1055
        %v3717 = vmul.f32 %v3685, %v1056
        %v3718 = vmul.f32 %v3686, %v1057
        %v3719 = vmul.f32 %v3687, %v1058
        %v3720 = vmul.f32 %v3688, %v1059
        %v3721 = vmul.f32 %v3689, %v1060
        %v3722 = vmul.f32 %v3690, %v1061
        %v3723 = vmul.f32 %v3691, %v1062
        %v3724 = vmul.f32 %v3692, %v1063
        %v3725 = vmul.f32 %v3693, %v1064
        %v3726 = vmul.f32 %v3694, %v1065
        %v3727 = vmul.f32 %v3695, %v1066
        %v3728 = vmul.f32 %v3696, %v1067
        %v3729 = vmul.f32 %v3697, %v1068
        %v3730 = vmul.f32 %v3698, %v1069
        %v3731 = vmul.f32 %v3699, %v1070
        %v3732 = vmul.f32 %v3700, %v1071
        %v3733 = vmul.f32 %v3701, %v1072
        %v3734 = vmul.f32 %v3702, %v1073
        %v3735 = vmul.f32 %v3703, %v1074
        %v3736 = vmul.f32 %v3704, %v1075
        %v3737 = vmul.f32 %v3705, %v1076
        %v3738 = vmul.f32 %v3706, %v1077
        %v3739 = vmul.f32 %v3707, %v1078
        %v3740 = vld [vmem:[#allocation2 + $0x21] sm:$0xff]
        %v3741 = vld [vmem:[#allocation2 + $0x29] sm:$0xff]
        %v3742 = vld [vmem:[#allocation2 + $0x31] sm:$0xff]
        %v3743 = vld [vmem:[#allocation2 + $0x39] sm:$0xff]
        %v3744 = vld [vmem:[#allocation2 + $0x41] sm:$0xff]
        %v3745 = vld [vmem:[#allocation2 + $0x49] sm:$0xff]
        %v3746 = vld [vmem:[#allocation2 + $0x51] sm:$0xff]
        %v3747 = vld [vmem:[#allocation2 + $0x59] sm:$0xff]
        %v3748 = vld [vmem:[#allocation2 + $0x61] sm:$0xff]
        %v3749 = vld [vmem:[#allocation2 + $0x69] sm:$0xff]
        %v3750 = vld [vmem:[#allocation2 + $0x71] sm:$0xff]
        %v3751 = vld [vmem:[#allocation2 + $0x79] sm:$0xff]
        %v3752 = vld [vmem:[#allocation2 + $0x81] sm:$0xff]
        %v3753 = vld [vmem:[#allocation2 + $0x89] sm:$0xff]
        %v3754 = vld [vmem:[#allocation2 + $0x91] sm:$0xff]
        %v3755 = vld [vmem:[#allocation2 + $0x99] sm:$0xff]
        %v3756 = vld [vmem:[#allocation2 + $0xa1] sm:$0xff]
        %v3757 = vld [vmem:[#allocation2 + $0xa9] sm:$0xff]
        %v3758 = vld [vmem:[#allocation2 + $0xb1] sm:$0xff]
        %v3759 = vld [vmem:[#allocation2 + $0xb9] sm:$0xff]
        %v3760 = vld [vmem:[#allocation2 + $0xc1] sm:$0xff]
        %v3761 = vld [vmem:[#allocation2 + $0xc9] sm:$0xff]
        %v3762 = vld [vmem:[#allocation2 + $0xd1] sm:$0xff]
        %v3763 = vld [vmem:[#allocation2 + $0xd9] sm:$0xff]
        %v3764 = vld [vmem:[#allocation2 + $0xe1] sm:$0xff]
        %v3765 = vld [vmem:[#allocation2 + $0xe9] sm:$0xff]
        %v3766 = vld [vmem:[#allocation2 + $0xf1] sm:$0xff]
        %v3767 = vld [vmem:[#allocation2 + $0xf9] sm:$0xff]
        %v3768 = vld [vmem:[#allocation2 + $0x101] sm:$0xff]
        %v3769 = vld [vmem:[#allocation2 + $0x109] sm:$0xff]
        %v3770 = vld [vmem:[#allocation2 + $0x111] sm:$0xff]
        %v3771 = vld [vmem:[#allocation2 + $0x119] sm:$0xff]
        %v3772 = vmul.f32 %v3740, %v1143
        %v3773 = vmul.f32 %v3741, %v1144
        %v3774 = vmul.f32 %v3742, %v1145
        %v3775 = vmul.f32 %v3743, %v1146
        %v3776 = vmul.f32 %v3744, %v1147
        %v3777 = vmul.f32 %v3745, %v1148
        %v3778 = vmul.f32 %v3746, %v1149
        %v3779 = vmul.f32 %v3747, %v1150
        %v3780 = vmul.f32 %v3748, %v1151
        %v3781 = vmul.f32 %v3749, %v1152
        %v3782 = vmul.f32 %v3750, %v1153
        %v3783 = vmul.f32 %v3751, %v1154
        %v3784 = vmul.f32 %v3752, %v1155
        %v3785 = vmul.f32 %v3753, %v1156
        %v3786 = vmul.f32 %v3754, %v1157
        %v3787 = vmul.f32 %v3755, %v1158
        %v3788 = vmul.f32 %v3756, %v1159
        %v3789 = vmul.f32 %v3757, %v1160
        %v3790 = vmul.f32 %v3758, %v1161
        %v3791 = vmul.f32 %v3759, %v1162
        %v3792 = vmul.f32 %v3760, %v1163
        %v3793 = vmul.f32 %v3761, %v1164
        %v3794 = vmul.f32 %v3762, %v1165
        %v3795 = vmul.f32 %v3763, %v1166
        %v3796 = vmul.f32 %v3764, %v1167
        %v3797 = vmul.f32 %v3765, %v1168
        %v3798 = vmul.f32 %v3766, %v1169
        %v3799 = vmul.f32 %v3767, %v1170
        %v3800 = vmul.f32 %v3768, %v1171
        %v3801 = vmul.f32 %v3769, %v1172
        %v3802 = vmul.f32 %v3770, %v1173
        %v3803 = vmul.f32 %v3771, %v1174
        %s3804 = scalar_lea.vmem [#allocation14], 768
        %v3805 = vld [vmem:[%s3804] sm:$0xff]
        %v3806 = vld [vmem:[%s3804 + $0x8] sm:$0xff]
        %v3807 = vld [vmem:[%s3804 + $0x10] sm:$0xff]
        %v3808 = vld [vmem:[%s3804 + $0x18] sm:$0xff]
        %v3809 = vld [vmem:[%s3804 + $0x20] sm:$0xff]
        %v3810 = vld [vmem:[%s3804 + $0x28] sm:$0xff]
        %v3811 = vld [vmem:[%s3804 + $0x30] sm:$0xff]
        %v3812 = vld [vmem:[%s3804 + $0x38] sm:$0xff]
        %v3813 = vld [vmem:[%s3804 + $0x40] sm:$0xff]
        %v3814 = vld [vmem:[%s3804 + $0x48] sm:$0xff]
        %v3815 = vld [vmem:[%s3804 + $0x50] sm:$0xff]
        %v3816 = vld [vmem:[%s3804 + $0x58] sm:$0xff]
        %v3817 = vld [vmem:[%s3804 + $0x60] sm:$0xff]
        %v3818 = vld [vmem:[%s3804 + $0x68] sm:$0xff]
        %v3819 = vld [vmem:[%s3804 + $0x70] sm:$0xff]
        %v3820 = vld [vmem:[%s3804 + $0x78] sm:$0xff]
        %v3821 = vld [vmem:[%s3804 + $0x80] sm:$0xff]
        %v3822 = vld [vmem:[%s3804 + $0x88] sm:$0xff]
        %v3823 = vld [vmem:[%s3804 + $0x90] sm:$0xff]
        %v3824 = vld [vmem:[%s3804 + $0x98] sm:$0xff]
        %v3825 = vld [vmem:[%s3804 + $0xa0] sm:$0xff]
        %v3826 = vld [vmem:[%s3804 + $0xa8] sm:$0xff]
        %v3827 = vld [vmem:[%s3804 + $0xb0] sm:$0xff]
        %v3828 = vld [vmem:[%s3804 + $0xb8] sm:$0xff]
        %v3829 = vld [vmem:[%s3804 + $0xc0] sm:$0xff]
        %v3830 = vld [vmem:[%s3804 + $0xc8] sm:$0xff]
        %v3831 = vld [vmem:[%s3804 + $0xd0] sm:$0xff]
        %v3832 = vld [vmem:[%s3804 + $0xd8] sm:$0xff]
        %v3833 = vld [vmem:[%s3804 + $0xe0] sm:$0xff]
        %v3834 = vld [vmem:[%s3804 + $0xe8] sm:$0xff]
        %v3835 = vld [vmem:[%s3804 + $0xf0] sm:$0xff]
        %v3836 = vld [vmem:[%s3804 + $0xf8] sm:$0xff]
        %3837 = vmatprep.subr.mxu0 0.0
        %3838 = vmatpush1.msra.mxu0 %v3805
        %3839 = vmatprep.subr.mxu0 0.0
        %3840 = vmatpush1.msra.mxu0 %v3806
        %3841 = vmatprep.subr.mxu0 0.0
        %3842 = vmatpush1.msra.mxu0 %v3807
        %3843 = vmatprep.subr.mxu0 0.0
        %3844 = vmatpush1.msra.mxu0 %v3808
        %3845 = vmatprep.subr.mxu0 0.0
        %3846 = vmatpush1.msra.mxu0 %v3809
        %3847 = vmatprep.subr.mxu0 0.0
        %3848 = vmatpush1.msra.mxu0 %v3810
        %3849 = vmatprep.subr.mxu0 0.0
        %3850 = vmatpush1.msra.mxu0 %v3811
        %3851 = vmatprep.subr.mxu0 0.0
        %3852 = vmatpush1.msra.mxu0 %v3812
        %3853 = vmatprep.subr.mxu0 0.0
        %3854 = vmatpush1.msra.mxu0 %v3813
        %3855 = vmatprep.subr.mxu0 0.0
        %3856 = vmatpush1.msra.mxu0 %v3814
        %3857 = vmatprep.subr.mxu0 0.0
        %3858 = vmatpush1.msra.mxu0 %v3815
        %3859 = vmatprep.subr.mxu0 0.0
        %3860 = vmatpush1.msra.mxu0 %v3816
        %3861 = vmatprep.subr.mxu0 0.0
        %3862 = vmatpush1.msra.mxu0 %v3817
        %3863 = vmatprep.subr.mxu0 0.0
        %3864 = vmatpush1.msra.mxu0 %v3818
        %3865 = vmatprep.subr.mxu0 0.0
        %3866 = vmatpush1.msra.mxu0 %v3819
        %3867 = vmatprep.subr.mxu0 0.0
        %3868 = vmatpush1.msra.mxu0 %v3820
        %3869 = vmatprep.subr.mxu0 0.0
        %3870 = vmatpush1.msra.mxu0 %v3821
        %3871 = vmatprep.subr.mxu0 0.0
        %3872 = vmatpush1.msra.mxu0 %v3822
        %3873 = vmatprep.subr.mxu0 0.0
        %3874 = vmatpush1.msra.mxu0 %v3823
        %3875 = vmatprep.subr.mxu0 0.0
        %3876 = vmatpush1.msra.mxu0 %v3824
        %3877 = vmatprep.subr.mxu0 0.0
        %3878 = vmatpush1.msra.mxu0 %v3825
        %3879 = vmatprep.subr.mxu0 0.0
        %3880 = vmatpush1.msra.mxu0 %v3826
        %3881 = vmatprep.subr.mxu0 0.0
        %3882 = vmatpush1.msra.mxu0 %v3827
        %3883 = vmatprep.subr.mxu0 0.0
        %3884 = vmatpush1.msra.mxu0 %v3828
        %3885 = vmatprep.subr.mxu0 0.0
        %3886 = vmatpush1.msra.mxu0 %v3829
        %3887 = vmatprep.subr.mxu0 0.0
        %3888 = vmatpush1.msra.mxu0 %v3830
        %3889 = vmatprep.subr.mxu0 0.0
        %3890 = vmatpush1.msra.mxu0 %v3831
        %3891 = vmatprep.subr.mxu0 0.0
        %3892 = vmatpush1.msra.mxu0 %v3832
        %3893 = vmatprep.subr.mxu0 0.0
        %3894 = vmatpush1.msra.mxu0 %v3833
        %3895 = vmatprep.subr.mxu0 0.0
        %3896 = vmatpush1.msra.mxu0 %v3834
        %3897 = vmatprep.subr.mxu0 0.0
        %3898 = vmatpush1.msra.mxu0 %v3835
        %3899 = vmatprep.subr.mxu0 0.0
        %3900 = vmatpush1.msra.mxu0 %v3836
        %3901 = vmatprep.mubr.f32.mxu0 %v3772
        %3902 = vmatmul.mubr.f32.gmra.mrb[0].mxu0 %v3708
        %v3903 = vpop.f32.mrb[0].mxu0
        %v3904 = vadd.f32 0.0, %v3903
        %v3905 = vpop.f32.mrb[0].mxu0
        %3906 = vmatprep.mubr.f32.mxu0 %v3773
        %3907 = vmatmul.mubr.f32.gmra.mrb[0].mxu0 %v3709
        %v3908 = vpop.f32.mrb[0].mxu0
        %v3909 = vadd.f32 0.0, %v3908
        %v3910 = vpop.f32.mrb[0].mxu0
        %3911 = vmatprep.mubr.f32.mxu0 %v3774
        %3912 = vmatmul.mubr.f32.gmra.mrb[0].mxu0 %v3710
        %v3913 = vpop.f32.mrb[0].mxu0
        %v3914 = vadd.f32 0.0, %v3913
        %v3915 = vpop.f32.mrb[0].mxu0
        %3916 = vmatprep.mubr.f32.mxu0 %v3775
        %3917 = vmatmul.mubr.f32.gmra.mrb[0].mxu0 %v3711
        %v3918 = vpop.f32.mrb[0].mxu0
        %v3919 = vadd.f32 0.0, %v3918
        %v3920 = vpop.f32.mrb[0].mxu0
        %3921 = vmatprep.mubr.f32.mxu0 %v3776
        %3922 = vmatmul.mubr.f32.gmra.mrb[0].mxu0 %v3712
        %v3923 = vpop.f32.mrb[0].mxu0
        %v3924 = vadd.f32 0.0, %v3923
        %v3925 = vpop.f32.mrb[0].mxu0
        %3926 = vmatprep.mubr.f32.mxu0 %v3777
        %3927 = vmatmul.mubr.f32.gmra.mrb[0].mxu0 %v3713
        %v3928 = vpop.f32.mrb[0].mxu0
        %v3929 = vadd.f32 0.0, %v3928
        %v3930 = vpop.f32.mrb[0].mxu0
        %3931 = vmatprep.mubr.f32.mxu0 %v3778
        %3932 = vmatmul.mubr.f32.gmra.mrb[0].mxu0 %v3714
        %v3933 = vpop.f32.mrb[0].mxu0
        %v3934 = vadd.f32 0.0, %v3933
        %v3935 = vpop.f32.mrb[0].mxu0
        %3936 = vmatprep.mubr.f32.mxu0 %v3779
        %3937 = vmatmul.mubr.f32.gmra.mrb[0].mxu0 %v3715
        %v3938 = vpop.f32.mrb[0].mxu0
        %v3939 = vadd.f32 0.0, %v3938
        %v3940 = vpop.f32.mrb[0].mxu0
        %3941 = vmatprep.mubr.f32.mxu0 %v3780
        %3942 = vmatmul.mubr.f32.gmra.mrb[0].mxu0 %v3716
        %v3943 = vpop.f32.mrb[0].mxu0
        %v3944 = vadd.f32 0.0, %v3943
        %v3945 = vpop.f32.mrb[0].mxu0
        %3946 = vmatprep.mubr.f32.mxu0 %v3781
        %3947 = vmatmul.mubr.f32.gmra.mrb[0].mxu0 %v3717
        %v3948 = vpop.f32.mrb[0].mxu0
        %v3949 = vadd.f32 0.0, %v3948
        %v3950 = vpop.f32.mrb[0].mxu0
        %3951 = vmatprep.mubr.f32.mxu0 %v3782
        %3952 = vmatmul.mubr.f32.gmra.mrb[0].mxu0 %v3718
        %v3953 = vpop.f32.mrb[0].mxu0
        %v3954 = vadd.f32 0.0, %v3953
        %v3955 = vpop.f32.mrb[0].mxu0
        %3956 = vmatprep.mubr.f32.mxu0 %v3783
        %3957 = vmatmul.mubr.f32.gmra.mrb[0].mxu0 %v3719
        %v3958 = vpop.f32.mrb[0].mxu0
        %v3959 = vadd.f32 0.0, %v3958
        %v3960 = vpop.f32.mrb[0].mxu0
        %3961 = vmatprep.mubr.f32.mxu0 %v3784
        %3962 = vmatmul.mubr.f32.gmra.mrb[0].mxu0 %v3720
        %v3963 = vpop.f32.mrb[0].mxu0
        %v3964 = vadd.f32 0.0, %v3963
        %v3965 = vpop.f32.mrb[0].mxu0
        %3966 = vmatprep.mubr.f32.mxu0 %v3785
        %3967 = vmatmul.mubr.f32.gmra.mrb[0].mxu0 %v3721
        %v3968 = vpop.f32.mrb[0].mxu0
        %v3969 = vadd.f32 0.0, %v3968
        %v3970 = vpop.f32.mrb[0].mxu0
        %3971 = vmatprep.mubr.f32.mxu0 %v3786
        %3972 = vmatmul.mubr.f32.gmra.mrb[0].mxu0 %v3722
        %v3973 = vpop.f32.mrb[0].mxu0
        %v3974 = vadd.f32 0.0, %v3973
        %v3975 = vpop.f32.mrb[0].mxu0
        %3976 = vmatprep.mubr.f32.mxu0 %v3787
        %3977 = vmatmul.mubr.f32.gmra.mrb[0].mxu0 %v3723
        %v3978 = vpop.f32.mrb[0].mxu0
        %v3979 = vadd.f32 0.0, %v3978
        %v3980 = vpop.f32.mrb[0].mxu0
        %3981 = vmatprep.mubr.f32.mxu0 %v3788
        %3982 = vmatmul.mubr.f32.gmra.mrb[0].mxu0 %v3724
        %v3983 = vpop.f32.mrb[0].mxu0
        %v3984 = vadd.f32 0.0, %v3983
        %v3985 = vpop.f32.mrb[0].mxu0
        %3986 = vmatprep.mubr.f32.mxu0 %v3789
        %3987 = vmatmul.mubr.f32.gmra.mrb[0].mxu0 %v3725
        %v3988 = vpop.f32.mrb[0].mxu0
        %v3989 = vadd.f32 0.0, %v3988
        %v3990 = vpop.f32.mrb[0].mxu0
        %3991 = vmatprep.mubr.f32.mxu0 %v3790
        %3992 = vmatmul.mubr.f32.gmra.mrb[0].mxu0 %v3726
        %v3993 = vpop.f32.mrb[0].mxu0
        %v3994 = vadd.f32 0.0, %v3993
        %v3995 = vpop.f32.mrb[0].mxu0
        %3996 = vmatprep.mubr.f32.mxu0 %v3791
        %3997 = vmatmul.mubr.f32.gmra.mrb[0].mxu0 %v3727
        %v3998 = vpop.f32.mrb[0].mxu0
        %v3999 = vadd.f32 0.0, %v3998
        %v4000 = vpop.f32.mrb[0].mxu0
        %4001 = vmatprep.mubr.f32.mxu0 %v3792
        %4002 = vmatmul.mubr.f32.gmra.mrb[0].mxu0 %v3728
        %v4003 = vpop.f32.mrb[0].mxu0
        %v4004 = vadd.f32 0.0, %v4003
        %v4005 = vpop.f32.mrb[0].mxu0
        %4006 = vmatprep.mubr.f32.mxu0 %v3793
        %4007 = vmatmul.mubr.f32.gmra.mrb[0].mxu0 %v3729
        %v4008 = vpop.f32.mrb[0].mxu0
        %v4009 = vadd.f32 0.0, %v4008
        %v4010 = vpop.f32.mrb[0].mxu0
        %4011 = vmatprep.mubr.f32.mxu0 %v3794
        %4012 = vmatmul.mubr.f32.gmra.mrb[0].mxu0 %v3730
        %v4013 = vpop.f32.mrb[0].mxu0
        %v4014 = vadd.f32 0.0, %v4013
        %v4015 = vpop.f32.mrb[0].mxu0
        %4016 = vmatprep.mubr.f32.mxu0 %v3795
        %4017 = vmatmul.mubr.f32.gmra.mrb[0].mxu0 %v3731
        %v4018 = vpop.f32.mrb[0].mxu0
        %v4019 = vadd.f32 0.0, %v4018
        %v4020 = vpop.f32.mrb[0].mxu0
        %4021 = vmatprep.mubr.f32.mxu0 %v3796
        %4022 = vmatmul.mubr.f32.gmra.mrb[0].mxu0 %v3732
        %v4023 = vpop.f32.mrb[0].mxu0
        %v4024 = vadd.f32 0.0, %v4023
        %v4025 = vpop.f32.mrb[0].mxu0
        %4026 = vmatprep.mubr.f32.mxu0 %v3797
        %4027 = vmatmul.mubr.f32.gmra.mrb[0].mxu0 %v3733
        %v4028 = vpop.f32.mrb[0].mxu0
        %v4029 = vadd.f32 0.0, %v4028
        %v4030 = vpop.f32.mrb[0].mxu0
        %4031 = vmatprep.mubr.f32.mxu0 %v3798
        %4032 = vmatmul.mubr.f32.gmra.mrb[0].mxu0 %v3734
        %v4033 = vpop.f32.mrb[0].mxu0
        %v4034 = vadd.f32 0.0, %v4033
        %v4035 = vpop.f32.mrb[0].mxu0
        %4036 = vmatprep.mubr.f32.mxu0 %v3799
        %4037 = vmatmul.mubr.f32.gmra.mrb[0].mxu0 %v3735
        %v4038 = vpop.f32.mrb[0].mxu0
        %v4039 = vadd.f32 0.0, %v4038
        %v4040 = vpop.f32.mrb[0].mxu0
        %4041 = vmatprep.mubr.f32.mxu0 %v3800
        %4042 = vmatmul.mubr.f32.gmra.mrb[0].mxu0 %v3736
        %v4043 = vpop.f32.mrb[0].mxu0
        %v4044 = vadd.f32 0.0, %v4043
        %v4045 = vpop.f32.mrb[0].mxu0
        %4046 = vmatprep.mubr.f32.mxu0 %v3801
        %4047 = vmatmul.mubr.f32.gmra.mrb[0].mxu0 %v3737
        %v4048 = vpop.f32.mrb[0].mxu0
        %v4049 = vadd.f32 0.0, %v4048
        %v4050 = vpop.f32.mrb[0].mxu0
        %4051 = vmatprep.mubr.f32.mxu0 %v3802
        %4052 = vmatmul.mubr.f32.gmra.mrb[0].mxu0 %v3738
        %v4053 = vpop.f32.mrb[0].mxu0
        %v4054 = vadd.f32 0.0, %v4053
        %v4055 = vpop.f32.mrb[0].mxu0
        %4056 = vmatprep.mubr.f32.mxu0 %v3803
        %4057 = vmatmul.mubr.f32.gmra.mrb[0].mxu0 %v3739
        %v4058 = vpop.f32.mrb[0].mxu0
        %v4059 = vadd.f32 0.0, %v4058
        %v4060 = vpop.f32.mrb[0].mxu0
        %4061 = vdwg.mxu0
        %v4062 = vadd.f32 %v3644, %v3904
        %v4063 = vadd.f32 %v3645, %v3909
        %v4064 = vadd.f32 %v3646, %v3914
        %v4065 = vadd.f32 %v3647, %v3919
        %v4066 = vadd.f32 %v3648, %v3924
        %v4067 = vadd.f32 %v3649, %v3929
        %v4068 = vadd.f32 %v3650, %v3934
        %v4069 = vadd.f32 %v3651, %v3939
        %v4070 = vadd.f32 %v3652, %v3944
        %v4071 = vadd.f32 %v3653, %v3949
        %v4072 = vadd.f32 %v3654, %v3954
        %v4073 = vadd.f32 %v3655, %v3959
        %v4074 = vadd.f32 %v3656, %v3964
        %v4075 = vadd.f32 %v3657, %v3969
        %v4076 = vadd.f32 %v3658, %v3974
        %v4077 = vadd.f32 %v3659, %v3979
        %v4078 = vadd.f32 %v3660, %v3984
        %v4079 = vadd.f32 %v3661, %v3989
        %v4080 = vadd.f32 %v3662, %v3994
        %v4081 = vadd.f32 %v3663, %v3999
        %v4082 = vadd.f32 %v3664, %v4004
        %v4083 = vadd.f32 %v3665, %v4009
        %v4084 = vadd.f32 %v3666, %v4014
        %v4085 = vadd.f32 %v3667, %v4019
        %v4086 = vadd.f32 %v3668, %v4024
        %v4087 = vadd.f32 %v3669, %v4029
        %v4088 = vadd.f32 %v3670, %v4034
        %v4089 = vadd.f32 %v3671, %v4039
        %v4090 = vadd.f32 %v3672, %v4044
        %v4091 = vadd.f32 %v3673, %v4049
        %v4092 = vadd.f32 %v3674, %v4054
        %v4093 = vadd.f32 %v3675, %v4059
        %v4094 = vld [vmem:[%s9] sm:$0x1]
        %v4096 = vlaneseq
        %v4097 = vshrl.u32 %v4096, 7
        %v4098 = vsub.s32 0, %v4097
        %v4099 = vrot.slane %v4094, %v4098
        %v4101 = vadd.f32 %v4062, %v4099
        %v4102 = vadd.f32 %v4063, %v4099
        %v4103 = vadd.f32 %v4064, %v4099
        %v4104 = vadd.f32 %v4065, %v4099
        %v4105 = vadd.f32 %v4066, %v4099
        %v4106 = vadd.f32 %v4067, %v4099
        %v4107 = vadd.f32 %v4068, %v4099
        %v4108 = vadd.f32 %v4069, %v4099
        %v4109 = vadd.f32 %v4070, %v4099
        %v4110 = vadd.f32 %v4071, %v4099
        %v4111 = vadd.f32 %v4072, %v4099
        %v4112 = vadd.f32 %v4073, %v4099
        %v4113 = vadd.f32 %v4074, %v4099
        %v4114 = vadd.f32 %v4075, %v4099
        %v4115 = vadd.f32 %v4076, %v4099
        %v4116 = vadd.f32 %v4077, %v4099
        %v4117 = vadd.f32 %v4078, %v4099
        %v4118 = vadd.f32 %v4079, %v4099
        %v4119 = vadd.f32 %v4080, %v4099
        %v4120 = vadd.f32 %v4081, %v4099
        %v4121 = vadd.f32 %v4082, %v4099
        %v4122 = vadd.f32 %v4083, %v4099
        %v4123 = vadd.f32 %v4084, %v4099
        %v4124 = vadd.f32 %v4085, %v4099
        %v4125 = vadd.f32 %v4086, %v4099
        %v4126 = vadd.f32 %v4087, %v4099
        %v4127 = vadd.f32 %v4088, %v4099
        %v4128 = vadd.f32 %v4089, %v4099
        %v4129 = vadd.f32 %v4090, %v4099
        %v4130 = vadd.f32 %v4091, %v4099
        %v4131 = vadd.f32 %v4092, %v4099
        %v4132 = vadd.f32 %v4093, %v4099
        %v4133 = vmax.f32 %v4101, 0.0
        %v4134 = vmax.f32 %v4102, 0.0
        %v4135 = vmax.f32 %v4103, 0.0
        %v4136 = vmax.f32 %v4104, 0.0
        %v4137 = vmax.f32 %v4105, 0.0
        %v4138 = vmax.f32 %v4106, 0.0
        %v4139 = vmax.f32 %v4107, 0.0
        %v4140 = vmax.f32 %v4108, 0.0
        %v4141 = vmax.f32 %v4109, 0.0
        %v4142 = vmax.f32 %v4110, 0.0
        %v4143 = vmax.f32 %v4111, 0.0
        %v4144 = vmax.f32 %v4112, 0.0
        %v4145 = vmax.f32 %v4113, 0.0
        %v4146 = vmax.f32 %v4114, 0.0
        %v4147 = vmax.f32 %v4115, 0.0
        %v4148 = vmax.f32 %v4116, 0.0
        %v4149 = vmax.f32 %v4117, 0.0
        %v4150 = vmax.f32 %v4118, 0.0
        %v4151 = vmax.f32 %v4119, 0.0
        %v4152 = vmax.f32 %v4120, 0.0
        %v4153 = vmax.f32 %v4121, 0.0
        %v4154 = vmax.f32 %v4122, 0.0
        %v4155 = vmax.f32 %v4123, 0.0
        %v4156 = vmax.f32 %v4124, 0.0
        %v4157 = vmax.f32 %v4125, 0.0
        %v4158 = vmax.f32 %v4126, 0.0
        %v4159 = vmax.f32 %v4127, 0.0
        %v4160 = vmax.f32 %v4128, 0.0
        %v4161 = vmax.f32 %v4129, 0.0
        %v4162 = vmax.f32 %v4130, 0.0
        %v4163 = vmax.f32 %v4131, 0.0
        %v4164 = vmax.f32 %v4132, 0.0
        %v4165 = vld [vmem:[#allocation17] sm:$0xff]
        %v4166 = vld [vmem:[#allocation17 + $0x8] sm:$0xff]
        %v4167 = vld [vmem:[#allocation17 + $0x10] sm:$0xff]
        %v4168 = vld [vmem:[#allocation17 + $0x18] sm:$0xff]
        %v4169 = vld [vmem:[#allocation17 + $0x20] sm:$0xff]
        %v4170 = vld [vmem:[#allocation17 + $0x28] sm:$0xff]
        %v4171 = vld [vmem:[#allocation17 + $0x30] sm:$0xff]
        %v4172 = vld [vmem:[#allocation17 + $0x38] sm:$0xff]
        %v4173 = vld [vmem:[#allocation17 + $0x40] sm:$0xff]
        %v4174 = vld [vmem:[#allocation17 + $0x48] sm:$0xff]
        %v4175 = vld [vmem:[#allocation17 + $0x50] sm:$0xff]
        %v4176 = vld [vmem:[#allocation17 + $0x58] sm:$0xff]
        %v4177 = vld [vmem:[#allocation17 + $0x60] sm:$0xff]
        %v4178 = vld [vmem:[#allocation17 + $0x68] sm:$0xff]
        %v4179 = vld [vmem:[#allocation17 + $0x70] sm:$0xff]
        %v4180 = vld [vmem:[#allocation17 + $0x78] sm:$0xff]
        %v4181 = vld [vmem:[#allocation17 + $0x80] sm:$0xff]
        %v4182 = vld [vmem:[#allocation17 + $0x88] sm:$0xff]
        %v4183 = vld [vmem:[#allocation17 + $0x90] sm:$0xff]
        %v4184 = vld [vmem:[#allocation17 + $0x98] sm:$0xff]
        %v4185 = vld [vmem:[#allocation17 + $0xa0] sm:$0xff]
        %v4186 = vld [vmem:[#allocation17 + $0xa8] sm:$0xff]
        %v4187 = vld [vmem:[#allocation17 + $0xb0] sm:$0xff]
        %v4188 = vld [vmem:[#allocation17 + $0xb8] sm:$0xff]
        %v4189 = vld [vmem:[#allocation17 + $0xc0] sm:$0xff]
        %v4190 = vld [vmem:[#allocation17 + $0xc8] sm:$0xff]
        %v4191 = vld [vmem:[#allocation17 + $0xd0] sm:$0xff]
        %v4192 = vld [vmem:[#allocation17 + $0xd8] sm:$0xff]
        %v4193 = vld [vmem:[#allocation17 + $0xe0] sm:$0xff]
        %v4194 = vld [vmem:[#allocation17 + $0xe8] sm:$0xff]
        %v4195 = vld [vmem:[#allocation17 + $0xf0] sm:$0xff]
        %v4196 = vld [vmem:[#allocation17 + $0xf8] sm:$0xff]
        %v4197 = vld [vmem:[#allocation17 + $0x100] sm:$0xff]
        %v4198 = vld [vmem:[#allocation17 + $0x108] sm:$0xff]
        %v4199 = vld [vmem:[#allocation17 + $0x110] sm:$0xff]
        %v4200 = vld [vmem:[#allocation17 + $0x118] sm:$0xff]
        %v4201 = vld [vmem:[#allocation17 + $0x120] sm:$0xff]
        %v4202 = vld [vmem:[#allocation17 + $0x128] sm:$0xff]
        %v4203 = vld [vmem:[#allocation17 + $0x130] sm:$0xff]
        %v4204 = vld [vmem:[#allocation17 + $0x138] sm:$0xff]
        %v4205 = vld [vmem:[#allocation17 + $0x140] sm:$0xff]
        %v4206 = vld [vmem:[#allocation17 + $0x148] sm:$0xff]
        %v4207 = vld [vmem:[#allocation17 + $0x150] sm:$0xff]
        %v4208 = vld [vmem:[#allocation17 + $0x158] sm:$0xff]
        %v4209 = vld [vmem:[#allocation17 + $0x160] sm:$0xff]
        %v4210 = vld [vmem:[#allocation17 + $0x168] sm:$0xff]
        %v4211 = vld [vmem:[#allocation17 + $0x170] sm:$0xff]
        %v4212 = vld [vmem:[#allocation17 + $0x178] sm:$0xff]
        %v4213 = vld [vmem:[#allocation17 + $0x180] sm:$0xff]
        %v4214 = vld [vmem:[#allocation17 + $0x188] sm:$0xff]
        %v4215 = vld [vmem:[#allocation17 + $0x190] sm:$0xff]
        %v4216 = vld [vmem:[#allocation17 + $0x198] sm:$0xff]
        %v4217 = vld [vmem:[#allocation17 + $0x1a0] sm:$0xff]
        %v4218 = vld [vmem:[#allocation17 + $0x1a8] sm:$0xff]
        %v4219 = vld [vmem:[#allocation17 + $0x1b0] sm:$0xff]
        %v4220 = vld [vmem:[#allocation17 + $0x1b8] sm:$0xff]
        %v4221 = vld [vmem:[#allocation17 + $0x1c0] sm:$0xff]
        %v4222 = vld [vmem:[#allocation17 + $0x1c8] sm:$0xff]
        %v4223 = vld [vmem:[#allocation17 + $0x1d0] sm:$0xff]
        %v4224 = vld [vmem:[#allocation17 + $0x1d8] sm:$0xff]
        %v4225 = vld [vmem:[#allocation17 + $0x1e0] sm:$0xff]
        %v4226 = vld [vmem:[#allocation17 + $0x1e8] sm:$0xff]
        %v4227 = vld [vmem:[#allocation17 + $0x1f0] sm:$0xff]
        %v4228 = vld [vmem:[#allocation17 + $0x1f8] sm:$0xff]
        %v4229 = vld [vmem:[%s11] sm:$0xf]
        %v4231 = vlaneseq
        %v4232 = vshrl.u32 %v4231, 7
        %v4233 = vsub.s32 0, %v4232
        %v4234 = vrot.slane %v4229, %v4233
        %v4235 = vlaneseq
        %v4236 = vshrl.u32 %v4235, 7
        %v4237 = vsub.s32 1, %v4236
        %v4238 = vrot.slane %v4229, %v4237
        %v4239 = vlaneseq
        %v4240 = vshrl.u32 %v4239, 7
        %v4241 = vsub.s32 2, %v4240
        %v4242 = vrot.slane %v4229, %v4241
        %v4243 = vlaneseq
        %v4244 = vshrl.u32 %v4243, 7
        %v4245 = vsub.s32 3, %v4244
        %v4246 = vrot.slane %v4229, %v4245
        %4251 = vmatprep.subr.mxu0 %v4166
        %4252 = vmatpush1.msra.mxu0 %v4165
        %4253 = vmatprep.subr.mxu0 %v4170
        %4254 = vmatpush1.msra.mxu0 %v4169
        %4255 = vmatprep.subr.mxu0 %v4174
        %4256 = vmatpush1.msra.mxu0 %v4173
        %4257 = vmatprep.subr.mxu0 %v4178
        %4258 = vmatpush1.msra.mxu0 %v4177
        %4259 = vmatprep.subr.mxu0 %v4182
        %4260 = vmatpush1.msra.mxu0 %v4181
        %4261 = vmatprep.subr.mxu0 %v4186
        %4262 = vmatpush1.msra.mxu0 %v4185
        %4263 = vmatprep.subr.mxu0 %v4190
        %4264 = vmatpush1.msra.mxu0 %v4189
        %4265 = vmatprep.subr.mxu0 %v4194
        %4266 = vmatpush1.msra.mxu0 %v4193
        %4267 = vmatprep.subr.mxu0 %v4198
        %4268 = vmatpush1.msra.mxu0 %v4197
        %4269 = vmatprep.subr.mxu0 %v4202
        %4270 = vmatpush1.msra.mxu0 %v4201
        %4271 = vmatprep.subr.mxu0 %v4206
        %4272 = vmatpush1.msra.mxu0 %v4205
        %4273 = vmatprep.subr.mxu0 %v4210
        %4274 = vmatpush1.msra.mxu0 %v4209
        %4275 = vmatprep.subr.mxu0 %v4214
        %4276 = vmatpush1.msra.mxu0 %v4213
        %4277 = vmatprep.subr.mxu0 %v4218
        %4278 = vmatpush1.msra.mxu0 %v4217
        %4279 = vmatprep.subr.mxu0 %v4222
        %4280 = vmatpush1.msra.mxu0 %v4221
        %4281 = vmatprep.subr.mxu0 %v4226
        %4282 = vmatpush1.msra.mxu0 %v4225
        %4283 = vmatprep.subr.mxu0 0.0
        %4284 = vmatpush1.msra.mxu0 0.0
        %4285 = vmatprep.subr.mxu0 0.0
        %4286 = vmatpush1.msra.mxu0 0.0
        %4287 = vmatprep.subr.mxu0 0.0
        %4288 = vmatpush1.msra.mxu0 0.0
        %4289 = vmatprep.subr.mxu0 0.0
        %4290 = vmatpush1.msra.mxu0 0.0
        %4291 = vmatprep.subr.mxu0 0.0
        %4292 = vmatpush1.msra.mxu0 0.0
        %4293 = vmatprep.subr.mxu0 0.0
        %4294 = vmatpush1.msra.mxu0 0.0
        %4295 = vmatprep.subr.mxu0 0.0
        %4296 = vmatpush1.msra.mxu0 0.0
        %4297 = vmatprep.subr.mxu0 0.0
        %4298 = vmatpush1.msra.mxu0 0.0
        %4299 = vmatprep.subr.mxu0 0.0
        %4300 = vmatpush1.msra.mxu0 0.0
        %4301 = vmatprep.subr.mxu0 0.0
        %4302 = vmatpush1.msra.mxu0 0.0
        %4303 = vmatprep.subr.mxu0 0.0
        %4304 = vmatpush1.msra.mxu0 0.0
        %4305 = vmatprep.subr.mxu0 0.0
        %4306 = vmatpush1.msra.mxu0 0.0
        %4307 = vmatprep.subr.mxu0 0.0
        %4308 = vmatpush1.msra.mxu0 0.0
        %4309 = vmatprep.subr.mxu0 0.0
        %4310 = vmatpush1.msra.mxu0 0.0
        %4311 = vmatprep.subr.mxu0 0.0
        %4312 = vmatpush1.msra.mxu0 0.0
        %4313 = vmatprep.subr.mxu0 0.0
        %4314 = vmatpush1.msra.mxu0 0.0
        %4315 = vmatprep.mubr.f32.mxu0 0.0
        %4316 = vmatmul.mubr.f32.gmra.mrb[0].mxu0 %v4133
        %v4317 = vpop.f32.mrb[0].mxu0
        %v4318 = vadd.f32 %v4234, %v4317
        %v4319 = vpop.f32.mrb[0].mxu0
        %v4320 = vadd.f32 %v4238, %v4319
        %4321 = vmatprep.mubr.f32.mxu0 0.0
        %4322 = vmatmul.mubr.f32.gmra.mrb[0].mxu0 %v4134
        %v4323 = vpop.f32.mrb[0].mxu0
        %v4324 = vadd.f32 %v4234, %v4323
        %v4325 = vpop.f32.mrb[0].mxu0
        %v4326 = vadd.f32 %v4238, %v4325
        %4327 = vmatprep.mubr.f32.mxu0 0.0
        %4328 = vmatmul.mubr.f32.gmra.mrb[0].mxu0 %v4135
        %v4329 = vpop.f32.mrb[0].mxu0
        %v4330 = vadd.f32 %v4234, %v4329
        %v4331 = vpop.f32.mrb[0].mxu0
        %v4332 = vadd.f32 %v4238, %v4331
        %4333 = vmatprep.mubr.f32.mxu0 0.0
        %4334 = vmatmul.mubr.f32.gmra.mrb[0].mxu0 %v4136
        %v4335 = vpop.f32.mrb[0].mxu0
        %v4336 = vadd.f32 %v4234, %v4335
        %v4337 = vpop.f32.mrb[0].mxu0
        %v4338 = vadd.f32 %v4238, %v4337
        %4339 = vmatprep.mubr.f32.mxu0 0.0
        %4340 = vmatmul.mubr.f32.gmra.mrb[0].mxu0 %v4137
        %v4341 = vpop.f32.mrb[0].mxu0
        %v4342 = vadd.f32 %v4234, %v4341
        %v4343 = vpop.f32.mrb[0].mxu0
        %v4344 = vadd.f32 %v4238, %v4343
        %4345 = vmatprep.mubr.f32.mxu0 0.0
        %4346 = vmatmul.mubr.f32.gmra.mrb[0].mxu0 %v4138
        %v4347 = vpop.f32.mrb[0].mxu0
        %v4348 = vadd.f32 %v4234, %v4347
        %v4349 = vpop.f32.mrb[0].mxu0
        %v4350 = vadd.f32 %v4238, %v4349
        %4351 = vmatprep.mubr.f32.mxu0 0.0
        %4352 = vmatmul.mubr.f32.gmra.mrb[0].mxu0 %v4139
        %v4353 = vpop.f32.mrb[0].mxu0
        %v4354 = vadd.f32 %v4234, %v4353
        %v4355 = vpop.f32.mrb[0].mxu0
        %v4356 = vadd.f32 %v4238, %v4355
        %4357 = vmatprep.mubr.f32.mxu0 0.0
        %4358 = vmatmul.mubr.f32.gmra.mrb[0].mxu0 %v4140
        %v4359 = vpop.f32.mrb[0].mxu0
        %v4360 = vadd.f32 %v4234, %v4359
        %v4361 = vpop.f32.mrb[0].mxu0
        %v4362 = vadd.f32 %v4238, %v4361
        %4363 = vmatprep.mubr.f32.mxu0 0.0
        %4364 = vmatmul.mubr.f32.gmra.mrb[0].mxu0 %v4141
        %v4365 = vpop.f32.mrb[0].mxu0
        %v4366 = vadd.f32 %v4234, %v4365
        %v4367 = vpop.f32.mrb[0].mxu0
        %v4368 = vadd.f32 %v4238, %v4367
        %4369 = vmatprep.mubr.f32.mxu0 0.0
        %4370 = vmatmul.mubr.f32.gmra.mrb[0].mxu0 %v4142
        %v4371 = vpop.f32.mrb[0].mxu0
        %v4372 = vadd.f32 %v4234, %v4371
        %v4373 = vpop.f32.mrb[0].mxu0
        %v4374 = vadd.f32 %v4238, %v4373
        %4375 = vmatprep.mubr.f32.mxu0 0.0
        %4376 = vmatmul.mubr.f32.gmra.mrb[0].mxu0 %v4143
        %v4377 = vpop.f32.mrb[0].mxu0
        %v4378 = vadd.f32 %v4234, %v4377
        %v4379 = vpop.f32.mrb[0].mxu0
        %v4380 = vadd.f32 %v4238, %v4379
        %4381 = vmatprep.mubr.f32.mxu0 0.0
        %4382 = vmatmul.mubr.f32.gmra.mrb[0].mxu0 %v4144
        %v4383 = vpop.f32.mrb[0].mxu0
        %v4384 = vadd.f32 %v4234, %v4383
        %v4385 = vpop.f32.mrb[0].mxu0
        %v4386 = vadd.f32 %v4238, %v4385
        %4387 = vmatprep.mubr.f32.mxu0 0.0
        %4388 = vmatmul.mubr.f32.gmra.mrb[0].mxu0 %v4145
        %v4389 = vpop.f32.mrb[0].mxu0
        %v4390 = vadd.f32 %v4234, %v4389
        %v4391 = vpop.f32.mrb[0].mxu0
        %v4392 = vadd.f32 %v4238, %v4391
        %4393 = vmatprep.mubr.f32.mxu0 0.0
        %4394 = vmatmul.mubr.f32.gmra.mrb[0].mxu0 %v4146
        %v4395 = vpop.f32.mrb[0].mxu0
        %v4396 = vadd.f32 %v4234, %v4395
        %v4397 = vpop.f32.mrb[0].mxu0
        %v4398 = vadd.f32 %v4238, %v4397
        %4399 = vmatprep.mubr.f32.mxu0 0.0
        %4400 = vmatmul.mubr.f32.gmra.mrb[0].mxu0 %v4147
        %v4401 = vpop.f32.mrb[0].mxu0
        %v4402 = vadd.f32 %v4234, %v4401
        %v4403 = vpop.f32.mrb[0].mxu0
        %v4404 = vadd.f32 %v4238, %v4403
        %4405 = vmatprep.mubr.f32.mxu0 0.0
        %4406 = vmatmul.mubr.f32.gmra.mrb[0].mxu0 %v4148
        %v4407 = vpop.f32.mrb[0].mxu0
        %v4408 = vadd.f32 %v4234, %v4407
        %v4409 = vpop.f32.mrb[0].mxu0
        %v4410 = vadd.f32 %v4238, %v4409
        %4411 = vmatprep.mubr.f32.mxu0 0.0
        %4412 = vmatmul.mubr.f32.gmra.mrb[0].mxu0 %v4149
        %v4413 = vpop.f32.mrb[0].mxu0
        %v4414 = vadd.f32 %v4234, %v4413
        %v4415 = vpop.f32.mrb[0].mxu0
        %v4416 = vadd.f32 %v4238, %v4415
        %4417 = vmatprep.mubr.f32.mxu0 0.0
        %4418 = vmatmul.mubr.f32.gmra.mrb[0].mxu0 %v4150
        %v4419 = vpop.f32.mrb[0].mxu0
        %v4420 = vadd.f32 %v4234, %v4419
        %v4421 = vpop.f32.mrb[0].mxu0
        %v4422 = vadd.f32 %v4238, %v4421
        %4423 = vmatprep.mubr.f32.mxu0 0.0
        %4424 = vmatmul.mubr.f32.gmra.mrb[0].mxu0 %v4151
        %v4425 = vpop.f32.mrb[0].mxu0
        %v4426 = vadd.f32 %v4234, %v4425
        %v4427 = vpop.f32.mrb[0].mxu0
        %v4428 = vadd.f32 %v4238, %v4427
        %4429 = vmatprep.mubr.f32.mxu0 0.0
        %4430 = vmatmul.mubr.f32.gmra.mrb[0].mxu0 %v4152
        %v4431 = vpop.f32.mrb[0].mxu0
        %v4432 = vadd.f32 %v4234, %v4431
        %v4433 = vpop.f32.mrb[0].mxu0
        %v4434 = vadd.f32 %v4238, %v4433
        %4435 = vmatprep.mubr.f32.mxu0 0.0
        %4436 = vmatmul.mubr.f32.gmra.mrb[0].mxu0 %v4153
        %v4437 = vpop.f32.mrb[0].mxu0
        %v4438 = vadd.f32 %v4234, %v4437
        %v4439 = vpop.f32.mrb[0].mxu0
        %v4440 = vadd.f32 %v4238, %v4439
        %4441 = vmatprep.mubr.f32.mxu0 0.0
        %4442 = vmatmul.mubr.f32.gmra.mrb[0].mxu0 %v4154
        %v4443 = vpop.f32.mrb[0].mxu0
        %v4444 = vadd.f32 %v4234, %v4443
        %v4445 = vpop.f32.mrb[0].mxu0
        %v4446 = vadd.f32 %v4238, %v4445
        %4447 = vmatprep.mubr.f32.mxu0 0.0
        %4448 = vmatmul.mubr.f32.gmra.mrb[0].mxu0 %v4155
        %v4449 = vpop.f32.mrb[0].mxu0
        %v4450 = vadd.f32 %v4234, %v4449
        %v4451 = vpop.f32.mrb[0].mxu0
        %v4452 = vadd.f32 %v4238, %v4451
        %4453 = vmatprep.mubr.f32.mxu0 0.0
        %4454 = vmatmul.mubr.f32.gmra.mrb[0].mxu0 %v4156
        %v4455 = vpop.f32.mrb[0].mxu0
        %v4456 = vadd.f32 %v4234, %v4455
        %v4457 = vpop.f32.mrb[0].mxu0
        %v4458 = vadd.f32 %v4238, %v4457
        %4459 = vmatprep.mubr.f32.mxu0 0.0
        %4460 = vmatmul.mubr.f32.gmra.mrb[0].mxu0 %v4157
        %v4461 = vpop.f32.mrb[0].mxu0
        %v4462 = vadd.f32 %v4234, %v4461
        %v4463 = vpop.f32.mrb[0].mxu0
        %v4464 = vadd.f32 %v4238, %v4463
        %4465 = vmatprep.mubr.f32.mxu0 0.0
        %4466 = vmatmul.mubr.f32.gmra.mrb[0].mxu0 %v4158
        %v4467 = vpop.f32.mrb[0].mxu0
        %v4468 = vadd.f32 %v4234, %v4467
        %v4469 = vpop.f32.mrb[0].mxu0
        %v4470 = vadd.f32 %v4238, %v4469
        %4471 = vmatprep.mubr.f32.mxu0 0.0
        %4472 = vmatmul.mubr.f32.gmra.mrb[0].mxu0 %v4159
        %v4473 = vpop.f32.mrb[0].mxu0
        %v4474 = vadd.f32 %v4234, %v4473
        %v4475 = vpop.f32.mrb[0].mxu0
        %v4476 = vadd.f32 %v4238, %v4475
        %4477 = vmatprep.mubr.f32.mxu0 0.0
        %4478 = vmatmul.mubr.f32.gmra.mrb[0].mxu0 %v4160
        %v4479 = vpop.f32.mrb[0].mxu0
        %v4480 = vadd.f32 %v4234, %v4479
        %v4481 = vpop.f32.mrb[0].mxu0
        %v4482 = vadd.f32 %v4238, %v4481
        %4483 = vmatprep.mubr.f32.mxu0 0.0
        %4484 = vmatmul.mubr.f32.gmra.mrb[0].mxu0 %v4161
        %v4485 = vpop.f32.mrb[0].mxu0
        %v4486 = vadd.f32 %v4234, %v4485
        %v4487 = vpop.f32.mrb[0].mxu0
        %v4488 = vadd.f32 %v4238, %v4487
        %4489 = vmatprep.mubr.f32.mxu0 0.0
        %4490 = vmatmul.mubr.f32.gmra.mrb[0].mxu0 %v4162
        %v4491 = vpop.f32.mrb[0].mxu0
        %v4492 = vadd.f32 %v4234, %v4491
        %v4493 = vpop.f32.mrb[0].mxu0
        %v4494 = vadd.f32 %v4238, %v4493
        %4495 = vmatprep.mubr.f32.mxu0 0.0
        %4496 = vmatmul.mubr.f32.gmra.mrb[0].mxu0 %v4163
        %v4497 = vpop.f32.mrb[0].mxu0
        %v4498 = vadd.f32 %v4234, %v4497
        %v4499 = vpop.f32.mrb[0].mxu0
        %v4500 = vadd.f32 %v4238, %v4499
        %4501 = vmatprep.mubr.f32.mxu0 0.0
        %4502 = vmatmul.mubr.f32.gmra.mrb[0].mxu0 %v4164
        %v4503 = vpop.f32.mrb[0].mxu0
        %v4504 = vadd.f32 %v4234, %v4503
        %v4505 = vpop.f32.mrb[0].mxu0
        %v4506 = vadd.f32 %v4238, %v4505
        %4507 = vdwg.mxu0
        %4508 = vmatprep.subr.mxu0 %v4168
        %4509 = vmatpush1.msra.mxu0 %v4167
        %4510 = vmatprep.subr.mxu0 %v4172
        %4511 = vmatpush1.msra.mxu0 %v4171
        %4512 = vmatprep.subr.mxu0 %v4176
        %4513 = vmatpush1.msra.mxu0 %v4175
        %4514 = vmatprep.subr.mxu0 %v4180
        %4515 = vmatpush1.msra.mxu0 %v4179
        %4516 = vmatprep.subr.mxu0 %v4184
        %4517 = vmatpush1.msra.mxu0 %v4183
        %4518 = vmatprep.subr.mxu0 %v4188
        %4519 = vmatpush1.msra.mxu0 %v4187
        %4520 = vmatprep.subr.mxu0 %v4192
        %4521 = vmatpush1.msra.mxu0 %v4191
        %4522 = vmatprep.subr.mxu0 %v4196
        %4523 = vmatpush1.msra.mxu0 %v4195
        %4524 = vmatprep.subr.mxu0 %v4200
        %4525 = vmatpush1.msra.mxu0 %v4199
        %4526 = vmatprep.subr.mxu0 %v4204
        %4527 = vmatpush1.msra.mxu0 %v4203
        %4528 = vmatprep.subr.mxu0 %v4208
        %4529 = vmatpush1.msra.mxu0 %v4207
        %4530 = vmatprep.subr.mxu0 %v4212
        %4531 = vmatpush1.msra.mxu0 %v4211
        %4532 = vmatprep.subr.mxu0 %v4216
        %4533 = vmatpush1.msra.mxu0 %v4215
        %4534 = vmatprep.subr.mxu0 %v4220
        %4535 = vmatpush1.msra.mxu0 %v4219
        %4536 = vmatprep.subr.mxu0 %v4224
        %4537 = vmatpush1.msra.mxu0 %v4223
        %4538 = vmatprep.subr.mxu0 %v4228
        %4539 = vmatpush1.msra.mxu0 %v4227
        %4540 = vmatprep.subr.mxu0 0.0
        %4541 = vmatpush1.msra.mxu0 0.0
        %4542 = vmatprep.subr.mxu0 0.0
        %4543 = vmatpush1.msra.mxu0 0.0
        %4544 = vmatprep.subr.mxu0 0.0
        %4545 = vmatpush1.msra.mxu0 0.0
        %4546 = vmatprep.subr.mxu0 0.0
        %4547 = vmatpush1.msra.mxu0 0.0
        %4548 = vmatprep.subr.mxu0 0.0
        %4549 = vmatpush1.msra.mxu0 0.0
        %4550 = vmatprep.subr.mxu0 0.0
        %4551 = vmatpush1.msra.mxu0 0.0
        %4552 = vmatprep.subr.mxu0 0.0
        %4553 = vmatpush1.msra.mxu0 0.0
        %4554 = vmatprep.subr.mxu0 0.0
        %4555 = vmatpush1.msra.mxu0 0.0
        %4556 = vmatprep.subr.mxu0 0.0
        %4557 = vmatpush1.msra.mxu0 0.0
        %4558 = vmatprep.subr.mxu0 0.0
        %4559 = vmatpush1.msra.mxu0 0.0
        %4560 = vmatprep.subr.mxu0 0.0
        %4561 = vmatpush1.msra.mxu0 0.0
        %4562 = vmatprep.subr.mxu0 0.0
        %4563 = vmatpush1.msra.mxu0 0.0
        %4564 = vmatprep.subr.mxu0 0.0
        %4565 = vmatpush1.msra.mxu0 0.0
        %4566 = vmatprep.subr.mxu0 0.0
        %4567 = vmatpush1.msra.mxu0 0.0
        %4568 = vmatprep.subr.mxu0 0.0
        %4569 = vmatpush1.msra.mxu0 0.0
        %4570 = vmatprep.subr.mxu0 0.0
        %4571 = vmatpush1.msra.mxu0 0.0
        %4572 = vmatprep.mubr.f32.mxu0 0.0
        %4573 = vmatmul.mubr.f32.gmra.mrb[0].mxu0 %v4133
        %v4574 = vpop.f32.mrb[0].mxu0
        %v4575 = vadd.f32 %v4242, %v4574
        %v4576 = vpop.f32.mrb[0].mxu0
        %v4577 = vadd.f32 %v4246, %v4576
        %4578 = vmatprep.mubr.f32.mxu0 0.0
        %4579 = vmatmul.mubr.f32.gmra.mrb[0].mxu0 %v4134
        %v4580 = vpop.f32.mrb[0].mxu0
        %v4581 = vadd.f32 %v4242, %v4580
        %v4582 = vpop.f32.mrb[0].mxu0
        %v4583 = vadd.f32 %v4246, %v4582
        %4584 = vmatprep.mubr.f32.mxu0 0.0
        %4585 = vmatmul.mubr.f32.gmra.mrb[0].mxu0 %v4135
        %v4586 = vpop.f32.mrb[0].mxu0
        %v4587 = vadd.f32 %v4242, %v4586
        %v4588 = vpop.f32.mrb[0].mxu0
        %v4589 = vadd.f32 %v4246, %v4588
        %4590 = vmatprep.mubr.f32.mxu0 0.0
        %4591 = vmatmul.mubr.f32.gmra.mrb[0].mxu0 %v4136
        %v4592 = vpop.f32.mrb[0].mxu0
        %v4593 = vadd.f32 %v4242, %v4592
        %v4594 = vpop.f32.mrb[0].mxu0
        %v4595 = vadd.f32 %v4246, %v4594
        %4596 = vmatprep.mubr.f32.mxu0 0.0
        %4597 = vmatmul.mubr.f32.gmra.mrb[0].mxu0 %v4137
        %v4598 = vpop.f32.mrb[0].mxu0
        %v4599 = vadd.f32 %v4242, %v4598
        %v4600 = vpop.f32.mrb[0].mxu0
        %v4601 = vadd.f32 %v4246, %v4600
        %4602 = vmatprep.mubr.f32.mxu0 0.0
        %4603 = vmatmul.mubr.f32.gmra.mrb[0].mxu0 %v4138
        %v4604 = vpop.f32.mrb[0].mxu0
        %v4605 = vadd.f32 %v4242, %v4604
        %v4606 = vpop.f32.mrb[0].mxu0
        %v4607 = vadd.f32 %v4246, %v4606
        %4608 = vmatprep.mubr.f32.mxu0 0.0
        %4609 = vmatmul.mubr.f32.gmra.mrb[0].mxu0 %v4139
        %v4610 = vpop.f32.mrb[0].mxu0
        %v4611 = vadd.f32 %v4242, %v4610
        %v4612 = vpop.f32.mrb[0].mxu0
        %v4613 = vadd.f32 %v4246, %v4612
        %4614 = vmatprep.mubr.f32.mxu0 0.0
        %4615 = vmatmul.mubr.f32.gmra.mrb[0].mxu0 %v4140
        %v4616 = vpop.f32.mrb[0].mxu0
        %v4617 = vadd.f32 %v4242, %v4616
        %v4618 = vpop.f32.mrb[0].mxu0
        %v4619 = vadd.f32 %v4246, %v4618
        %4620 = vmatprep.mubr.f32.mxu0 0.0
        %4621 = vmatmul.mubr.f32.gmra.mrb[0].mxu0 %v4141
        %v4622 = vpop.f32.mrb[0].mxu0
        %v4623 = vadd.f32 %v4242, %v4622
        %v4624 = vpop.f32.mrb[0].mxu0
        %v4625 = vadd.f32 %v4246, %v4624
        %4626 = vmatprep.mubr.f32.mxu0 0.0
        %4627 = vmatmul.mubr.f32.gmra.mrb[0].mxu0 %v4142
        %v4628 = vpop.f32.mrb[0].mxu0
        %v4629 = vadd.f32 %v4242, %v4628
        %v4630 = vpop.f32.mrb[0].mxu0
        %v4631 = vadd.f32 %v4246, %v4630
        %4632 = vmatprep.mubr.f32.mxu0 0.0
        %4633 = vmatmul.mubr.f32.gmra.mrb[0].mxu0 %v4143
        %v4634 = vpop.f32.mrb[0].mxu0
        %v4635 = vadd.f32 %v4242, %v4634
        %v4636 = vpop.f32.mrb[0].mxu0
        %v4637 = vadd.f32 %v4246, %v4636
        %4638 = vmatprep.mubr.f32.mxu0 0.0
        %4639 = vmatmul.mubr.f32.gmra.mrb[0].mxu0 %v4144
        %v4640 = vpop.f32.mrb[0].mxu0
        %v4641 = vadd.f32 %v4242, %v4640
        %v4642 = vpop.f32.mrb[0].mxu0
        %v4643 = vadd.f32 %v4246, %v4642
        %4644 = vmatprep.mubr.f32.mxu0 0.0
        %4645 = vmatmul.mubr.f32.gmra.mrb[0].mxu0 %v4145
        %v4646 = vpop.f32.mrb[0].mxu0
        %v4647 = vadd.f32 %v4242, %v4646
        %v4648 = vpop.f32.mrb[0].mxu0
        %v4649 = vadd.f32 %v4246, %v4648
        %4650 = vmatprep.mubr.f32.mxu0 0.0
        %4651 = vmatmul.mubr.f32.gmra.mrb[0].mxu0 %v4146
        %v4652 = vpop.f32.mrb[0].mxu0
        %v4653 = vadd.f32 %v4242, %v4652
        %v4654 = vpop.f32.mrb[0].mxu0
        %v4655 = vadd.f32 %v4246, %v4654
        %4656 = vmatprep.mubr.f32.mxu0 0.0
        %4657 = vmatmul.mubr.f32.gmra.mrb[0].mxu0 %v4147
        %v4658 = vpop.f32.mrb[0].mxu0
        %v4659 = vadd.f32 %v4242, %v4658
        %v4660 = vpop.f32.mrb[0].mxu0
        %v4661 = vadd.f32 %v4246, %v4660
        %4662 = vmatprep.mubr.f32.mxu0 0.0
        %4663 = vmatmul.mubr.f32.gmra.mrb[0].mxu0 %v4148
        %v4664 = vpop.f32.mrb[0].mxu0
        %v4665 = vadd.f32 %v4242, %v4664
        %v4666 = vpop.f32.mrb[0].mxu0
        %v4667 = vadd.f32 %v4246, %v4666
        %4668 = vmatprep.mubr.f32.mxu0 0.0
        %4669 = vmatmul.mubr.f32.gmra.mrb[0].mxu0 %v4149
        %v4670 = vpop.f32.mrb[0].mxu0
        %v4671 = vadd.f32 %v4242, %v4670
        %v4672 = vpop.f32.mrb[0].mxu0
        %v4673 = vadd.f32 %v4246, %v4672
        %4674 = vmatprep.mubr.f32.mxu0 0.0
        %4675 = vmatmul.mubr.f32.gmra.mrb[0].mxu0 %v4150
        %v4676 = vpop.f32.mrb[0].mxu0
        %v4677 = vadd.f32 %v4242, %v4676
        %v4678 = vpop.f32.mrb[0].mxu0
        %v4679 = vadd.f32 %v4246, %v4678
        %4680 = vmatprep.mubr.f32.mxu0 0.0
        %4681 = vmatmul.mubr.f32.gmra.mrb[0].mxu0 %v4151
        %v4682 = vpop.f32.mrb[0].mxu0
        %v4683 = vadd.f32 %v4242, %v4682
        %v4684 = vpop.f32.mrb[0].mxu0
        %v4685 = vadd.f32 %v4246, %v4684
        %4686 = vmatprep.mubr.f32.mxu0 0.0
        %4687 = vmatmul.mubr.f32.gmra.mrb[0].mxu0 %v4152
        %v4688 = vpop.f32.mrb[0].mxu0
        %v4689 = vadd.f32 %v4242, %v4688
        %v4690 = vpop.f32.mrb[0].mxu0
        %v4691 = vadd.f32 %v4246, %v4690
        %4692 = vmatprep.mubr.f32.mxu0 0.0
        %4693 = vmatmul.mubr.f32.gmra.mrb[0].mxu0 %v4153
        %v4694 = vpop.f32.mrb[0].mxu0
        %v4695 = vadd.f32 %v4242, %v4694
        %v4696 = vpop.f32.mrb[0].mxu0
        %v4697 = vadd.f32 %v4246, %v4696
        %4698 = vmatprep.mubr.f32.mxu0 0.0
        %4699 = vmatmul.mubr.f32.gmra.mrb[0].mxu0 %v4154
        %v4700 = vpop.f32.mrb[0].mxu0
        %v4701 = vadd.f32 %v4242, %v4700
        %v4702 = vpop.f32.mrb[0].mxu0
        %v4703 = vadd.f32 %v4246, %v4702
        %4704 = vmatprep.mubr.f32.mxu0 0.0
        %4705 = vmatmul.mubr.f32.gmra.mrb[0].mxu0 %v4155
        %v4706 = vpop.f32.mrb[0].mxu0
        %v4707 = vadd.f32 %v4242, %v4706
        %v4708 = vpop.f32.mrb[0].mxu0
        %v4709 = vadd.f32 %v4246, %v4708
        %4710 = vmatprep.mubr.f32.mxu0 0.0
        %4711 = vmatmul.mubr.f32.gmra.mrb[0].mxu0 %v4156
        %v4712 = vpop.f32.mrb[0].mxu0
        %v4713 = vadd.f32 %v4242, %v4712
        %v4714 = vpop.f32.mrb[0].mxu0
        %v4715 = vadd.f32 %v4246, %v4714
        %4716 = vmatprep.mubr.f32.mxu0 0.0
        %4717 = vmatmul.mubr.f32.gmra.mrb[0].mxu0 %v4157
        %v4718 = vpop.f32.mrb[0].mxu0
        %v4719 = vadd.f32 %v4242, %v4718
        %v4720 = vpop.f32.mrb[0].mxu0
        %v4721 = vadd.f32 %v4246, %v4720
        %4722 = vmatprep.mubr.f32.mxu0 0.0
        %4723 = vmatmul.mubr.f32.gmra.mrb[0].mxu0 %v4158
        %v4724 = vpop.f32.mrb[0].mxu0
        %v4725 = vadd.f32 %v4242, %v4724
        %v4726 = vpop.f32.mrb[0].mxu0
        %v4727 = vadd.f32 %v4246, %v4726
        %4728 = vmatprep.mubr.f32.mxu0 0.0
        %4729 = vmatmul.mubr.f32.gmra.mrb[0].mxu0 %v4159
        %v4730 = vpop.f32.mrb[0].mxu0
        %v4731 = vadd.f32 %v4242, %v4730
        %v4732 = vpop.f32.mrb[0].mxu0
        %v4733 = vadd.f32 %v4246, %v4732
        %4734 = vmatprep.mubr.f32.mxu0 0.0
        %4735 = vmatmul.mubr.f32.gmra.mrb[0].mxu0 %v4160
        %v4736 = vpop.f32.mrb[0].mxu0
        %v4737 = vadd.f32 %v4242, %v4736
        %v4738 = vpop.f32.mrb[0].mxu0
        %v4739 = vadd.f32 %v4246, %v4738
        %4740 = vmatprep.mubr.f32.mxu0 0.0
        %4741 = vmatmul.mubr.f32.gmra.mrb[0].mxu0 %v4161
        %v4742 = vpop.f32.mrb[0].mxu0
        %v4743 = vadd.f32 %v4242, %v4742
        %v4744 = vpop.f32.mrb[0].mxu0
        %v4745 = vadd.f32 %v4246, %v4744
        %4746 = vmatprep.mubr.f32.mxu0 0.0
        %4747 = vmatmul.mubr.f32.gmra.mrb[0].mxu0 %v4162
        %v4748 = vpop.f32.mrb[0].mxu0
        %v4749 = vadd.f32 %v4242, %v4748
        %v4750 = vpop.f32.mrb[0].mxu0
        %v4751 = vadd.f32 %v4246, %v4750
        %4752 = vmatprep.mubr.f32.mxu0 0.0
        %4753 = vmatmul.mubr.f32.gmra.mrb[0].mxu0 %v4163
        %v4754 = vpop.f32.mrb[0].mxu0
        %v4755 = vadd.f32 %v4242, %v4754
        %v4756 = vpop.f32.mrb[0].mxu0
        %v4757 = vadd.f32 %v4246, %v4756
        %4758 = vmatprep.mubr.f32.mxu0 0.0
        %4759 = vmatmul.mubr.f32.gmra.mrb[0].mxu0 %v4164
        %v4760 = vpop.f32.mrb[0].mxu0
        %v4761 = vadd.f32 %v4242, %v4760
        %v4762 = vpop.f32.mrb[0].mxu0
        %v4763 = vadd.f32 %v4246, %v4762
        %4764 = vdwg.mxu0
        %v4765 = vadd.f32 %v4318, %v1175
        %v4766 = vadd.f32 %v4320, %v1176
        %v4767 = vadd.f32 %v4575, %v1177
        %v4768 = vadd.f32 %v4577, %v1178
        %v4769 = vadd.f32 %v4324, %v1179
        %v4770 = vadd.f32 %v4326, %v1180
        %v4771 = vadd.f32 %v4581, %v1181
        %v4772 = vadd.f32 %v4583, %v1182
        %v4773 = vadd.f32 %v4330, %v1183
        %v4774 = vadd.f32 %v4332, %v1184
        %v4775 = vadd.f32 %v4587, %v1185
        %v4776 = vadd.f32 %v4589, %v1186
        %v4777 = vadd.f32 %v4336, %v1187
        %v4778 = vadd.f32 %v4338, %v1188
        %v4779 = vadd.f32 %v4593, %v1189
        %v4780 = vadd.f32 %v4595, %v1190
        %v4781 = vadd.f32 %v4342, %v1191
        %v4782 = vadd.f32 %v4344, %v1192
        %v4783 = vadd.f32 %v4599, %v1193
        %v4784 = vadd.f32 %v4601, %v1194
        %v4785 = vadd.f32 %v4348, %v1195
        %v4786 = vadd.f32 %v4350, %v1196
        %v4787 = vadd.f32 %v4605, %v1197
        %v4788 = vadd.f32 %v4607, %v1198
        %v4789 = vadd.f32 %v4354, %v1199
        %v4790 = vadd.f32 %v4356, %v1200
        %v4791 = vadd.f32 %v4611, %v1201
        %v4792 = vadd.f32 %v4613, %v1202
        %v4793 = vadd.f32 %v4360, %v1203
        %v4794 = vadd.f32 %v4362, %v1204
        %v4795 = vadd.f32 %v4617, %v1205
        %v4796 = vadd.f32 %v4619, %v1206
        %v4797 = vadd.f32 %v4366, %v1207
        %v4798 = vadd.f32 %v4368, %v1208
        %v4799 = vadd.f32 %v4623, %v1209
        %v4800 = vadd.f32 %v4625, %v1210
        %v4801 = vadd.f32 %v4372, %v1211
        %v4802 = vadd.f32 %v4374, %v1212
        %v4803 = vadd.f32 %v4629, %v1213
        %v4804 = vadd.f32 %v4631, %v1214
        %v4805 = vadd.f32 %v4378, %v1215
        %v4806 = vadd.f32 %v4380, %v1216
        %v4807 = vadd.f32 %v4635, %v1217
        %v4808 = vadd.f32 %v4637, %v1218
        %v4809 = vadd.f32 %v4384, %v1219
        %v4810 = vadd.f32 %v4386, %v1220
        %v4811 = vadd.f32 %v4641, %v1221
        %v4812 = vadd.f32 %v4643, %v1222
        %v4813 = vadd.f32 %v4390, %v1223
        %v4814 = vadd.f32 %v4392, %v1224
        %v4815 = vadd.f32 %v4647, %v1225
        %v4816 = vadd.f32 %v4649, %v1226
        %v4817 = vadd.f32 %v4396, %v1227
        %v4818 = vadd.f32 %v4398, %v1228
        %v4819 = vadd.f32 %v4653, %v1229
        %v4820 = vadd.f32 %v4655, %v1230
        %v4821 = vadd.f32 %v4402, %v1231
        %v4822 = vadd.f32 %v4404, %v1232
        %v4823 = vadd.f32 %v4659, %v1233
        %v4824 = vadd.f32 %v4661, %v1234
        %v4825 = vadd.f32 %v4408, %v1235
        %v4826 = vadd.f32 %v4410, %v1236
        %v4827 = vadd.f32 %v4665, %v1237
        %v4828 = vadd.f32 %v4667, %v1238
        %v4829 = vadd.f32 %v4414, %v1239
        %v4830 = vadd.f32 %v4416, %v1240
        %v4831 = vadd.f32 %v4671, %v1241
        %v4832 = vadd.f32 %v4673, %v1242
        %v4833 = vadd.f32 %v4420, %v1243
        %v4834 = vadd.f32 %v4422, %v1244
        %v4835 = vadd.f32 %v4677, %v1245
        %v4836 = vadd.f32 %v4679, %v1246
        %v4837 = vadd.f32 %v4426, %v1247
        %v4838 = vadd.f32 %v4428, %v1248
        %v4839 = vadd.f32 %v4683, %v1249
        %v4840 = vadd.f32 %v4685, %v1250
        %v4841 = vadd.f32 %v4432, %v1251
        %v4842 = vadd.f32 %v4434, %v1252
        %v4843 = vadd.f32 %v4689, %v1253
        %v4844 = vadd.f32 %v4691, %v1254
        %v4845 = vadd.f32 %v4438, %v1255
        %v4846 = vadd.f32 %v4440, %v1256
        %v4847 = vadd.f32 %v4695, %v1257
        %v4848 = vadd.f32 %v4697, %v1258
        %v4849 = vadd.f32 %v4444, %v1259
        %v4850 = vadd.f32 %v4446, %v1260
        %v4851 = vadd.f32 %v4701, %v1261
        %v4852 = vadd.f32 %v4703, %v1262
        %v4853 = vadd.f32 %v4450, %v1263
        %v4854 = vadd.f32 %v4452, %v1264
        %v4855 = vadd.f32 %v4707, %v1265
        %v4856 = vadd.f32 %v4709, %v1266
        %v4857 = vadd.f32 %v4456, %v1267
        %v4858 = vadd.f32 %v4458, %v1268
        %v4859 = vadd.f32 %v4713, %v1269
        %v4860 = vadd.f32 %v4715, %v1270
        %v4861 = vadd.f32 %v4462, %v1271
        %v4862 = vadd.f32 %v4464, %v1272
        %v4863 = vadd.f32 %v4719, %v1273
        %v4864 = vadd.f32 %v4721, %v1274
        %v4865 = vadd.f32 %v4468, %v1275
        %v4866 = vadd.f32 %v4470, %v1276
        %v4867 = vadd.f32 %v4725, %v1277
        %v4868 = vadd.f32 %v4727, %v1278
        %v4869 = vadd.f32 %v4474, %v1279
        %v4870 = vadd.f32 %v4476, %v1280
        %v4871 = vadd.f32 %v4731, %v1281
        %v4872 = vadd.f32 %v4733, %v1282
        %v4873 = vadd.f32 %v4480, %v1283
        %v4874 = vadd.f32 %v4482, %v1284
        %v4875 = vadd.f32 %v4737, %v1285
        %v4876 = vadd.f32 %v4739, %v1286
        %v4877 = vadd.f32 %v4486, %v1287
        %v4878 = vadd.f32 %v4488, %v1288
        %v4879 = vadd.f32 %v4743, %v1289
        %v4880 = vadd.f32 %v4745, %v1290
        %v4881 = vadd.f32 %v4492, %v1291
        %v4882 = vadd.f32 %v4494, %v1292
        %v4883 = vadd.f32 %v4749, %v1293
        %v4884 = vadd.f32 %v4751, %v1294
        %v4885 = vadd.f32 %v4498, %v1295
        %v4886 = vadd.f32 %v4500, %v1296
        %v4887 = vadd.f32 %v4755, %v1297
        %v4888 = vadd.f32 %v4757, %v1298
        %v4889 = vadd.f32 %v4504, %v1299
        %v4890 = vadd.f32 %v4506, %v1300
        %v4891 = vadd.f32 %v4761, %v1301
        %v4892 = vadd.f32 %v4763, %v1302
        %v4893 = vmax.f32 %v4765, 0.0
        %v4894 = vmax.f32 %v4766, 0.0
        %v4895 = vmax.f32 %v4767, 0.0
        %v4896 = vmax.f32 %v4768, 0.0
        %v4897 = vmax.f32 %v4769, 0.0
        %v4898 = vmax.f32 %v4770, 0.0
        %v4899 = vmax.f32 %v4771, 0.0
        %v4900 = vmax.f32 %v4772, 0.0
        %v4901 = vmax.f32 %v4773, 0.0
        %v4902 = vmax.f32 %v4774, 0.0
        %v4903 = vmax.f32 %v4775, 0.0
        %v4904 = vmax.f32 %v4776, 0.0
        %v4905 = vmax.f32 %v4777, 0.0
        %v4906 = vmax.f32 %v4778, 0.0
        %v4907 = vmax.f32 %v4779, 0.0
        %v4908 = vmax.f32 %v4780, 0.0
        %v4909 = vmax.f32 %v4781, 0.0
        %v4910 = vmax.f32 %v4782, 0.0
        %v4911 = vmax.f32 %v4783, 0.0
        %v4912 = vmax.f32 %v4784, 0.0
        %v4913 = vmax.f32 %v4785, 0.0
        %v4914 = vmax.f32 %v4786, 0.0
        %v4915 = vmax.f32 %v4787, 0.0
        %v4916 = vmax.f32 %v4788, 0.0
        %v4917 = vmax.f32 %v4789, 0.0
        %v4918 = vmax.f32 %v4790, 0.0
        %v4919 = vmax.f32 %v4791, 0.0
        %v4920 = vmax.f32 %v4792, 0.0
        %v4921 = vmax.f32 %v4793, 0.0
        %v4922 = vmax.f32 %v4794, 0.0
        %v4923 = vmax.f32 %v4795, 0.0
        %v4924 = vmax.f32 %v4796, 0.0
        %v4925 = vmax.f32 %v4797, 0.0
        %v4926 = vmax.f32 %v4798, 0.0
        %v4927 = vmax.f32 %v4799, 0.0
        %v4928 = vmax.f32 %v4800, 0.0
        %v4929 = vmax.f32 %v4801, 0.0
        %v4930 = vmax.f32 %v4802, 0.0
        %v4931 = vmax.f32 %v4803, 0.0
        %v4932 = vmax.f32 %v4804, 0.0
        %v4933 = vmax.f32 %v4805, 0.0
        %v4934 = vmax.f32 %v4806, 0.0
        %v4935 = vmax.f32 %v4807, 0.0
        %v4936 = vmax.f32 %v4808, 0.0
        %v4937 = vmax.f32 %v4809, 0.0
        %v4938 = vmax.f32 %v4810, 0.0
        %v4939 = vmax.f32 %v4811, 0.0
        %v4940 = vmax.f32 %v4812, 0.0
        %v4941 = vmax.f32 %v4813, 0.0
        %v4942 = vmax.f32 %v4814, 0.0
        %v4943 = vmax.f32 %v4815, 0.0
        %v4944 = vmax.f32 %v4816, 0.0
        %v4945 = vmax.f32 %v4817, 0.0
        %v4946 = vmax.f32 %v4818, 0.0
        %v4947 = vmax.f32 %v4819, 0.0
        %v4948 = vmax.f32 %v4820, 0.0
        %v4949 = vmax.f32 %v4821, 0.0
        %v4950 = vmax.f32 %v4822, 0.0
        %v4951 = vmax.f32 %v4823, 0.0
        %v4952 = vmax.f32 %v4824, 0.0
        %v4953 = vmax.f32 %v4825, 0.0
        %v4954 = vmax.f32 %v4826, 0.0
        %v4955 = vmax.f32 %v4827, 0.0
        %v4956 = vmax.f32 %v4828, 0.0
        %v4957 = vmax.f32 %v4829, 0.0
        %v4958 = vmax.f32 %v4830, 0.0
        %v4959 = vmax.f32 %v4831, 0.0
        %v4960 = vmax.f32 %v4832, 0.0
        %v4961 = vmax.f32 %v4833, 0.0
        %v4962 = vmax.f32 %v4834, 0.0
        %v4963 = vmax.f32 %v4835, 0.0
        %v4964 = vmax.f32 %v4836, 0.0
        %v4965 = vmax.f32 %v4837, 0.0
        %v4966 = vmax.f32 %v4838, 0.0
        %v4967 = vmax.f32 %v4839, 0.0
        %v4968 = vmax.f32 %v4840, 0.0
        %v4969 = vmax.f32 %v4841, 0.0
        %v4970 = vmax.f32 %v4842, 0.0
        %v4971 = vmax.f32 %v4843, 0.0
        %v4972 = vmax.f32 %v4844, 0.0
        %v4973 = vmax.f32 %v4845, 0.0
        %v4974 = vmax.f32 %v4846, 0.0
        %v4975 = vmax.f32 %v4847, 0.0
        %v4976 = vmax.f32 %v4848, 0.0
        %v4977 = vmax.f32 %v4849, 0.0
        %v4978 = vmax.f32 %v4850, 0.0
        %v4979 = vmax.f32 %v4851, 0.0
        %v4980 = vmax.f32 %v4852, 0.0
        %v4981 = vmax.f32 %v4853, 0.0
        %v4982 = vmax.f32 %v4854, 0.0
        %v4983 = vmax.f32 %v4855, 0.0
        %v4984 = vmax.f32 %v4856, 0.0
        %v4985 = vmax.f32 %v4857, 0.0
        %v4986 = vmax.f32 %v4858, 0.0
        %v4987 = vmax.f32 %v4859, 0.0
        %v4988 = vmax.f32 %v4860, 0.0
        %v4989 = vmax.f32 %v4861, 0.0
        %v4990 = vmax.f32 %v4862, 0.0
        %v4991 = vmax.f32 %v4863, 0.0
        %v4992 = vmax.f32 %v4864, 0.0
        %v4993 = vmax.f32 %v4865, 0.0
        %v4994 = vmax.f32 %v4866, 0.0
        %v4995 = vmax.f32 %v4867, 0.0
        %v4996 = vmax.f32 %v4868, 0.0
        %v4997 = vmax.f32 %v4869, 0.0
        %v4998 = vmax.f32 %v4870, 0.0
        %v4999 = vmax.f32 %v4871, 0.0
        %v5000 = vmax.f32 %v4872, 0.0
        %v5001 = vmax.f32 %v4873, 0.0
        %v5002 = vmax.f32 %v4874, 0.0
        %v5003 = vmax.f32 %v4875, 0.0
        %v5004 = vmax.f32 %v4876, 0.0
        %v5005 = vmax.f32 %v4877, 0.0
        %v5006 = vmax.f32 %v4878, 0.0
        %v5007 = vmax.f32 %v4879, 0.0
        %v5008 = vmax.f32 %v4880, 0.0
        %v5009 = vmax.f32 %v4881, 0.0
        %v5010 = vmax.f32 %v4882, 0.0
        %v5011 = vmax.f32 %v4883, 0.0
        %v5012 = vmax.f32 %v4884, 0.0
        %v5013 = vmax.f32 %v4885, 0.0
        %v5014 = vmax.f32 %v4886, 0.0
        %v5015 = vmax.f32 %v4887, 0.0
        %v5016 = vmax.f32 %v4888, 0.0
        %v5017 = vmax.f32 %v4889, 0.0
        %v5018 = vmax.f32 %v4890, 0.0
        %v5019 = vmax.f32 %v4891, 0.0
        %v5020 = vmax.f32 %v4892, 0.0
        %5021 = vst [vmem:[%s551] sm:$0xff] %v4893
        %5022 = vst [vmem:[%s551 + $0x8] sm:$0xff] %v4894
        %5023 = vst [vmem:[%s551 + $0x10] sm:$0xff] %v4895
        %5024 = vst [vmem:[%s551 + $0x18] sm:$0xff] %v4896
        %5025 = vst [vmem:[%s551 + $0x20] sm:$0xff] %v4897
        %5026 = vst [vmem:[%s551 + $0x28] sm:$0xff] %v4898
        %5027 = vst [vmem:[%s551 + $0x30] sm:$0xff] %v4899
        %5028 = vst [vmem:[%s551 + $0x38] sm:$0xff] %v4900
        %5029 = vst [vmem:[%s551 + $0x40] sm:$0xff] %v4901
        %5030 = vst [vmem:[%s551 + $0x48] sm:$0xff] %v4902
        %5031 = vst [vmem:[%s551 + $0x50] sm:$0xff] %v4903
        %5032 = vst [vmem:[%s551 + $0x58] sm:$0xff] %v4904
        %5033 = vst [vmem:[%s551 + $0x60] sm:$0xff] %v4905
        %5034 = vst [vmem:[%s551 + $0x68] sm:$0xff] %v4906
        %5035 = vst [vmem:[%s551 + $0x70] sm:$0xff] %v4907
        %5036 = vst [vmem:[%s551 + $0x78] sm:$0xff] %v4908
        %5037 = vst [vmem:[%s551 + $0x80] sm:$0xff] %v4909
        %5038 = vst [vmem:[%s551 + $0x88] sm:$0xff] %v4910
        %5039 = vst [vmem:[%s551 + $0x90] sm:$0xff] %v4911
        %5040 = vst [vmem:[%s551 + $0x98] sm:$0xff] %v4912
        %5041 = vst [vmem:[%s551 + $0xa0] sm:$0xff] %v4913
        %5042 = vst [vmem:[%s551 + $0xa8] sm:$0xff] %v4914
        %5043 = vst [vmem:[%s551 + $0xb0] sm:$0xff] %v4915
        %5044 = vst [vmem:[%s551 + $0xb8] sm:$0xff] %v4916
        %5045 = vst [vmem:[%s551 + $0xc0] sm:$0xff] %v4917
        %5046 = vst [vmem:[%s551 + $0xc8] sm:$0xff] %v4918
        %5047 = vst [vmem:[%s551 + $0xd0] sm:$0xff] %v4919
        %5048 = vst [vmem:[%s551 + $0xd8] sm:$0xff] %v4920
        %5049 = vst [vmem:[%s551 + $0xe0] sm:$0xff] %v4921
        %5050 = vst [vmem:[%s551 + $0xe8] sm:$0xff] %v4922
        %5051 = vst [vmem:[%s551 + $0xf0] sm:$0xff] %v4923
        %5052 = vst [vmem:[%s551 + $0xf8] sm:$0xff] %v4924
        %5053 = vst [vmem:[%s551 + $0x100] sm:$0xff] %v4925
        %5054 = vst [vmem:[%s551 + $0x108] sm:$0xff] %v4926
        %5055 = vst [vmem:[%s551 + $0x110] sm:$0xff] %v4927
        %5056 = vst [vmem:[%s551 + $0x118] sm:$0xff] %v4928
        %5057 = vst [vmem:[%s551 + $0x120] sm:$0xff] %v4929
        %5058 = vst [vmem:[%s551 + $0x128] sm:$0xff] %v4930
        %5059 = vst [vmem:[%s551 + $0x130] sm:$0xff] %v4931
        %5060 = vst [vmem:[%s551 + $0x138] sm:$0xff] %v4932
        %5061 = vst [vmem:[%s551 + $0x140] sm:$0xff] %v4933
        %5062 = vst [vmem:[%s551 + $0x148] sm:$0xff] %v4934
        %5063 = vst [vmem:[%s551 + $0x150] sm:$0xff] %v4935
        %5064 = vst [vmem:[%s551 + $0x158] sm:$0xff] %v4936
        %5065 = vst [vmem:[%s551 + $0x160] sm:$0xff] %v4937
        %5066 = vst [vmem:[%s551 + $0x168] sm:$0xff] %v4938
        %5067 = vst [vmem:[%s551 + $0x170] sm:$0xff] %v4939
        %5068 = vst [vmem:[%s551 + $0x178] sm:$0xff] %v4940
        %5069 = vst [vmem:[%s551 + $0x180] sm:$0xff] %v4941
        %5070 = vst [vmem:[%s551 + $0x188] sm:$0xff] %v4942
        %5071 = vst [vmem:[%s551 + $0x190] sm:$0xff] %v4943
        %5072 = vst [vmem:[%s551 + $0x198] sm:$0xff] %v4944
        %5073 = vst [vmem:[%s551 + $0x1a0] sm:$0xff] %v4945
        %5074 = vst [vmem:[%s551 + $0x1a8] sm:$0xff] %v4946
        %5075 = vst [vmem:[%s551 + $0x1b0] sm:$0xff] %v4947
        %5076 = vst [vmem:[%s551 + $0x1b8] sm:$0xff] %v4948
        %5077 = vst [vmem:[%s551 + $0x1c0] sm:$0xff] %v4949
        %5078 = vst [vmem:[%s551 + $0x1c8] sm:$0xff] %v4950
        %5079 = vst [vmem:[%s551 + $0x1d0] sm:$0xff] %v4951
        %5080 = vst [vmem:[%s551 + $0x1d8] sm:$0xff] %v4952
        %5081 = vst [vmem:[%s551 + $0x1e0] sm:$0xff] %v4953
        %5082 = vst [vmem:[%s551 + $0x1e8] sm:$0xff] %v4954
        %5083 = vst [vmem:[%s551 + $0x1f0] sm:$0xff] %v4955
        %5084 = vst [vmem:[%s551 + $0x1f8] sm:$0xff] %v4956
        %5085 = vst [vmem:[%s551 + $0x200] sm:$0xff] %v4957
        %5086 = vst [vmem:[%s551 + $0x208] sm:$0xff] %v4958
        %5087 = vst [vmem:[%s551 + $0x210] sm:$0xff] %v4959
        %5088 = vst [vmem:[%s551 + $0x218] sm:$0xff] %v4960
        %5089 = vst [vmem:[%s551 + $0x220] sm:$0xff] %v4961
        %5090 = vst [vmem:[%s551 + $0x228] sm:$0xff] %v4962
        %5091 = vst [vmem:[%s551 + $0x230] sm:$0xff] %v4963
        %5092 = vst [vmem:[%s551 + $0x238] sm:$0xff] %v4964
        %5093 = vst [vmem:[%s551 + $0x240] sm:$0xff] %v4965
        %5094 = vst [vmem:[%s551 + $0x248] sm:$0xff] %v4966
        %5095 = vst [vmem:[%s551 + $0x250] sm:$0xff] %v4967
        %5096 = vst [vmem:[%s551 + $0x258] sm:$0xff] %v4968
        %5097 = vst [vmem:[%s551 + $0x260] sm:$0xff] %v4969
        %5098 = vst [vmem:[%s551 + $0x268] sm:$0xff] %v4970
        %5099 = vst [vmem:[%s551 + $0x270] sm:$0xff] %v4971
        %5100 = vst [vmem:[%s551 + $0x278] sm:$0xff] %v4972
        %5101 = vst [vmem:[%s551 + $0x280] sm:$0xff] %v4973
        %5102 = vst [vmem:[%s551 + $0x288] sm:$0xff] %v4974
        %5103 = vst [vmem:[%s551 + $0x290] sm:$0xff] %v4975
        %5104 = vst [vmem:[%s551 + $0x298] sm:$0xff] %v4976
        %5105 = vst [vmem:[%s551 + $0x2a0] sm:$0xff] %v4977
        %5106 = vst [vmem:[%s551 + $0x2a8] sm:$0xff] %v4978
        %5107 = vst [vmem:[%s551 + $0x2b0] sm:$0xff] %v4979
        %5108 = vst [vmem:[%s551 + $0x2b8] sm:$0xff] %v4980
        %5109 = vst [vmem:[%s551 + $0x2c0] sm:$0xff] %v4981
        %5110 = vst [vmem:[%s551 + $0x2c8] sm:$0xff] %v4982
        %5111 = vst [vmem:[%s551 + $0x2d0] sm:$0xff] %v4983
        %5112 = vst [vmem:[%s551 + $0x2d8] sm:$0xff] %v4984
        %5113 = vst [vmem:[%s551 + $0x2e0] sm:$0xff] %v4985
        %5114 = vst [vmem:[%s551 + $0x2e8] sm:$0xff] %v4986
        %5115 = vst [vmem:[%s551 + $0x2f0] sm:$0xff] %v4987
        %5116 = vst [vmem:[%s551 + $0x2f8] sm:$0xff] %v4988
        %5117 = vst [vmem:[%s551 + $0x300] sm:$0xff] %v4989
        %5118 = vst [vmem:[%s551 + $0x308] sm:$0xff] %v4990
        %5119 = vst [vmem:[%s551 + $0x310] sm:$0xff] %v4991
        %5120 = vst [vmem:[%s551 + $0x318] sm:$0xff] %v4992
        %5121 = vst [vmem:[%s551 + $0x320] sm:$0xff] %v4993
        %5122 = vst [vmem:[%s551 + $0x328] sm:$0xff] %v4994
        %5123 = vst [vmem:[%s551 + $0x330] sm:$0xff] %v4995
        %5124 = vst [vmem:[%s551 + $0x338] sm:$0xff] %v4996
        %5125 = vst [vmem:[%s551 + $0x340] sm:$0xff] %v4997
        %5126 = vst [vmem:[%s551 + $0x348] sm:$0xff] %v4998
        %5127 = vst [vmem:[%s551 + $0x350] sm:$0xff] %v4999
        %5128 = vst [vmem:[%s551 + $0x358] sm:$0xff] %v5000
        %5129 = vst [vmem:[%s551 + $0x360] sm:$0xff] %v5001
        %5130 = vst [vmem:[%s551 + $0x368] sm:$0xff] %v5002
        %5131 = vst [vmem:[%s551 + $0x370] sm:$0xff] %v5003
        %5132 = vst [vmem:[%s551 + $0x378] sm:$0xff] %v5004
        %5133 = vst [vmem:[%s551 + $0x380] sm:$0xff] %v5005
        %5134 = vst [vmem:[%s551 + $0x388] sm:$0xff] %v5006
        %5135 = vst [vmem:[%s551 + $0x390] sm:$0xff] %v5007
        %5136 = vst [vmem:[%s551 + $0x398] sm:$0xff] %v5008
        %5137 = vst [vmem:[%s551 + $0x3a0] sm:$0xff] %v5009
        %5138 = vst [vmem:[%s551 + $0x3a8] sm:$0xff] %v5010
        %5139 = vst [vmem:[%s551 + $0x3b0] sm:$0xff] %v5011
        %5140 = vst [vmem:[%s551 + $0x3b8] sm:$0xff] %v5012
        %5141 = vst [vmem:[%s551 + $0x3c0] sm:$0xff] %v5013
        %5142 = vst [vmem:[%s551 + $0x3c8] sm:$0xff] %v5014
        %5143 = vst [vmem:[%s551 + $0x3d0] sm:$0xff] %v5015
        %5144 = vst [vmem:[%s551 + $0x3d8] sm:$0xff] %v5016
        %5145 = vst [vmem:[%s551 + $0x3e0] sm:$0xff] %v5017
        %5146 = vst [vmem:[%s551 + $0x3e8] sm:$0xff] %v5018
        %5147 = vst [vmem:[%s551 + $0x3f0] sm:$0xff] %v5019
        %5148 = vst [vmem:[%s551 + $0x3f8] sm:$0xff] %v5020
        %s5149 = sand.u32 %s293, 1
        %s5150 = scalar_lea.sflag [#allocation8], %s5149
        %s5151 = sand.u32 %s293, 1
        %s5152 = smul.addr %s5151, 1024
        %s5153 = scalar_lea.vmem [#allocation18], %s5152
        // Predicated region
        $region97: #{tpu_custom_call.1} parent=59 // pred_check
          %p5154 = pneg %p303
        $region98: #{tpu_custom_call.1} parent=59 // pred_check_branch
          %5156 = sbr.rel (%p5154) target = $region100
        $region99: #{tpu_custom_call.1} parent=59 // pred_region
          %s5157 = smul.u32 32, %s41
          %s5159 = ssub.s32 16384, 16384
          %5160 = vsyncadd %s5150, %s5159
          %s5161 = smul.addr %s5157, 4
          %s5162 = smul.addr %s40, 128
          %s5163 = sadd.s32 %s5161, %s5162
          %s5164 = smul.addr %s5163, 128
          %s5165 = scalar_lea.hbm %s12, %s5164
          %s5166 = sshll.u32 %s5153, 4
          %s5167 = int_to_ptr.vmem [resolvable:$true] %s5166
          %5172 = dma.vmem_to_hbm [thread:$0]  %s5167, 16384, %s5165, %s5150, 512, 512, 32
        $region100: #{tpu_custom_call.1} parent=59 // pred_fallthru
          _
      $region60: #{tpu_custom_call.1} parent=5 // pred_fallthru
        _
      %p5173 = scmp.le.s32.totalorder 2, %s31
      // Predicated region
      $region101: #{tpu_custom_call.1} parent=5 // pred_check
        %p5174 = pneg %p5173
      $region102: #{tpu_custom_call.1} parent=5 // pred_check_branch
        %5176 = sbr.rel (%p5174) target = $region104
      $region103: #{tpu_custom_call.1} parent=5 // pred_region
        %s5177 = ssub.s32 %s31, 2
        // Predicated region
        $region105: #{tpu_custom_call.1} parent=103 // pred_check
          %p5178 = pneg %p309
        $region106: #{tpu_custom_call.1} parent=103 // pred_check_branch
          %5180 = sbr.rel (%p5178) target = $region108
        $region107: #{tpu_custom_call.1} parent=103 // pred_region
          %s5181 = sand.u32 %s294, 1
          %s5182 = scalar_lea.sflag [#allocation8], %s5181
          %s5183 = sand.u32 %s294, 1
          %s5184 = smul.addr %s5183, 1024
          %s5185 = scalar_lea.vmem [#allocation18], %s5184
          %5186 = dma.done %s5182, 16384
        $region108: #{tpu_custom_call.1} parent=103 // pred_fallthru
          _
      $region104: #{tpu_custom_call.1} parent=5 // pred_fallthru
        _
    $region6: #{tpu_custom_call.1} parent=1 // loop_footer
      %s35 = sadd.s32 1, %s31
    $region7: #{tpu_custom_call.1} parent=1 // loop_footer_branch
      %30 = sbr.rel target = $region3
    $region8: #{tpu_custom_call.1} parent=1 // loop_exit
      _
    %5187 = vsyncpa [#allocation7], 1
    %s5188 = scalar_lea.sflag [#allocation7], 1
    %5189 = vsyncpa %s5188, 1
    %5190 = vsyncpa [#allocation10], 1
    %s5191 = scalar_lea.sflag [#allocation10], 1
    %5192 = vsyncpa %s5191, 1
    %5193 = vsyncpa [#allocation13], 1
    %5194 = vsyncpa [#allocation16], 1
    %5195 = vsyncpa [#allocation8], 1
    %s5196 = scalar_lea.sflag [#allocation8], 1
    %5197 = vsyncpa %s5196, 1

</llo_original>
